<compile_context>
chip_gen: v5e
topology: v5e:2x2
jax: 0.10.0
libtpu: 0.0.40
codegen_flags: <defaults>
</compile_context>

<pallas_src>
import functools

import jax
import jax.numpy as jnp
from jax import lax
from jax.experimental import pallas as pl
from jax.experimental.pallas import tpu as pltpu

# Module hyper-params (PyTorch defaults): kernel_size == stride == (16, 2).
KERNEL1, STRIDE1 = (16, 2), (16, 2)
KERNEL2, STRIDE2 = (16, 2), (16, 2)
assert KERNEL1 == STRIDE1 and KERNEL2 == STRIDE2  # patch-as-reshape relies on this

LANE = 128  # TPU lane width; fc2 output is padded to a full lane slab.


def _elu(v):
    # ELU(alpha=1) in f32 on the VPU; min() keeps the discarded branch finite.
    # TODO(synk): switch to jnp.expm1 once Mosaic exposes it (delta < 1.2e-7 here).
    return jnp.where(v > 0.0, v, jnp.exp(jnp.minimum(v, 0.0)) - 1.0)


# ----------------------------- Pallas kernel --------------------------------

def _fused_net_kernel(p_ref, wc1_ref, bc1_ref, wc2_ref, bc2_ref,
                      wf1_ref, bf1_ref, wf2_ref, bf2_ref, o_ref):
    """conv1 -> ELU -> conv2 -> ELU -> flatten -> fc1 -> ELU -> fc2, one batch tile.

    p_ref rows ordered (kh2, kw2, h2, w2, n_local); features (c_in, kh1, kw1).
    Matmul operands are bf16; accumulation / bias / ELU are f32.
    """
    c1 = wc1_ref.shape[1]            # conv hidden channels (32)
    r_blocks = wc2_ref.shape[0]      # KH2*KW2 receptive-field positions (32)
    q_blocks = wf1_ref.shape[0]      # H2*W2 conv2 spatial positions (2)
    nb = o_ref.shape[0]              # batch-tile size (16)
    j = q_blocks * nb                # conv2 output rows per tile
    assert p_ref.shape[0] == r_blocks * j

    # conv1: ONE (R*Q*nb, F1) @ (F1, C1) bf16 MXU matmul, f32 accumulation.
    y1 = jnp.dot(p_ref[...], wc1_ref[...], preferred_element_type=jnp.float32)
    y1 = _elu(y1 + bc1_ref[...])

    # conv2: kh2*kw2 receptive positions become the *batch* dim of a single
    # dot_general (leading dim -> no sublane-misaligned slicing), then a
    # parallel f32 sum over that dim replaces the serial accumulate chain.
    y1b = y1.astype(jnp.bfloat16).reshape(r_blocks, j, c1)   # tile-aligned split
    y2 = lax.dot_general(y1b, wc2_ref[...],
                         dimension_numbers=(((2,), (1,)), ((0,), (0,))),
                         preferred_element_type=jnp.float32)
    y2 = _elu(jnp.sum(y2, axis=0) + bc2_ref[...])            # (j, C1), rows (q, n)

    # fc1: flatten is q-major / n-minor, so q is again a leading batched dim.
    y2b = y2.astype(jnp.bfloat16).reshape(q_blocks, nb, c1)  # 16-row slabs, aligned
    h = lax.dot_general(y2b, wf1_ref[...],
                        dimension_numbers=(((2,), (1,)), ((0,), (0,))),
                        preferred_element_type=jnp.float32)
    h = _elu(jnp.sum(h, axis=0) + bf1_ref[...])              # (nb, hidden_ff)

    # fc2: output channels were zero-padded to 128 lanes -> dense (nb,128) store.
    o_ref[...] = jnp.dot(h.astype(jnp.bfloat16), wf2_ref[...],
                         preferred_element_type=jnp.float32) + bf2_ref[...]


# ------------------------------ host-side glue ------------------------------

def _conv1_patches(x, nb):
    """NHWC x -> conv1 im2col matrix (bf16), batch-tile-major.

    Rows: (tile; kh2, kw2, h2, w2, n_local).  Features: (c_in, kh1, kw1).
    stride == kernel for both convs, so this is a pure reshape/transpose.
    """
    n, h, w, c = x.shape
    kh1, kw1 = KERNEL1
    kh2, kw2 = KERNEL2
    h1 = (h - kh1) // STRIDE1[0] + 1
    w1 = (w - kw1) // STRIDE1[1] + 1
    h2 = (h1 - kh2) // STRIDE2[0] + 1
    w2 = (w1 - kw2) // STRIDE2[1] + 1
    assert n % nb == 0, (n, nb)
    # TODO(synk): fold this one XLA transpose pass into the kernel's input path
    # (NHWC h-row slabs via index_map) to halve input-side HBM traffic at scale.
    x = x[:, :h2 * kh2 * kh1, :w2 * kw2 * kw1, :]            # crop to exact tiling
    p = x.reshape(n, h2, kh2, kh1, w2, kw2, kw1, c)
    p = p.transpose(0, 2, 5, 1, 4, 7, 3, 6)    # (n, kh2, kw2, h2, w2, c, kh1, kw1)
    p = p.reshape(n, kh2 * kw2 * h2 * w2, c * kh1 * kw1)
    # batch-tile-major: rows within a tile ordered (kh2, kw2, h2, w2, n_local).
    p = p.reshape(n // nb, nb, p.shape[1], p.shape[2]).transpose(0, 2, 1, 3)
    p1 = p.reshape(-1, c * kh1 * kw1)
    return p1.astype(jnp.bfloat16), (h2, w2)


def preprocess_params(params):
    """One-time weight/bias re-layout + bf16 cast, hoisted off the call path."""
    wc1, bc1, wc2, bc2, wf1, bf1, wf2, bf2 = params
    c1 = wc1.shape[0]                                        # hidden_dim
    kh2, kw2 = KERNEL2
    # conv1: rows = (c_in, kh1, kw1), cols = out channels.
    wc1m = wc1.reshape(c1, -1).T.astype(jnp.bfloat16)
    # conv2: (out, in, kh2, kw2) -> (r=(kh2,kw2), in, out); r is the batched dim.
    wc2r = jnp.transpose(wc2, (2, 3, 1, 0)).reshape(kh2 * kw2, wc2.shape[1], c1)
    wc2r = wc2r.astype(jnp.bfloat16)
    # fc1: PyTorch flatten order is (c, h2, w2); kernel rows are (q=(h2,w2), n),
    # so expose q as the leading batched dim: (q, c_in, out_features).
    ff = wf1.shape[0]
    q = wf1.shape[1] // c1                                   # H2 * W2
    wf1q = jnp.transpose(wf1.reshape(ff, c1, q), (2, 1, 0)).astype(jnp.bfloat16)
    # fc2: transpose and zero-pad output channels to a full 128-lane slab.
    channels = wf2.shape[0]
    lanes = ((channels + LANE - 1) // LANE) * LANE
    wf2p = jnp.zeros((ff, lanes), jnp.bfloat16).at[:, :channels].set(
        wf2.T.astype(jnp.bfloat16))
    bf2p = jnp.zeros((1, lanes), jnp.float32).at[:, :channels].set(bf2)
    return (wc1m, bc1.reshape(1, -1).astype(jnp.float32), wc2r,
            bc2.reshape(1, -1).astype(jnp.float32),
            wf1q, bf1.reshape(1, -1).astype(jnp.float32), wf2p, bf2p)


def _resident_spec(a):
    # Constant index_map -> DMA'd once, stays VMEM-resident across grid steps.
    zeros = (0,) * a.ndim
    return pl.BlockSpec(a.shape, lambda b: zeros)


@functools.partial(jax.jit, static_argnames=("channels", "nb"))
def forward(x, prepped, *, channels, nb=16):
    wc1m, bc1, wc2r, bc2, wf1q, bf1, wf2p, bf2p = prepped
    n = x.shape[0]
    n_pad = ((n + nb - 1) // nb) * nb
    if n_pad != n:                                           # pad batch to the tile
        x = jnp.pad(x, ((0, n_pad - n), (0, 0), (0, 0), (0, 0)))

    p1, (h2, w2) = _conv1_patches(x, nb)
    c1 = wc1m.shape[1]
    r_blocks = KERNEL2[0] * KERNEL2[1]
    q_blocks = h2 * w2
    rows_per_tile = r_blocks * q_blocks * nb
    n_tiles = n_pad // nb
    lanes = wf2p.shape[1]
    # Model constraints: flatten size == fc1 in-features; row bookkeeping exact.
    assert wf1q.shape[0] == q_blocks and wf1q.shape[1] == c1, (wf1q.shape, q_blocks, c1)
    assert p1.shape == (n_tiles * rows_per_tile, wc1m.shape[0]), p1.shape

    out = pl.pallas_call(
        _fused_net_kernel,
        out_shape=jax.ShapeDtypeStruct((n_pad, lanes), jnp.float32),
        grid=(n_tiles,),
        in_specs=[
            pl.BlockSpec((rows_per_tile, p1.shape[1]), lambda b: (b, 0)),
            _resident_spec(wc1m), _resident_spec(bc1),
            _resident_spec(wc2r), _resident_spec(bc2),
            _resident_spec(wf1q), _resident_spec(bf1),
            _resident_spec(wf2p), _resident_spec(bf2p),
        ],
        out_specs=pl.BlockSpec((nb, lanes), lambda b: (b, 0)),
        compiler_params=pltpu.CompilerParams(
            dimension_semantics=("parallel",),       # megacore batch split on v7x
            vmem_limit_bytes=32 * 1024 * 1024,       # ample; ~1.5 MiB actually used
        ),
    )(p1, wc1m, bc1, wc2r, bc2, wf1q, bf1, wf2p, bf2p)
    return out[:n, :channels]


def reference(x, params, *, matmul_dtype=jnp.float32):
    """Pure-JAX mirror of the PyTorch forward.  matmul_dtype=bfloat16 reproduces
    the kernel's MXU numerics (bf16 operands, f32 accumulation)."""
    wc1, bc1, wc2, bc2, wf1, bf1, wf2, bf2 = params
    dn = ("NCHW", "OIHW", "NCHW")
    prec = (jax.lax.Precision.HIGHEST if matmul_dtype == jnp.float32
            else jax.lax.Precision.DEFAULT)
    cast = lambda a: a.astype(matmul_dtype)
    y = jnp.transpose(x, (0, 3, 1, 2))                       # NHWC -> NCHW
    y = lax.conv_general_dilated(cast(y), cast(wc1), STRIDE1, "VALID",
                                 dimension_numbers=dn, precision=prec,
                                 preferred_element_type=jnp.float32)
    y = jax.nn.elu(y + bc1[None, :, None, None])
    y = lax.conv_general_dilated(cast(y), cast(wc2), STRIDE2, "VALID",
                                 dimension_numbers=dn, precision=prec,
                                 preferred_element_type=jnp.float32)
    y = jax.nn.elu(y + bc2[None, :, None, None])
    y = y.reshape(y.shape[0], -1)                            # flatten (c, h2, w2)
    y = jax.nn.elu(jnp.dot(cast(y), cast(wf1.T), precision=prec,
                           preferred_element_type=jnp.float32) + bf1)
    return jnp.dot(cast(y), cast(wf2.T), precision=prec,
                   preferred_element_type=jnp.float32) + bf2


if __name__ == "__main__":
    in_dim, channels, hidden_dim, hidden_ff = 4, 8, 32, 64
    # Smallest NHWC input surviving two (16,2)-kernel/(16,2)-stride valid convs
    # with hidden_dim*H2*W2 == hidden_ff: H 256->16->1, W 8->4->2.
    N, H, W = 24, 256, 8
    NB = 16                                    # batch tile -> N padded to 32, grid=(2,)

    key = jax.random.PRNGKey(0)
    ks = jax.random.split(key, 9)
    params = (
        jax.random.normal(ks[0], (hidden_dim, in_dim, 16, 2), jnp.float32) * 0.05,
        jax.random.normal(ks[1], (hidden_dim,), jnp.float32) * 0.05,
        jax.random.normal(ks[2], (hidden_dim, hidden_dim, 16, 2), jnp.float32) * 0.05,
        jax.random.normal(ks[3], (hidden_dim,), jnp.float32) * 0.05,
        jax.random.normal(ks[4], (hidden_ff, hidden_ff), jnp.float32) * 0.1,
        jax.random.normal(ks[5], (hidden_ff,), jnp.float32) * 0.1,
        jax.random.normal(ks[6], (channels, hidden_ff), jnp.float32) * 0.1,
        jax.random.normal(ks[7], (channels,), jnp.float32) * 0.1,
    )
    x = jax.random.normal(ks[8], (N, H, W, in_dim), jnp.float32)

    prepped = preprocess_params(params)              # one-time re-layout + bf16 cast
    out = jax.block_until_ready(forward(x, prepped, channels=channels, nb=NB))
    assert out.shape == (N, channels), out.shape

    # (a) tight check vs a reference that mirrors the kernel's MXU numerics
    #     (bf16 operands, f32 accumulation) -- validates the fused math/layout.
    ref_bf = jax.block_until_ready(reference(x, params, matmul_dtype=jnp.bfloat16))
    err_bf = float(jnp.max(jnp.abs(out - ref_bf)))
    assert jnp.allclose(out, ref_bf, rtol=2e-3, atol=2e-3), err_bf

    # (b) looser check vs the pure-f32 PyTorch-equivalent reference -- bounds the
    #     end-to-end bf16-matmul quantization error of the whole net.
    ref_32 = jax.block_until_ready(reference(x, params, matmul_dtype=jnp.float32))
    err_32 = float(jnp.max(jnp.abs(out - ref_32)))
    assert jnp.allclose(out, ref_32, rtol=4e-2, atol=4e-2), err_32

    print("KERNEL_OK")
</pallas_src>

<mosaic_0001>
module attributes {stable_mosaic.version = 11 : i64} {
  func.func @_fused_net_kernel(%arg0: i32, %arg1: memref<1024x128xbf16, #tpu.memory_space<vmem>>, %arg2: memref<128x32xbf16, #tpu.memory_space<vmem>>, %arg3: memref<1x32xf32, #tpu.memory_space<vmem>>, %arg4: memref<32x32x32xbf16, #tpu.memory_space<vmem>>, %arg5: memref<1x32xf32, #tpu.memory_space<vmem>>, %arg6: memref<2x32x64xbf16, #tpu.memory_space<vmem>>, %arg7: memref<1x64xf32, #tpu.memory_space<vmem>>, %arg8: memref<64x128xbf16, #tpu.memory_space<vmem>>, %arg9: memref<1x128xf32, #tpu.memory_space<vmem>>, %arg10: memref<16x128xf32, #tpu.memory_space<vmem>>) attributes {dimension_semantics = [#tpu.dimension_semantics<parallel>], iteration_bounds = array<i64: 2>, scalar_prefetch = 0 : i64, scratch_operands = 0 : i64, tpu.core_type = #tpu.core_type<tc>, window_params = [{transform_indices = @transform_0, window_bounds = array<i64: 1024, 128>}, {pipeline_mode = #tpu.pipeline_mode<synchronous>, transform_indices = @transform_1, window_bounds = array<i64: 128, 32>}, {pipeline_mode = #tpu.pipeline_mode<synchronous>, transform_indices = @transform_2, window_bounds = array<i64: 1, 32>}, {pipeline_mode = #tpu.pipeline_mode<synchronous>, transform_indices = @transform_3, window_bounds = array<i64: 32, 32, 32>}, {pipeline_mode = #tpu.pipeline_mode<synchronous>, transform_indices = @transform_4, window_bounds = array<i64: 1, 32>}, {pipeline_mode = #tpu.pipeline_mode<synchronous>, transform_indices = @transform_5, window_bounds = array<i64: 2, 32, 64>}, {pipeline_mode = #tpu.pipeline_mode<synchronous>, transform_indices = @transform_6, window_bounds = array<i64: 1, 64>}, {pipeline_mode = #tpu.pipeline_mode<synchronous>, transform_indices = @transform_7, window_bounds = array<i64: 64, 128>}, {pipeline_mode = #tpu.pipeline_mode<synchronous>, transform_indices = @transform_8, window_bounds = array<i64: 1, 128>}, {transform_indices = @transform_9, window_bounds = array<i64: 16, 128>}]} {
    %c0 = arith.constant 0 : index
    %c0_0 = arith.constant 0 : index
    %0 = vector.load %arg1[%c0, %c0_0] : memref<1024x128xbf16, #tpu.memory_space<vmem>>, vector<1024x128xbf16>
    %c0_1 = arith.constant 0 : index
    %c0_2 = arith.constant 0 : index
    %1 = vector.load %arg2[%c0_1, %c0_2] : memref<128x32xbf16, #tpu.memory_space<vmem>>, vector<128x32xbf16>
    %cst = arith.constant dense<0.000000e+00> : vector<1024x32xf32>
    %2 = tpu.matmul %0, %1, %cst {dimension_numbers = #tpu.dot_dimension_numbers<[1], [0], [0], [1], [0, 0, 1, 1], [], []>} : vector<1024x128xbf16>, vector<128x32xbf16>, vector<1024x32xf32> -> vector<1024x32xf32>
    %c0_3 = arith.constant 0 : index
    %c0_4 = arith.constant 0 : index
    %3 = vector.load %arg3[%c0_3, %c0_4] : memref<1x32xf32, #tpu.memory_space<vmem>>, vector<1x32xf32>
    %4 = vector.broadcast %3 : vector<1x32xf32> to vector<1024x32xf32>
    %5 = arith.addf %2, %4 : vector<1024x32xf32>
    %cst_5 = arith.constant 0.000000e+00 : f32
    %6 = vector.broadcast %cst_5 : f32 to vector<1024x32xf32>
    %7 = arith.cmpf ogt, %5, %6 : vector<1024x32xf32>
    %cst_6 = arith.constant 0.000000e+00 : f32
    %8 = vector.broadcast %cst_6 : f32 to vector<1024x32xf32>
    %9 = arith.minimumf %5, %8 : vector<1024x32xf32>
    %10 = math.exp %9 : vector<1024x32xf32>
    %cst_7 = arith.constant 1.000000e+00 : f32
    %11 = vector.broadcast %cst_7 : f32 to vector<1024x32xf32>
    %12 = arith.subf %10, %11 : vector<1024x32xf32>
    %13 = arith.select %7, %5, %12 : vector<1024x32xi1>, vector<1024x32xf32>
    %14 = arith.truncf %13 : vector<1024x32xf32> to vector<1024x32xbf16>
    %15 = vector.shape_cast %14 : vector<1024x32xbf16> to vector<32x32x32xbf16>
    %c0_8 = arith.constant 0 : index
    %c0_9 = arith.constant 0 : index
    %c0_10 = arith.constant 0 : index
    %16 = vector.load %arg4[%c0_8, %c0_9, %c0_10] : memref<32x32x32xbf16, #tpu.memory_space<vmem>>, vector<32x32x32xbf16>
    %cst_11 = arith.constant dense<0.000000e+00> : vector<32x32x32xf32>
    %17 = tpu.matmul %15, %16, %cst_11 {dimension_numbers = #tpu.dot_dimension_numbers<[2], [1], [1], [2], [0, 0, 0, 1, 1, 2], [0], [0]>} : vector<32x32x32xbf16>, vector<32x32x32xbf16>, vector<32x32x32xf32> -> vector<32x32x32xf32>
    %cst_12 = arith.constant dense<0.000000e+00> : vector<32x32xf32>
    %18 = vector.multi_reduction <add>, %17, %cst_12 [0] : vector<32x32x32xf32> to vector<32x32xf32>
    %c0_13 = arith.constant 0 : index
    %c0_14 = arith.constant 0 : index
    %19 = vector.load %arg5[%c0_13, %c0_14] : memref<1x32xf32, #tpu.memory_space<vmem>>, vector<1x32xf32>
    %20 = vector.broadcast %19 : vector<1x32xf32> to vector<32x32xf32>
    %21 = arith.addf %18, %20 : vector<32x32xf32>
    %cst_15 = arith.constant 0.000000e+00 : f32
    %22 = vector.broadcast %cst_15 : f32 to vector<32x32xf32>
    %23 = arith.cmpf ogt, %21, %22 : vector<32x32xf32>
    %cst_16 = arith.constant 0.000000e+00 : f32
    %24 = vector.broadcast %cst_16 : f32 to vector<32x32xf32>
    %25 = arith.minimumf %21, %24 : vector<32x32xf32>
    %26 = math.exp %25 : vector<32x32xf32>
    %cst_17 = arith.constant 1.000000e+00 : f32
    %27 = vector.broadcast %cst_17 : f32 to vector<32x32xf32>
    %28 = arith.subf %26, %27 : vector<32x32xf32>
    %29 = arith.select %23, %21, %28 : vector<32x32xi1>, vector<32x32xf32>
    %30 = arith.truncf %29 : vector<32x32xf32> to vector<32x32xbf16>
    %31 = vector.shape_cast %30 : vector<32x32xbf16> to vector<2x16x32xbf16>
    %c0_18 = arith.constant 0 : index
    %c0_19 = arith.constant 0 : index
    %c0_20 = arith.constant 0 : index
    %32 = vector.load %arg6[%c0_18, %c0_19, %c0_20] : memref<2x32x64xbf16, #tpu.memory_space<vmem>>, vector<2x32x64xbf16>
    %cst_21 = arith.constant dense<0.000000e+00> : vector<2x16x64xf32>
    %33 = tpu.matmul %31, %32, %cst_21 {dimension_numbers = #tpu.dot_dimension_numbers<[2], [1], [1], [2], [0, 0, 0, 1, 1, 2], [0], [0]>} : vector<2x16x32xbf16>, vector<2x32x64xbf16>, vector<2x16x64xf32> -> vector<2x16x64xf32>
    %cst_22 = arith.constant dense<0.000000e+00> : vector<16x64xf32>
    %34 = vector.multi_reduction <add>, %33, %cst_22 [0] : vector<2x16x64xf32> to vector<16x64xf32>
    %c0_23 = arith.constant 0 : index
    %c0_24 = arith.constant 0 : index
    %35 = vector.load %arg7[%c0_23, %c0_24] : memref<1x64xf32, #tpu.memory_space<vmem>>, vector<1x64xf32>
    %36 = vector.broadcast %35 : vector<1x64xf32> to vector<16x64xf32>
    %37 = arith.addf %34, %36 : vector<16x64xf32>
    %cst_25 = arith.constant 0.000000e+00 : f32
    %38 = vector.broadcast %cst_25 : f32 to vector<16x64xf32>
    %39 = arith.cmpf ogt, %37, %38 : vector<16x64xf32>
    %cst_26 = arith.constant 0.000000e+00 : f32
    %40 = vector.broadcast %cst_26 : f32 to vector<16x64xf32>
    %41 = arith.minimumf %37, %40 : vector<16x64xf32>
    %42 = math.exp %41 : vector<16x64xf32>
    %cst_27 = arith.constant 1.000000e+00 : f32
    %43 = vector.broadcast %cst_27 : f32 to vector<16x64xf32>
    %44 = arith.subf %42, %43 : vector<16x64xf32>
    %45 = arith.select %39, %37, %44 : vector<16x64xi1>, vector<16x64xf32>
    %46 = arith.truncf %45 : vector<16x64xf32> to vector<16x64xbf16>
    %c0_28 = arith.constant 0 : index
    %c0_29 = arith.constant 0 : index
    %47 = vector.load %arg8[%c0_28, %c0_29] : memref<64x128xbf16, #tpu.memory_space<vmem>>, vector<64x128xbf16>
    %cst_30 = arith.constant dense<0.000000e+00> : vector<16x128xf32>
    %48 = tpu.matmul %46, %47, %cst_30 {dimension_numbers = #tpu.dot_dimension_numbers<[1], [0], [0], [1], [0, 0, 1, 1], [], []>} : vector<16x64xbf16>, vector<64x128xbf16>, vector<16x128xf32> -> vector<16x128xf32>
    %c0_31 = arith.constant 0 : index
    %c0_32 = arith.constant 0 : index
    %49 = vector.load %arg9[%c0_31, %c0_32] : memref<1x128xf32, #tpu.memory_space<vmem>>, vector<1x128xf32>
    %50 = vector.broadcast %49 : vector<1x128xf32> to vector<16x128xf32>
    %51 = arith.addf %48, %50 : vector<16x128xf32>
    %c0_33 = arith.constant 0 : index
    %c0_34 = arith.constant 0 : index
    %52 = vector.load %arg10[%c0_33, %c0_34] : memref<16x128xf32, #tpu.memory_space<vmem>>, vector<16x128xf32>
    tpu.vector_store %arg10[%c0_33, %c0_34], %51 {strides = array<i32>} : memref<16x128xf32, #tpu.memory_space<vmem>>, vector<16x128xf32>,
    return
  }
  func.func @transform_0(%arg0: i32) -> (i32, i32) {
    %c0_i32 = arith.constant 0 : i32
    %c0_i32_0 = arith.constant 0 : i32
    return %arg0, %c0_i32 : i32, i32
  }
  func.func @transform_1(%arg0: i32) -> (i32, i32) {
    %c0_i32 = arith.constant 0 : i32
    %c0_i32_0 = arith.constant 0 : i32
    %c0_i32_1 = arith.constant 0 : i32
    return %c0_i32, %c0_i32_0 : i32, i32
  }
  func.func @transform_2(%arg0: i32) -> (i32, i32) {
    %c0_i32 = arith.constant 0 : i32
    %c0_i32_0 = arith.constant 0 : i32
    %c0_i32_1 = arith.constant 0 : i32
    return %c0_i32, %c0_i32_0 : i32, i32
  }
  func.func @transform_3(%arg0: i32) -> (i32, i32, i32) {
    %c0_i32 = arith.constant 0 : i32
    %c0_i32_0 = arith.constant 0 : i32
    %c0_i32_1 = arith.constant 0 : i32
    %c0_i32_2 = arith.constant 0 : i32
    return %c0_i32, %c0_i32_0, %c0_i32_1 : i32, i32, i32
  }
  func.func @transform_4(%arg0: i32) -> (i32, i32) {
    %c0_i32 = arith.constant 0 : i32
    %c0_i32_0 = arith.constant 0 : i32
    %c0_i32_1 = arith.constant 0 : i32
    return %c0_i32, %c0_i32_0 : i32, i32
  }
  func.func @transform_5(%arg0: i32) -> (i32, i32, i32) {
    %c0_i32 = arith.constant 0 : i32
    %c0_i32_0 = arith.constant 0 : i32
    %c0_i32_1 = arith.constant 0 : i32
    %c0_i32_2 = arith.constant 0 : i32
    return %c0_i32, %c0_i32_0, %c0_i32_1 : i32, i32, i32
  }
  func.func @transform_6(%arg0: i32) -> (i32, i32) {
    %c0_i32 = arith.constant 0 : i32
    %c0_i32_0 = arith.constant 0 : i32
    %c0_i32_1 = arith.constant 0 : i32
    return %c0_i32, %c0_i32_0 : i32, i32
  }
  func.func @transform_7(%arg0: i32) -> (i32, i32) {
    %c0_i32 = arith.constant 0 : i32
    %c0_i32_0 = arith.constant 0 : i32
    %c0_i32_1 = arith.constant 0 : i32
    return %c0_i32, %c0_i32_0 : i32, i32
  }
  func.func @transform_8(%arg0: i32) -> (i32, i32) {
    %c0_i32 = arith.constant 0 : i32
    %c0_i32_0 = arith.constant 0 : i32
    %c0_i32_1 = arith.constant 0 : i32
    return %c0_i32, %c0_i32_0 : i32, i32
  }
  func.func @transform_9(%arg0: i32) -> (i32, i32) {
    %c0_i32 = arith.constant 0 : i32
    %c0_i32_0 = arith.constant 0 : i32
    return %arg0, %c0_i32 : i32, i32
  }
}

</mosaic_0001>

<llo_original>
// kernel: forward.1
$region0: #{forward.1}
  #allocation0 [shape = 'u32[]', space=smem, size = 0x4, offset = 0x4, fixed_abs, tag = 'smem constant byte address 0x4 - core index']
  #allocation1 [shape = 'u32[72,128]{1,0:T(1,128)}', space=vmem, size = 0x9000, scoped, tag = 'internal scratch']
  %s0 = inlined_call_operand.vmem [shape: bf16[2048,128], index: 0, kind: input, shape index: {}]
  %s1 = inlined_call_operand.vmem [shape: bf16[128,32], index: 1, kind: input, shape index: {}]
  %s2 = inlined_call_operand.vmem [shape: f32[1,32], index: 2, kind: input, shape index: {}]
  %s3 = inlined_call_operand.vmem [shape: bf16[32,32,32], index: 3, kind: input, shape index: {}]
  %s4 = inlined_call_operand.vmem [shape: f32[1,32], index: 4, kind: input, shape index: {}]
  %s5 = inlined_call_operand.vmem [shape: bf16[2,32,64], index: 5, kind: input, shape index: {}]
  %s6 = inlined_call_operand.vmem [shape: f32[1,64], index: 6, kind: input, shape index: {}]
  %s7 = inlined_call_operand.vmem [shape: bf16[64,128], index: 7, kind: input, shape index: {}]
  %s8 = inlined_call_operand.vmem [shape: f32[1,128], index: 8, kind: input, shape index: {}]
  %s9 = inlined_call_operand.vmem [shape: f32[32,128], index: 9, kind: output, shape index: {}]
  %s10 = sld [smem:[#allocation0]]
  $region69: #{forward.1} parent=0
    _
  %s12 = ssub.s32 1, %s10
  %s13 = scalar_select 0, %s12, %s10
  loop: start=0, step=1, limit=4
  $region2: #{forward.1} parent=0 // loop_pre_header
    _
  $region3: #{forward.1} parent=0 // loop_header
    %s15 = sphi 0, %s19
    %p16 = scmp.ge.s32.totalorder %s15, 4
    %s25 = sphi 0, %s27
    %s28 = sphi 0, %s25
    %s29 = sphi 0, %s28
    %s45 = sphi 0, %s29
    %s49 = sphi 0, %s49
    %s51 = sphi 0, %s49
    %s52 = sphi 0, %s51
    %s66 = sphi 0, %s52
    %s70 = sphi 0, %s70
    %s72 = sphi 0, %s70
    %s73 = sphi 0, %s72
    %s87 = sphi 0, %s73
    %s91 = sphi 0, %s91
    %s93 = sphi 0, %s91
    %s94 = sphi 0, %s93
    %s108 = sphi 0, %s94
    %s112 = sphi 0, %s112
    %s114 = sphi 0, %s112
    %s115 = sphi 0, %s114
    %s129 = sphi 0, %s115
    %s133 = sphi 0, %s133
    %s135 = sphi 0, %s133
    %s136 = sphi 0, %s135
    %s150 = sphi 0, %s136
    %s154 = sphi 0, %s154
    %s156 = sphi 0, %s154
    %s157 = sphi 0, %s156
    %s171 = sphi 0, %s157
    %s175 = sphi 0, %s175
    %s177 = sphi 0, %s175
    %s178 = sphi 0, %s177
    %s192 = sphi 0, %s178
    %s196 = sphi 0, %s196
    %s198 = sphi 0, %s196
    %s199 = sphi 0, %s198
    %s213 = sphi 0, %s199
    %s219 = sphi 0, %s221
    %s222 = sphi 0, %s219
    %s223 = sphi 0, %s222
    %s239 = sphi 0, %s223
  $region4: #{forward.1} parent=0 // loop_header_branch
    %18 = sbr.rel (%p16) target = $region8
  $region5: #{forward.1} parent=0 // loop_body
    %s20 = ssub.s32 %s15, 1
    %s21 = ssub.s32 %s15, 2
    %s22 = sadd.s32 %s15, 1
    %s23 = ssub.s32 %s15, %s22
    %p24 = scmp.eq.s32.totalorder %s23, 0
    %s26 = sadd.s32 %s25, 1
    %s27 = scalar_select %p24, %s25, %s26
    %p30 = pneg %p24
    %p31 = scmp.eq.s32.totalorder %s15, 1
    %p32 = por %p30, %p31
    %p33 = scmp.ne.s32.totalorder %s25, %s28
    %p34 = scmp.eq.s32.totalorder %s15, 0
    %p35 = por %p33, %p34
    %p36 = scmp.ne.s32.totalorder %s25, %s28
    %p37 = scmp.eq.s32.totalorder %s20, 1
    %p38 = por %p36, %p37
    %p39 = scmp.ne.s32.totalorder %s28, %s29
    %p40 = scmp.eq.s32.totalorder %s20, 0
    %p41 = por %p39, %p40
    %p42 = scmp.ne.s32.totalorder %s28, %s29
    %p43 = scmp.eq.s32.totalorder %s21, 1
    %p44 = por %p42, %p43
    %p46 = scmp.ne.s32.totalorder %s29, %s45
    %p47 = scmp.eq.s32.totalorder %s21, 0
    %p48 = por %p46, %p47
    %s50 = sadd.s32 %s49, 1
    %p53 = scmp.eq.s32.totalorder %s15, 1
    %p54 = scmp.ne.s32.totalorder %s49, %s51
    %p55 = scmp.eq.s32.totalorder %s15, 0
    %p56 = por %p54, %p55
    %p57 = scmp.ne.s32.totalorder %s49, %s51
    %p58 = scmp.eq.s32.totalorder %s20, 1
    %p59 = por %p57, %p58
    %p60 = scmp.ne.s32.totalorder %s51, %s52
    %p61 = scmp.eq.s32.totalorder %s20, 0
    %p62 = por %p60, %p61
    %p63 = scmp.ne.s32.totalorder %s51, %s52
    %p64 = scmp.eq.s32.totalorder %s21, 1
    %p65 = por %p63, %p64
    %p67 = scmp.ne.s32.totalorder %s52, %s66
    %p68 = scmp.eq.s32.totalorder %s21, 0
    %p69 = por %p67, %p68
    %s71 = sadd.s32 %s70, 1
    %p74 = scmp.eq.s32.totalorder %s15, 1
    %p75 = scmp.ne.s32.totalorder %s70, %s72
    %p76 = scmp.eq.s32.totalorder %s15, 0
    %p77 = por %p75, %p76
    %p78 = scmp.ne.s32.totalorder %s70, %s72
    %p79 = scmp.eq.s32.totalorder %s20, 1
    %p80 = por %p78, %p79
    %p81 = scmp.ne.s32.totalorder %s72, %s73
    %p82 = scmp.eq.s32.totalorder %s20, 0
    %p83 = por %p81, %p82
    %p84 = scmp.ne.s32.totalorder %s72, %s73
    %p85 = scmp.eq.s32.totalorder %s21, 1
    %p86 = por %p84, %p85
    %p88 = scmp.ne.s32.totalorder %s73, %s87
    %p89 = scmp.eq.s32.totalorder %s21, 0
    %p90 = por %p88, %p89
    %s92 = sadd.s32 %s91, 1
    %p95 = scmp.eq.s32.totalorder %s15, 1
    %p96 = scmp.ne.s32.totalorder %s91, %s93
    %p97 = scmp.eq.s32.totalorder %s15, 0
    %p98 = por %p96, %p97
    %p99 = scmp.ne.s32.totalorder %s91, %s93
    %p100 = scmp.eq.s32.totalorder %s20, 1
    %p101 = por %p99, %p100
    %p102 = scmp.ne.s32.totalorder %s93, %s94
    %p103 = scmp.eq.s32.totalorder %s20, 0
    %p104 = por %p102, %p103
    %p105 = scmp.ne.s32.totalorder %s93, %s94
    %p106 = scmp.eq.s32.totalorder %s21, 1
    %p107 = por %p105, %p106
    %p109 = scmp.ne.s32.totalorder %s94, %s108
    %p110 = scmp.eq.s32.totalorder %s21, 0
    %p111 = por %p109, %p110
    %s113 = sadd.s32 %s112, 1
    %p116 = scmp.eq.s32.totalorder %s15, 1
    %p117 = scmp.ne.s32.totalorder %s112, %s114
    %p118 = scmp.eq.s32.totalorder %s15, 0
    %p119 = por %p117, %p118
    %p120 = scmp.ne.s32.totalorder %s112, %s114
    %p121 = scmp.eq.s32.totalorder %s20, 1
    %p122 = por %p120, %p121
    %p123 = scmp.ne.s32.totalorder %s114, %s115
    %p124 = scmp.eq.s32.totalorder %s20, 0
    %p125 = por %p123, %p124
    %p126 = scmp.ne.s32.totalorder %s114, %s115
    %p127 = scmp.eq.s32.totalorder %s21, 1
    %p128 = por %p126, %p127
    %p130 = scmp.ne.s32.totalorder %s115, %s129
    %p131 = scmp.eq.s32.totalorder %s21, 0
    %p132 = por %p130, %p131
    %s134 = sadd.s32 %s133, 1
    %p137 = scmp.eq.s32.totalorder %s15, 1
    %p138 = scmp.ne.s32.totalorder %s133, %s135
    %p139 = scmp.eq.s32.totalorder %s15, 0
    %p140 = por %p138, %p139
    %p141 = scmp.ne.s32.totalorder %s133, %s135
    %p142 = scmp.eq.s32.totalorder %s20, 1
    %p143 = por %p141, %p142
    %p144 = scmp.ne.s32.totalorder %s135, %s136
    %p145 = scmp.eq.s32.totalorder %s20, 0
    %p146 = por %p144, %p145
    %p147 = scmp.ne.s32.totalorder %s135, %s136
    %p148 = scmp.eq.s32.totalorder %s21, 1
    %p149 = por %p147, %p148
    %p151 = scmp.ne.s32.totalorder %s136, %s150
    %p152 = scmp.eq.s32.totalorder %s21, 0
    %p153 = por %p151, %p152
    %s155 = sadd.s32 %s154, 1
    %p158 = scmp.eq.s32.totalorder %s15, 1
    %p159 = scmp.ne.s32.totalorder %s154, %s156
    %p160 = scmp.eq.s32.totalorder %s15, 0
    %p161 = por %p159, %p160
    %p162 = scmp.ne.s32.totalorder %s154, %s156
    %p163 = scmp.eq.s32.totalorder %s20, 1
    %p164 = por %p162, %p163
    %p165 = scmp.ne.s32.totalorder %s156, %s157
    %p166 = scmp.eq.s32.totalorder %s20, 0
    %p167 = por %p165, %p166
    %p168 = scmp.ne.s32.totalorder %s156, %s157
    %p169 = scmp.eq.s32.totalorder %s21, 1
    %p170 = por %p168, %p169
    %p172 = scmp.ne.s32.totalorder %s157, %s171
    %p173 = scmp.eq.s32.totalorder %s21, 0
    %p174 = por %p172, %p173
    %s176 = sadd.s32 %s175, 1
    %p179 = scmp.eq.s32.totalorder %s15, 1
    %p180 = scmp.ne.s32.totalorder %s175, %s177
    %p181 = scmp.eq.s32.totalorder %s15, 0
    %p182 = por %p180, %p181
    %p183 = scmp.ne.s32.totalorder %s175, %s177
    %p184 = scmp.eq.s32.totalorder %s20, 1
    %p185 = por %p183, %p184
    %p186 = scmp.ne.s32.totalorder %s177, %s178
    %p187 = scmp.eq.s32.totalorder %s20, 0
    %p188 = por %p186, %p187
    %p189 = scmp.ne.s32.totalorder %s177, %s178
    %p190 = scmp.eq.s32.totalorder %s21, 1
    %p191 = por %p189, %p190
    %p193 = scmp.ne.s32.totalorder %s178, %s192
    %p194 = scmp.eq.s32.totalorder %s21, 0
    %p195 = por %p193, %p194
    %s197 = sadd.s32 %s196, 1
    %p200 = scmp.eq.s32.totalorder %s15, 1
    %p201 = scmp.ne.s32.totalorder %s196, %s198
    %p202 = scmp.eq.s32.totalorder %s15, 0
    %p203 = por %p201, %p202
    %p204 = scmp.ne.s32.totalorder %s196, %s198
    %p205 = scmp.eq.s32.totalorder %s20, 1
    %p206 = por %p204, %p205
    %p207 = scmp.ne.s32.totalorder %s198, %s199
    %p208 = scmp.eq.s32.totalorder %s20, 0
    %p209 = por %p207, %p208
    %p210 = scmp.ne.s32.totalorder %s198, %s199
    %p211 = scmp.eq.s32.totalorder %s21, 1
    %p212 = por %p210, %p211
    %p214 = scmp.ne.s32.totalorder %s199, %s213
    %p215 = scmp.eq.s32.totalorder %s21, 0
    %p216 = por %p214, %p215
    %s217 = ssub.s32 %s15, %s22
    %p218 = scmp.eq.s32.totalorder %s217, 0
    %s220 = sadd.s32 %s219, 1
    %s221 = scalar_select %p218, %s219, %s220
    %p224 = pneg %p218
    %p225 = scmp.eq.s32.totalorder %s15, 1
    %p226 = por %p224, %p225
    %p227 = scmp.ne.s32.totalorder %s219, %s222
    %p228 = scmp.eq.s32.totalorder %s15, 0
    %p229 = por %p227, %p228
    %p230 = scmp.ne.s32.totalorder %s219, %s222
    %p231 = scmp.eq.s32.totalorder %s20, 1
    %p232 = por %p230, %p231
    %p233 = scmp.ne.s32.totalorder %s222, %s223
    %p234 = scmp.eq.s32.totalorder %s20, 0
    %p235 = por %p233, %p234
    %p236 = scmp.ne.s32.totalorder %s222, %s223
    %p237 = scmp.eq.s32.totalorder %s21, 1
    %p238 = por %p236, %p237
    %p240 = scmp.ne.s32.totalorder %s223, %s239
    %p241 = scmp.eq.s32.totalorder %s21, 0
    %p242 = por %p240, %p241
    %p243 = scmp.le.s32.totalorder 1, %s15
    %p244 = scmp.lt.s32.totalorder %s15, 3
    %p245 = pnand %p243, %p244
    %p246 = pneg %p245
    // Predicated region
    $region9: #{forward.1} parent=5 // pred_check
      _
    $region10: #{forward.1} parent=5 // pred_check_branch
      %248 = sbr.rel (%p245) target = $region12
    $region11: #{forward.1} parent=5 // pred_region
      %s249 = ssub.s32 %s15, 1
      // Predicated region
      $region13: #{forward.1} parent=11 // pred_check
        %p250 = pneg %p62
      $region14: #{forward.1} parent=11 // pred_check_branch
        %252 = sbr.rel (%p250) target = $region16
      $region15: #{forward.1} parent=11 // pred_region
        _
      $region16: #{forward.1} parent=11 // pred_fallthru
        _
      // Predicated region
      $region17: #{forward.1} parent=11 // pred_check
        %p253 = pneg %p83
      $region18: #{forward.1} parent=11 // pred_check_branch
        %255 = sbr.rel (%p253) target = $region20
      $region19: #{forward.1} parent=11 // pred_region
        _
      $region20: #{forward.1} parent=11 // pred_fallthru
        _
      // Predicated region
      $region21: #{forward.1} parent=11 // pred_check
        %p256 = pneg %p104
      $region22: #{forward.1} parent=11 // pred_check_branch
        %258 = sbr.rel (%p256) target = $region24
      $region23: #{forward.1} parent=11 // pred_region
        _
      $region24: #{forward.1} parent=11 // pred_fallthru
        _
      // Predicated region
      $region25: #{forward.1} parent=11 // pred_check
        %p259 = pneg %p125
      $region26: #{forward.1} parent=11 // pred_check_branch
        %261 = sbr.rel (%p259) target = $region28
      $region27: #{forward.1} parent=11 // pred_region
        _
      $region28: #{forward.1} parent=11 // pred_fallthru
        _
      // Predicated region
      $region29: #{forward.1} parent=11 // pred_check
        %p262 = pneg %p146
      $region30: #{forward.1} parent=11 // pred_check_branch
        %264 = sbr.rel (%p262) target = $region32
      $region31: #{forward.1} parent=11 // pred_region
        _
      $region32: #{forward.1} parent=11 // pred_fallthru
        _
      // Predicated region
      $region33: #{forward.1} parent=11 // pred_check
        %p265 = pneg %p167
      $region34: #{forward.1} parent=11 // pred_check_branch
        %267 = sbr.rel (%p265) target = $region36
      $region35: #{forward.1} parent=11 // pred_region
        _
      $region36: #{forward.1} parent=11 // pred_fallthru
        _
      // Predicated region
      $region37: #{forward.1} parent=11 // pred_check
        %p268 = pneg %p188
      $region38: #{forward.1} parent=11 // pred_check_branch
        %270 = sbr.rel (%p268) target = $region40
      $region39: #{forward.1} parent=11 // pred_region
        _
      $region40: #{forward.1} parent=11 // pred_fallthru
        _
      // Predicated region
      $region41: #{forward.1} parent=11 // pred_check
        %p271 = pneg %p209
      $region42: #{forward.1} parent=11 // pred_check_branch
        %273 = sbr.rel (%p271) target = $region44
      $region43: #{forward.1} parent=11 // pred_region
        _
      $region44: #{forward.1} parent=11 // pred_fallthru
        _
    $region12: #{forward.1} parent=5 // pred_fallthru
      _
    %p274 = scmp.lt.s32.totalorder %s15, 2
    // Predicated region
    $region45: #{forward.1} parent=5 // pred_check
      %p275 = pneg %p274
    $region46: #{forward.1} parent=5 // pred_check_branch
      %277 = sbr.rel (%p275) target = $region48
    $region47: #{forward.1} parent=5 // pred_region
      // Predicated region
      $region49: #{forward.1} parent=47 // pred_check
        %p278 = pneg %p35
      $region50: #{forward.1} parent=47 // pred_check_branch
        %280 = sbr.rel (%p278) target = $region52
      $region51: #{forward.1} parent=47 // pred_region
        %s281 = smul.u32 128, %s15
        %p282 = scmp.lt.s32.totalorder %s281, 255
        %s283 = scalar_select %p282, %s281, 255
        %s284 = smul.addr %s283, 4
        %s285 = scalar_lea.vmem %s0, %s284
        %s286 = smul.u32 128, %s15
      $region52: #{forward.1} parent=47 // pred_fallthru
        _
    $region48: #{forward.1} parent=5 // pred_fallthru
      _
    %p287 = scmp.le.s32.totalorder 1, %s15
    %p288 = scmp.lt.s32.totalorder %s15, 3
    %p289 = pnand %p287, %p288
    %p290 = pneg %p289
    // Predicated region
    $region53: #{forward.1} parent=5 // pred_check
      _
    $region54: #{forward.1} parent=5 // pred_check_branch
      %292 = sbr.rel (%p289) target = $region56
    $region55: #{forward.1} parent=5 // pred_region
      %s293 = ssub.s32 %s15, 1
      %s294 = smul.u32 128, %s20
      %p295 = scmp.lt.s32.totalorder %s294, 255
      %s296 = scalar_select %p295, %s294, 255
      %s297 = smul.addr %s296, 4
      %s298 = scalar_lea.vmem %s0, %s297
      %p299 = pneg %p41
      %p300 = pneg %p38
      %p301 = pneg %p62
      %p302 = pneg %p59
      %p303 = pneg %p83
      %p304 = pneg %p80
      %p305 = pneg %p104
      %p306 = pneg %p101
      %p307 = pneg %p125
      %p308 = pneg %p122
      %p309 = pneg %p146
      %p310 = pneg %p143
      %p311 = pneg %p167
      %p312 = pneg %p164
      %p313 = pneg %p188
      %p314 = pneg %p185
      %p315 = pneg %p209
      %p316 = pneg %p206
      %p317 = pneg %p235
      %p318 = pneg %p232
      %s319 = smul.u32 2, %s20
      %p320 = scmp.lt.s32.totalorder %s319, 3
      %s321 = scalar_select %p320, %s319, 3
      %s322 = smul.addr %s321, 8
      %s323 = scalar_lea.vmem %s9, %s322
      %s324 = smul.u32 128, %s20
      %p325 = scmp.lt.s32.totalorder %s324, 255
      %s326 = scalar_select %p325, %s324, 255
      %s327 = smul.addr %s326, 4
      %s328 = scalar_lea.vmem %s0, %s327
      %s329 = smul.u32 128, %s20
      %s330 = smul.u32 2, %s20
      %p331 = scmp.lt.s32.totalorder %s330, 3
      %s332 = scalar_select %p331, %s330, 3
      %s333 = smul.addr %s332, 8
      %s334 = scalar_lea.vmem %s9, %s333
      %s335 = smul.u32 2, %s20
      %v337 = vld [vmem:[%s328] sm:$0xf]
      %v338 = vld [vmem:[%s328 + $0x4] sm:$0xf]
      %v339 = vld [vmem:[%s328 + $0x8] sm:$0xf]
      %v340 = vld [vmem:[%s328 + $0xc] sm:$0xf]
      %v341 = vld [vmem:[%s328 + $0x10] sm:$0xf]
      %v342 = vld [vmem:[%s328 + $0x14] sm:$0xf]
      %v343 = vld [vmem:[%s328 + $0x18] sm:$0xf]
      %v344 = vld [vmem:[%s328 + $0x1c] sm:$0xf]
      %v345 = vld [vmem:[%s328 + $0x20] sm:$0xf]
      %v346 = vld [vmem:[%s328 + $0x24] sm:$0xf]
      %v347 = vld [vmem:[%s328 + $0x28] sm:$0xf]
      %v348 = vld [vmem:[%s328 + $0x2c] sm:$0xf]
      %v349 = vld [vmem:[%s328 + $0x30] sm:$0xf]
      %v350 = vld [vmem:[%s328 + $0x34] sm:$0xf]
      %v351 = vld [vmem:[%s328 + $0x38] sm:$0xf]
      %v352 = vld [vmem:[%s328 + $0x3c] sm:$0xf]
      %v353 = vld [vmem:[%s328 + $0x40] sm:$0xf]
      %v354 = vld [vmem:[%s328 + $0x44] sm:$0xf]
      %v355 = vld [vmem:[%s328 + $0x48] sm:$0xf]
      %v356 = vld [vmem:[%s328 + $0x4c] sm:$0xf]
      %v357 = vld [vmem:[%s328 + $0x50] sm:$0xf]
      %v358 = vld [vmem:[%s328 + $0x54] sm:$0xf]
      %v359 = vld [vmem:[%s328 + $0x58] sm:$0xf]
      %v360 = vld [vmem:[%s328 + $0x5c] sm:$0xf]
      %v361 = vld [vmem:[%s328 + $0x60] sm:$0xf]
      %v362 = vld [vmem:[%s328 + $0x64] sm:$0xf]
      %v363 = vld [vmem:[%s328 + $0x68] sm:$0xf]
      %v364 = vld [vmem:[%s328 + $0x6c] sm:$0xf]
      %v365 = vld [vmem:[%s328 + $0x70] sm:$0xf]
      %v366 = vld [vmem:[%s328 + $0x74] sm:$0xf]
      %v367 = vld [vmem:[%s328 + $0x78] sm:$0xf]
      %v368 = vld [vmem:[%s328 + $0x7c] sm:$0xf]
      %v369 = vld [vmem:[%s328 + $0x80] sm:$0xf]
      %v370 = vld [vmem:[%s328 + $0x84] sm:$0xf]
      %v371 = vld [vmem:[%s328 + $0x88] sm:$0xf]
      %v372 = vld [vmem:[%s328 + $0x8c] sm:$0xf]
      %v373 = vld [vmem:[%s328 + $0x90] sm:$0xf]
      %v374 = vld [vmem:[%s328 + $0x94] sm:$0xf]
      %v375 = vld [vmem:[%s328 + $0x98] sm:$0xf]
      %v376 = vld [vmem:[%s328 + $0x9c] sm:$0xf]
      %v377 = vld [vmem:[%s328 + $0xa0] sm:$0xf]
      %v378 = vld [vmem:[%s328 + $0xa4] sm:$0xf]
      %v379 = vld [vmem:[%s328 + $0xa8] sm:$0xf]
      %v380 = vld [vmem:[%s328 + $0xac] sm:$0xf]
      %v381 = vld [vmem:[%s328 + $0xb0] sm:$0xf]
      %v382 = vld [vmem:[%s328 + $0xb4] sm:$0xf]
      %v383 = vld [vmem:[%s328 + $0xb8] sm:$0xf]
      %v384 = vld [vmem:[%s328 + $0xbc] sm:$0xf]
      %v385 = vld [vmem:[%s328 + $0xc0] sm:$0xf]
      %v386 = vld [vmem:[%s328 + $0xc4] sm:$0xf]
      %v387 = vld [vmem:[%s328 + $0xc8] sm:$0xf]
      %v388 = vld [vmem:[%s328 + $0xcc] sm:$0xf]
      %v389 = vld [vmem:[%s328 + $0xd0] sm:$0xf]
      %v390 = vld [vmem:[%s328 + $0xd4] sm:$0xf]
      %v391 = vld [vmem:[%s328 + $0xd8] sm:$0xf]
      %v392 = vld [vmem:[%s328 + $0xdc] sm:$0xf]
      %v393 = vld [vmem:[%s328 + $0xe0] sm:$0xf]
      %v394 = vld [vmem:[%s328 + $0xe4] sm:$0xf]
      %v395 = vld [vmem:[%s328 + $0xe8] sm:$0xf]
      %v396 = vld [vmem:[%s328 + $0xec] sm:$0xf]
      %v397 = vld [vmem:[%s328 + $0xf0] sm:$0xf]
      %v398 = vld [vmem:[%s328 + $0xf4] sm:$0xf]
      %v399 = vld [vmem:[%s328 + $0xf8] sm:$0xf]
      %v400 = vld [vmem:[%s328 + $0xfc] sm:$0xf]
      %v401 = vld [vmem:[%s328 + $0x100] sm:$0xf]
      %v402 = vld [vmem:[%s328 + $0x104] sm:$0xf]
      %v403 = vld [vmem:[%s328 + $0x108] sm:$0xf]
      %v404 = vld [vmem:[%s328 + $0x10c] sm:$0xf]
      %v405 = vld [vmem:[%s328 + $0x110] sm:$0xf]
      %v406 = vld [vmem:[%s328 + $0x114] sm:$0xf]
      %v407 = vld [vmem:[%s328 + $0x118] sm:$0xf]
      %v408 = vld [vmem:[%s328 + $0x11c] sm:$0xf]
      %v409 = vld [vmem:[%s328 + $0x120] sm:$0xf]
      %v410 = vld [vmem:[%s328 + $0x124] sm:$0xf]
      %v411 = vld [vmem:[%s328 + $0x128] sm:$0xf]
      %v412 = vld [vmem:[%s328 + $0x12c] sm:$0xf]
      %v413 = vld [vmem:[%s328 + $0x130] sm:$0xf]
      %v414 = vld [vmem:[%s328 + $0x134] sm:$0xf]
      %v415 = vld [vmem:[%s328 + $0x138] sm:$0xf]
      %v416 = vld [vmem:[%s328 + $0x13c] sm:$0xf]
      %v417 = vld [vmem:[%s328 + $0x140] sm:$0xf]
      %v418 = vld [vmem:[%s328 + $0x144] sm:$0xf]
      %v419 = vld [vmem:[%s328 + $0x148] sm:$0xf]
      %v420 = vld [vmem:[%s328 + $0x14c] sm:$0xf]
      %v421 = vld [vmem:[%s328 + $0x150] sm:$0xf]
      %v422 = vld [vmem:[%s328 + $0x154] sm:$0xf]
      %v423 = vld [vmem:[%s328 + $0x158] sm:$0xf]
      %v424 = vld [vmem:[%s328 + $0x15c] sm:$0xf]
      %v425 = vld [vmem:[%s328 + $0x160] sm:$0xf]
      %v426 = vld [vmem:[%s328 + $0x164] sm:$0xf]
      %v427 = vld [vmem:[%s328 + $0x168] sm:$0xf]
      %v428 = vld [vmem:[%s328 + $0x16c] sm:$0xf]
      %v429 = vld [vmem:[%s328 + $0x170] sm:$0xf]
      %v430 = vld [vmem:[%s328 + $0x174] sm:$0xf]
      %v431 = vld [vmem:[%s328 + $0x178] sm:$0xf]
      %v432 = vld [vmem:[%s328 + $0x17c] sm:$0xf]
      %v433 = vld [vmem:[%s328 + $0x180] sm:$0xf]
      %v434 = vld [vmem:[%s328 + $0x184] sm:$0xf]
      %v435 = vld [vmem:[%s328 + $0x188] sm:$0xf]
      %v436 = vld [vmem:[%s328 + $0x18c] sm:$0xf]
      %v437 = vld [vmem:[%s328 + $0x190] sm:$0xf]
      %v438 = vld [vmem:[%s328 + $0x194] sm:$0xf]
      %v439 = vld [vmem:[%s328 + $0x198] sm:$0xf]
      %v440 = vld [vmem:[%s328 + $0x19c] sm:$0xf]
      %v441 = vld [vmem:[%s328 + $0x1a0] sm:$0xf]
      %v442 = vld [vmem:[%s328 + $0x1a4] sm:$0xf]
      %v443 = vld [vmem:[%s328 + $0x1a8] sm:$0xf]
      %v444 = vld [vmem:[%s328 + $0x1ac] sm:$0xf]
      %v445 = vld [vmem:[%s328 + $0x1b0] sm:$0xf]
      %v446 = vld [vmem:[%s328 + $0x1b4] sm:$0xf]
      %v447 = vld [vmem:[%s328 + $0x1b8] sm:$0xf]
      %v448 = vld [vmem:[%s328 + $0x1bc] sm:$0xf]
      %v449 = vld [vmem:[%s328 + $0x1c0] sm:$0xf]
      %v450 = vld [vmem:[%s328 + $0x1c4] sm:$0xf]
      %v451 = vld [vmem:[%s328 + $0x1c8] sm:$0xf]
      %v452 = vld [vmem:[%s328 + $0x1cc] sm:$0xf]
      %v453 = vld [vmem:[%s328 + $0x1d0] sm:$0xf]
      %v454 = vld [vmem:[%s328 + $0x1d4] sm:$0xf]
      %v455 = vld [vmem:[%s328 + $0x1d8] sm:$0xf]
      %v456 = vld [vmem:[%s328 + $0x1dc] sm:$0xf]
      %v457 = vld [vmem:[%s328 + $0x1e0] sm:$0xf]
      %v458 = vld [vmem:[%s328 + $0x1e4] sm:$0xf]
      %v459 = vld [vmem:[%s328 + $0x1e8] sm:$0xf]
      %v460 = vld [vmem:[%s328 + $0x1ec] sm:$0xf]
      %v461 = vld [vmem:[%s328 + $0x1f0] sm:$0xf]
      %v462 = vld [vmem:[%s328 + $0x1f4] sm:$0xf]
      %v463 = vld [vmem:[%s328 + $0x1f8] sm:$0xf]
      %v464 = vld [vmem:[%s328 + $0x1fc] sm:$0xf]
      %v465 = vld [vmem:[%s1] sm:$0xf]
      %v466 = vld [vmem:[%s1 + $0x4] sm:$0xf]
      %v467 = vld [vmem:[%s1 + $0x8] sm:$0xf]
      %v468 = vld [vmem:[%s1 + $0xc] sm:$0xf]
      %v469 = vld [vmem:[%s1 + $0x10] sm:$0xf]
      %v470 = vld [vmem:[%s1 + $0x14] sm:$0xf]
      %v471 = vld [vmem:[%s1 + $0x18] sm:$0xf]
      %v472 = vld [vmem:[%s1 + $0x1c] sm:$0xf]
      %v473 = vld [vmem:[%s1 + $0x20] sm:$0xf]
      %v474 = vld [vmem:[%s1 + $0x24] sm:$0xf]
      %v475 = vld [vmem:[%s1 + $0x28] sm:$0xf]
      %v476 = vld [vmem:[%s1 + $0x2c] sm:$0xf]
      %v477 = vld [vmem:[%s1 + $0x30] sm:$0xf]
      %v478 = vld [vmem:[%s1 + $0x34] sm:$0xf]
      %v479 = vld [vmem:[%s1 + $0x38] sm:$0xf]
      %v480 = vld [vmem:[%s1 + $0x3c] sm:$0xf]
      %v481 = vld [vmem:[%s2] sm:$0x1]
      %v483 = vperm.slane %v481, 0
      %v613 = vunpack.c.l.b16 %v337
      %v614 = vunpack.c.l.b16 %v338
      %v615 = vunpack.c.l.b16 %v339
      %v616 = vunpack.c.l.b16 %v340
      %v617 = vunpack.c.l.b16 %v341
      %v618 = vunpack.c.l.b16 %v342
      %v619 = vunpack.c.l.b16 %v343
      %v620 = vunpack.c.l.b16 %v344
      %v621 = vunpack.c.l.b16 %v345
      %v622 = vunpack.c.l.b16 %v346
      %v623 = vunpack.c.l.b16 %v347
      %v624 = vunpack.c.l.b16 %v348
      %v625 = vunpack.c.l.b16 %v349
      %v626 = vunpack.c.l.b16 %v350
      %v627 = vunpack.c.l.b16 %v351
      %v628 = vunpack.c.l.b16 %v352
      %v629 = vunpack.c.l.b16 %v353
      %v630 = vunpack.c.l.b16 %v354
      %v631 = vunpack.c.l.b16 %v355
      %v632 = vunpack.c.l.b16 %v356
      %v633 = vunpack.c.l.b16 %v357
      %v634 = vunpack.c.l.b16 %v358
      %v635 = vunpack.c.l.b16 %v359
      %v636 = vunpack.c.l.b16 %v360
      %v637 = vunpack.c.l.b16 %v361
      %v638 = vunpack.c.l.b16 %v362
      %v639 = vunpack.c.l.b16 %v363
      %v640 = vunpack.c.l.b16 %v364
      %v641 = vunpack.c.l.b16 %v365
      %v642 = vunpack.c.l.b16 %v366
      %v643 = vunpack.c.l.b16 %v367
      %v644 = vunpack.c.l.b16 %v368
      %v645 = vunpack.c.l.b16 %v369
      %v646 = vunpack.c.l.b16 %v370
      %v647 = vunpack.c.l.b16 %v371
      %v648 = vunpack.c.l.b16 %v372
      %v649 = vunpack.c.l.b16 %v373
      %v650 = vunpack.c.l.b16 %v374
      %v651 = vunpack.c.l.b16 %v375
      %v652 = vunpack.c.l.b16 %v376
      %v653 = vunpack.c.l.b16 %v377
      %v654 = vunpack.c.l.b16 %v378
      %v655 = vunpack.c.l.b16 %v379
      %v656 = vunpack.c.l.b16 %v380
      %v657 = vunpack.c.l.b16 %v381
      %v658 = vunpack.c.l.b16 %v382
      %v659 = vunpack.c.l.b16 %v383
      %v660 = vunpack.c.l.b16 %v384
      %v661 = vunpack.c.l.b16 %v385
      %v662 = vunpack.c.l.b16 %v386
      %v663 = vunpack.c.l.b16 %v387
      %v664 = vunpack.c.l.b16 %v388
      %v665 = vunpack.c.l.b16 %v389
      %v666 = vunpack.c.l.b16 %v390
      %v667 = vunpack.c.l.b16 %v391
      %v668 = vunpack.c.l.b16 %v392
      %v669 = vunpack.c.l.b16 %v393
      %v670 = vunpack.c.l.b16 %v394
      %v671 = vunpack.c.l.b16 %v395
      %v672 = vunpack.c.l.b16 %v396
      %v673 = vunpack.c.l.b16 %v397
      %v674 = vunpack.c.l.b16 %v398
      %v675 = vunpack.c.l.b16 %v399
      %v676 = vunpack.c.l.b16 %v400
      %v677 = vunpack.c.l.b16 %v401
      %v678 = vunpack.c.l.b16 %v402
      %v679 = vunpack.c.l.b16 %v403
      %v680 = vunpack.c.l.b16 %v404
      %v681 = vunpack.c.l.b16 %v405
      %v682 = vunpack.c.l.b16 %v406
      %v683 = vunpack.c.l.b16 %v407
      %v684 = vunpack.c.l.b16 %v408
      %v685 = vunpack.c.l.b16 %v409
      %v686 = vunpack.c.l.b16 %v410
      %v687 = vunpack.c.l.b16 %v411
      %v688 = vunpack.c.l.b16 %v412
      %v689 = vunpack.c.l.b16 %v413
      %v690 = vunpack.c.l.b16 %v414
      %v691 = vunpack.c.l.b16 %v415
      %v692 = vunpack.c.l.b16 %v416
      %v693 = vunpack.c.l.b16 %v417
      %v694 = vunpack.c.l.b16 %v418
      %v695 = vunpack.c.l.b16 %v419
      %v696 = vunpack.c.l.b16 %v420
      %v697 = vunpack.c.l.b16 %v421
      %v698 = vunpack.c.l.b16 %v422
      %v699 = vunpack.c.l.b16 %v423
      %v700 = vunpack.c.l.b16 %v424
      %v701 = vunpack.c.l.b16 %v425
      %v702 = vunpack.c.l.b16 %v426
      %v703 = vunpack.c.l.b16 %v427
      %v704 = vunpack.c.l.b16 %v428
      %v705 = vunpack.c.l.b16 %v429
      %v706 = vunpack.c.l.b16 %v430
      %v707 = vunpack.c.l.b16 %v431
      %v708 = vunpack.c.l.b16 %v432
      %v709 = vunpack.c.l.b16 %v433
      %v710 = vunpack.c.l.b16 %v434
      %v711 = vunpack.c.l.b16 %v435
      %v712 = vunpack.c.l.b16 %v436
      %v713 = vunpack.c.l.b16 %v437
      %v714 = vunpack.c.l.b16 %v438
      %v715 = vunpack.c.l.b16 %v439
      %v716 = vunpack.c.l.b16 %v440
      %v717 = vunpack.c.l.b16 %v441
      %v718 = vunpack.c.l.b16 %v442
      %v719 = vunpack.c.l.b16 %v443
      %v720 = vunpack.c.l.b16 %v444
      %v721 = vunpack.c.l.b16 %v445
      %v722 = vunpack.c.l.b16 %v446
      %v723 = vunpack.c.l.b16 %v447
      %v724 = vunpack.c.l.b16 %v448
      %v725 = vunpack.c.l.b16 %v449
      %v726 = vunpack.c.l.b16 %v450
      %v727 = vunpack.c.l.b16 %v451
      %v728 = vunpack.c.l.b16 %v452
      %v729 = vunpack.c.l.b16 %v453
      %v730 = vunpack.c.l.b16 %v454
      %v731 = vunpack.c.l.b16 %v455
      %v732 = vunpack.c.l.b16 %v456
      %v733 = vunpack.c.l.b16 %v457
      %v734 = vunpack.c.l.b16 %v458
      %v735 = vunpack.c.l.b16 %v459
      %v736 = vunpack.c.l.b16 %v460
      %v737 = vunpack.c.l.b16 %v461
      %v738 = vunpack.c.l.b16 %v462
      %v739 = vunpack.c.l.b16 %v463
      %v740 = vunpack.c.l.b16 %v464
      %v741 = vpack.c.b16 %v614, %v613
      %v742 = vpack.c.b16 %v616, %v615
      %v743 = vpack.c.b16 %v618, %v617
      %v744 = vpack.c.b16 %v620, %v619
      %v745 = vpack.c.b16 %v622, %v621
      %v746 = vpack.c.b16 %v624, %v623
      %v747 = vpack.c.b16 %v626, %v625
      %v748 = vpack.c.b16 %v628, %v627
      %v749 = vpack.c.b16 %v630, %v629
      %v750 = vpack.c.b16 %v632, %v631
      %v751 = vpack.c.b16 %v634, %v633
      %v752 = vpack.c.b16 %v636, %v635
      %v753 = vpack.c.b16 %v638, %v637
      %v754 = vpack.c.b16 %v640, %v639
      %v755 = vpack.c.b16 %v642, %v641
      %v756 = vpack.c.b16 %v644, %v643
      %v757 = vpack.c.b16 %v646, %v645
      %v758 = vpack.c.b16 %v648, %v647
      %v759 = vpack.c.b16 %v650, %v649
      %v760 = vpack.c.b16 %v652, %v651
      %v761 = vpack.c.b16 %v654, %v653
      %v762 = vpack.c.b16 %v656, %v655
      %v763 = vpack.c.b16 %v658, %v657
      %v764 = vpack.c.b16 %v660, %v659
      %v765 = vpack.c.b16 %v662, %v661
      %v766 = vpack.c.b16 %v664, %v663
      %v767 = vpack.c.b16 %v666, %v665
      %v768 = vpack.c.b16 %v668, %v667
      %v769 = vpack.c.b16 %v670, %v669
      %v770 = vpack.c.b16 %v672, %v671
      %v771 = vpack.c.b16 %v674, %v673
      %v772 = vpack.c.b16 %v676, %v675
      %v773 = vpack.c.b16 %v678, %v677
      %v774 = vpack.c.b16 %v680, %v679
      %v775 = vpack.c.b16 %v682, %v681
      %v776 = vpack.c.b16 %v684, %v683
      %v777 = vpack.c.b16 %v686, %v685
      %v778 = vpack.c.b16 %v688, %v687
      %v779 = vpack.c.b16 %v690, %v689
      %v780 = vpack.c.b16 %v692, %v691
      %v781 = vpack.c.b16 %v694, %v693
      %v782 = vpack.c.b16 %v696, %v695
      %v783 = vpack.c.b16 %v698, %v697
      %v784 = vpack.c.b16 %v700, %v699
      %v785 = vpack.c.b16 %v702, %v701
      %v786 = vpack.c.b16 %v704, %v703
      %v787 = vpack.c.b16 %v706, %v705
      %v788 = vpack.c.b16 %v708, %v707
      %v789 = vpack.c.b16 %v710, %v709
      %v790 = vpack.c.b16 %v712, %v711
      %v791 = vpack.c.b16 %v714, %v713
      %v792 = vpack.c.b16 %v716, %v715
      %v793 = vpack.c.b16 %v718, %v717
      %v794 = vpack.c.b16 %v720, %v719
      %v795 = vpack.c.b16 %v722, %v721
      %v796 = vpack.c.b16 %v724, %v723
      %v797 = vpack.c.b16 %v726, %v725
      %v798 = vpack.c.b16 %v728, %v727
      %v799 = vpack.c.b16 %v730, %v729
      %v800 = vpack.c.b16 %v732, %v731
      %v801 = vpack.c.b16 %v734, %v733
      %v802 = vpack.c.b16 %v736, %v735
      %v803 = vpack.c.b16 %v738, %v737
      %v804 = vpack.c.b16 %v740, %v739
      %v885 = vunpack.c.l.b16 %v465
      %v886 = vunpack.c.l.b16 %v466
      %v887 = vunpack.c.l.b16 %v467
      %v888 = vunpack.c.l.b16 %v468
      %v889 = vunpack.c.l.b16 %v469
      %v890 = vunpack.c.l.b16 %v470
      %v891 = vunpack.c.l.b16 %v471
      %v892 = vunpack.c.l.b16 %v472
      %v893 = vunpack.c.l.b16 %v473
      %v894 = vunpack.c.l.b16 %v474
      %v895 = vunpack.c.l.b16 %v475
      %v896 = vunpack.c.l.b16 %v476
      %v897 = vunpack.c.l.b16 %v477
      %v898 = vunpack.c.l.b16 %v478
      %v899 = vunpack.c.l.b16 %v479
      %v900 = vunpack.c.l.b16 %v480
      %v901 = vpack.c.b16 %v886, %v885
      %v902 = vpack.c.b16 %v888, %v887
      %v903 = vpack.c.b16 %v890, %v889
      %v904 = vpack.c.b16 %v892, %v891
      %v905 = vpack.c.b16 %v894, %v893
      %v906 = vpack.c.b16 %v896, %v895
      %v907 = vpack.c.b16 %v898, %v897
      %v908 = vpack.c.b16 %v900, %v899
      %917 = vmatpush.bf16.msra.mxu0 %v908
      %918 = vmatpush.bf16.msra.mxu0 %v907
      %919 = vmatpush.bf16.msra.mxu0 %v906
      %920 = vmatpush.bf16.msra.mxu0 %v905
      %921 = vmatpush.bf16.msra.mxu0 %v904
      %922 = vmatpush.bf16.msra.mxu0 %v903
      %923 = vmatpush.bf16.msra.mxu0 %v902
      %924 = vmatpush.bf16.msra.mxu0 %v901
      %925 = vmatmul.bf16.gmra.mxu0 %v741
      %v926 = vpop.f32.mrf.mxu0
      %v927 = vadd.f32 %v483, %v926
      %v928 = vpop.f32.mrf.mxu0
      %v929 = vadd.f32 %v483, %v928
      %930 = vmatmul.bf16.gmra.mxu0 %v742
      %v931 = vpop.f32.mrf.mxu0
      %v932 = vadd.f32 %v483, %v931
      %v933 = vpop.f32.mrf.mxu0
      %v934 = vadd.f32 %v483, %v933
      %935 = vmatmul.bf16.gmra.mxu0 %v743
      %v936 = vpop.f32.mrf.mxu0
      %v937 = vadd.f32 %v483, %v936
      %v938 = vpop.f32.mrf.mxu0
      %v939 = vadd.f32 %v483, %v938
      %940 = vmatmul.bf16.gmra.mxu0 %v744
      %v941 = vpop.f32.mrf.mxu0
      %v942 = vadd.f32 %v483, %v941
      %v943 = vpop.f32.mrf.mxu0
      %v944 = vadd.f32 %v483, %v943
      %945 = vmatmul.bf16.gmra.mxu0 %v745
      %v946 = vpop.f32.mrf.mxu0
      %v947 = vadd.f32 %v483, %v946
      %v948 = vpop.f32.mrf.mxu0
      %v949 = vadd.f32 %v483, %v948
      %950 = vmatmul.bf16.gmra.mxu0 %v746
      %v951 = vpop.f32.mrf.mxu0
      %v952 = vadd.f32 %v483, %v951
      %v953 = vpop.f32.mrf.mxu0
      %v954 = vadd.f32 %v483, %v953
      %955 = vmatmul.bf16.gmra.mxu0 %v747
      %v956 = vpop.f32.mrf.mxu0
      %v957 = vadd.f32 %v483, %v956
      %v958 = vpop.f32.mrf.mxu0
      %v959 = vadd.f32 %v483, %v958
      %960 = vmatmul.bf16.gmra.mxu0 %v748
      %v961 = vpop.f32.mrf.mxu0
      %v962 = vadd.f32 %v483, %v961
      %v963 = vpop.f32.mrf.mxu0
      %v964 = vadd.f32 %v483, %v963
      %965 = vmatmul.bf16.gmra.mxu0 %v749
      %v966 = vpop.f32.mrf.mxu0
      %v967 = vadd.f32 %v483, %v966
      %v968 = vpop.f32.mrf.mxu0
      %v969 = vadd.f32 %v483, %v968
      %970 = vmatmul.bf16.gmra.mxu0 %v750
      %v971 = vpop.f32.mrf.mxu0
      %v972 = vadd.f32 %v483, %v971
      %v973 = vpop.f32.mrf.mxu0
      %v974 = vadd.f32 %v483, %v973
      %975 = vmatmul.bf16.gmra.mxu0 %v751
      %v976 = vpop.f32.mrf.mxu0
      %v977 = vadd.f32 %v483, %v976
      %v978 = vpop.f32.mrf.mxu0
      %v979 = vadd.f32 %v483, %v978
      %980 = vmatmul.bf16.gmra.mxu0 %v752
      %v981 = vpop.f32.mrf.mxu0
      %v982 = vadd.f32 %v483, %v981
      %v983 = vpop.f32.mrf.mxu0
      %v984 = vadd.f32 %v483, %v983
      %985 = vmatmul.bf16.gmra.mxu0 %v753
      %v986 = vpop.f32.mrf.mxu0
      %v987 = vadd.f32 %v483, %v986
      %v988 = vpop.f32.mrf.mxu0
      %v989 = vadd.f32 %v483, %v988
      %990 = vmatmul.bf16.gmra.mxu0 %v754
      %v991 = vpop.f32.mrf.mxu0
      %v992 = vadd.f32 %v483, %v991
      %v993 = vpop.f32.mrf.mxu0
      %v994 = vadd.f32 %v483, %v993
      %995 = vmatmul.bf16.gmra.mxu0 %v755
      %v996 = vpop.f32.mrf.mxu0
      %v997 = vadd.f32 %v483, %v996
      %v998 = vpop.f32.mrf.mxu0
      %v999 = vadd.f32 %v483, %v998
      %1000 = vmatmul.bf16.gmra.mxu0 %v756
      %v1001 = vpop.f32.mrf.mxu0
      %v1002 = vadd.f32 %v483, %v1001
      %v1003 = vpop.f32.mrf.mxu0
      %v1004 = vadd.f32 %v483, %v1003
      %1005 = vmatmul.bf16.gmra.mxu0 %v757
      %v1006 = vpop.f32.mrf.mxu0
      %v1007 = vadd.f32 %v483, %v1006
      %v1008 = vpop.f32.mrf.mxu0
      %v1009 = vadd.f32 %v483, %v1008
      %1010 = vmatmul.bf16.gmra.mxu0 %v758
      %v1011 = vpop.f32.mrf.mxu0
      %v1012 = vadd.f32 %v483, %v1011
      %v1013 = vpop.f32.mrf.mxu0
      %v1014 = vadd.f32 %v483, %v1013
      %1015 = vmatmul.bf16.gmra.mxu0 %v759
      %v1016 = vpop.f32.mrf.mxu0
      %v1017 = vadd.f32 %v483, %v1016
      %v1018 = vpop.f32.mrf.mxu0
      %v1019 = vadd.f32 %v483, %v1018
      %1020 = vmatmul.bf16.gmra.mxu0 %v760
      %v1021 = vpop.f32.mrf.mxu0
      %v1022 = vadd.f32 %v483, %v1021
      %v1023 = vpop.f32.mrf.mxu0
      %v1024 = vadd.f32 %v483, %v1023
      %1025 = vmatmul.bf16.gmra.mxu0 %v761
      %v1026 = vpop.f32.mrf.mxu0
      %v1027 = vadd.f32 %v483, %v1026
      %v1028 = vpop.f32.mrf.mxu0
      %v1029 = vadd.f32 %v483, %v1028
      %1030 = vmatmul.bf16.gmra.mxu0 %v762
      %v1031 = vpop.f32.mrf.mxu0
      %v1032 = vadd.f32 %v483, %v1031
      %v1033 = vpop.f32.mrf.mxu0
      %v1034 = vadd.f32 %v483, %v1033
      %1035 = vmatmul.bf16.gmra.mxu0 %v763
      %v1036 = vpop.f32.mrf.mxu0
      %v1037 = vadd.f32 %v483, %v1036
      %v1038 = vpop.f32.mrf.mxu0
      %v1039 = vadd.f32 %v483, %v1038
      %1040 = vmatmul.bf16.gmra.mxu0 %v764
      %v1041 = vpop.f32.mrf.mxu0
      %v1042 = vadd.f32 %v483, %v1041
      %v1043 = vpop.f32.mrf.mxu0
      %v1044 = vadd.f32 %v483, %v1043
      %1045 = vmatmul.bf16.gmra.mxu0 %v765
      %v1046 = vpop.f32.mrf.mxu0
      %v1047 = vadd.f32 %v483, %v1046
      %v1048 = vpop.f32.mrf.mxu0
      %v1049 = vadd.f32 %v483, %v1048
      %1050 = vmatmul.bf16.gmra.mxu0 %v766
      %v1051 = vpop.f32.mrf.mxu0
      %v1052 = vadd.f32 %v483, %v1051
      %v1053 = vpop.f32.mrf.mxu0
      %v1054 = vadd.f32 %v483, %v1053
      %1055 = vmatmul.bf16.gmra.mxu0 %v767
      %v1056 = vpop.f32.mrf.mxu0
      %v1057 = vadd.f32 %v483, %v1056
      %v1058 = vpop.f32.mrf.mxu0
      %v1059 = vadd.f32 %v483, %v1058
      %1060 = vmatmul.bf16.gmra.mxu0 %v768
      %v1061 = vpop.f32.mrf.mxu0
      %v1062 = vadd.f32 %v483, %v1061
      %v1063 = vpop.f32.mrf.mxu0
      %v1064 = vadd.f32 %v483, %v1063
      %1065 = vmatmul.bf16.gmra.mxu0 %v769
      %v1066 = vpop.f32.mrf.mxu0
      %v1067 = vadd.f32 %v483, %v1066
      %v1068 = vpop.f32.mrf.mxu0
      %v1069 = vadd.f32 %v483, %v1068
      %1070 = vmatmul.bf16.gmra.mxu0 %v770
      %v1071 = vpop.f32.mrf.mxu0
      %v1072 = vadd.f32 %v483, %v1071
      %v1073 = vpop.f32.mrf.mxu0
      %v1074 = vadd.f32 %v483, %v1073
      %1075 = vmatmul.bf16.gmra.mxu0 %v771
      %v1076 = vpop.f32.mrf.mxu0
      %v1077 = vadd.f32 %v483, %v1076
      %v1078 = vpop.f32.mrf.mxu0
      %v1079 = vadd.f32 %v483, %v1078
      %1080 = vmatmul.bf16.gmra.mxu0 %v772
      %v1081 = vpop.f32.mrf.mxu0
      %v1082 = vadd.f32 %v483, %v1081
      %v1083 = vpop.f32.mrf.mxu0
      %v1084 = vadd.f32 %v483, %v1083
      %1085 = vmatmul.bf16.gmra.mxu0 %v773
      %v1086 = vpop.f32.mrf.mxu0
      %v1087 = vadd.f32 %v483, %v1086
      %v1088 = vpop.f32.mrf.mxu0
      %v1089 = vadd.f32 %v483, %v1088
      %1090 = vmatmul.bf16.gmra.mxu0 %v774
      %v1091 = vpop.f32.mrf.mxu0
      %v1092 = vadd.f32 %v483, %v1091
      %v1093 = vpop.f32.mrf.mxu0
      %v1094 = vadd.f32 %v483, %v1093
      %1095 = vmatmul.bf16.gmra.mxu0 %v775
      %v1096 = vpop.f32.mrf.mxu0
      %v1097 = vadd.f32 %v483, %v1096
      %v1098 = vpop.f32.mrf.mxu0
      %v1099 = vadd.f32 %v483, %v1098
      %1100 = vmatmul.bf16.gmra.mxu0 %v776
      %v1101 = vpop.f32.mrf.mxu0
      %v1102 = vadd.f32 %v483, %v1101
      %v1103 = vpop.f32.mrf.mxu0
      %v1104 = vadd.f32 %v483, %v1103
      %1105 = vmatmul.bf16.gmra.mxu0 %v777
      %v1106 = vpop.f32.mrf.mxu0
      %v1107 = vadd.f32 %v483, %v1106
      %v1108 = vpop.f32.mrf.mxu0
      %v1109 = vadd.f32 %v483, %v1108
      %1110 = vmatmul.bf16.gmra.mxu0 %v778
      %v1111 = vpop.f32.mrf.mxu0
      %v1112 = vadd.f32 %v483, %v1111
      %v1113 = vpop.f32.mrf.mxu0
      %v1114 = vadd.f32 %v483, %v1113
      %1115 = vmatmul.bf16.gmra.mxu0 %v779
      %v1116 = vpop.f32.mrf.mxu0
      %v1117 = vadd.f32 %v483, %v1116
      %v1118 = vpop.f32.mrf.mxu0
      %v1119 = vadd.f32 %v483, %v1118
      %1120 = vmatmul.bf16.gmra.mxu0 %v780
      %v1121 = vpop.f32.mrf.mxu0
      %v1122 = vadd.f32 %v483, %v1121
      %v1123 = vpop.f32.mrf.mxu0
      %v1124 = vadd.f32 %v483, %v1123
      %1125 = vmatmul.bf16.gmra.mxu0 %v781
      %v1126 = vpop.f32.mrf.mxu0
      %v1127 = vadd.f32 %v483, %v1126
      %v1128 = vpop.f32.mrf.mxu0
      %v1129 = vadd.f32 %v483, %v1128
      %1130 = vmatmul.bf16.gmra.mxu0 %v782
      %v1131 = vpop.f32.mrf.mxu0
      %v1132 = vadd.f32 %v483, %v1131
      %v1133 = vpop.f32.mrf.mxu0
      %v1134 = vadd.f32 %v483, %v1133
      %1135 = vmatmul.bf16.gmra.mxu0 %v783
      %v1136 = vpop.f32.mrf.mxu0
      %v1137 = vadd.f32 %v483, %v1136
      %v1138 = vpop.f32.mrf.mxu0
      %v1139 = vadd.f32 %v483, %v1138
      %1140 = vmatmul.bf16.gmra.mxu0 %v784
      %v1141 = vpop.f32.mrf.mxu0
      %v1142 = vadd.f32 %v483, %v1141
      %v1143 = vpop.f32.mrf.mxu0
      %v1144 = vadd.f32 %v483, %v1143
      %1145 = vmatmul.bf16.gmra.mxu0 %v785
      %v1146 = vpop.f32.mrf.mxu0
      %v1147 = vadd.f32 %v483, %v1146
      %v1148 = vpop.f32.mrf.mxu0
      %v1149 = vadd.f32 %v483, %v1148
      %1150 = vmatmul.bf16.gmra.mxu0 %v786
      %v1151 = vpop.f32.mrf.mxu0
      %v1152 = vadd.f32 %v483, %v1151
      %v1153 = vpop.f32.mrf.mxu0
      %v1154 = vadd.f32 %v483, %v1153
      %1155 = vmatmul.bf16.gmra.mxu0 %v787
      %v1156 = vpop.f32.mrf.mxu0
      %v1157 = vadd.f32 %v483, %v1156
      %v1158 = vpop.f32.mrf.mxu0
      %v1159 = vadd.f32 %v483, %v1158
      %1160 = vmatmul.bf16.gmra.mxu0 %v788
      %v1161 = vpop.f32.mrf.mxu0
      %v1162 = vadd.f32 %v483, %v1161
      %v1163 = vpop.f32.mrf.mxu0
      %v1164 = vadd.f32 %v483, %v1163
      %1165 = vmatmul.bf16.gmra.mxu0 %v789
      %v1166 = vpop.f32.mrf.mxu0
      %v1167 = vadd.f32 %v483, %v1166
      %v1168 = vpop.f32.mrf.mxu0
      %v1169 = vadd.f32 %v483, %v1168
      %1170 = vmatmul.bf16.gmra.mxu0 %v790
      %v1171 = vpop.f32.mrf.mxu0
      %v1172 = vadd.f32 %v483, %v1171
      %v1173 = vpop.f32.mrf.mxu0
      %v1174 = vadd.f32 %v483, %v1173
      %1175 = vmatmul.bf16.gmra.mxu0 %v791
      %v1176 = vpop.f32.mrf.mxu0
      %v1177 = vadd.f32 %v483, %v1176
      %v1178 = vpop.f32.mrf.mxu0
      %v1179 = vadd.f32 %v483, %v1178
      %1180 = vmatmul.bf16.gmra.mxu0 %v792
      %v1181 = vpop.f32.mrf.mxu0
      %v1182 = vadd.f32 %v483, %v1181
      %v1183 = vpop.f32.mrf.mxu0
      %v1184 = vadd.f32 %v483, %v1183
      %1185 = vmatmul.bf16.gmra.mxu0 %v793
      %v1186 = vpop.f32.mrf.mxu0
      %v1187 = vadd.f32 %v483, %v1186
      %v1188 = vpop.f32.mrf.mxu0
      %v1189 = vadd.f32 %v483, %v1188
      %1190 = vmatmul.bf16.gmra.mxu0 %v794
      %v1191 = vpop.f32.mrf.mxu0
      %v1192 = vadd.f32 %v483, %v1191
      %v1193 = vpop.f32.mrf.mxu0
      %v1194 = vadd.f32 %v483, %v1193
      %1195 = vmatmul.bf16.gmra.mxu0 %v795
      %v1196 = vpop.f32.mrf.mxu0
      %v1197 = vadd.f32 %v483, %v1196
      %v1198 = vpop.f32.mrf.mxu0
      %v1199 = vadd.f32 %v483, %v1198
      %1200 = vmatmul.bf16.gmra.mxu0 %v796
      %v1201 = vpop.f32.mrf.mxu0
      %v1202 = vadd.f32 %v483, %v1201
      %v1203 = vpop.f32.mrf.mxu0
      %v1204 = vadd.f32 %v483, %v1203
      %1205 = vmatmul.bf16.gmra.mxu0 %v797
      %v1206 = vpop.f32.mrf.mxu0
      %v1207 = vadd.f32 %v483, %v1206
      %v1208 = vpop.f32.mrf.mxu0
      %v1209 = vadd.f32 %v483, %v1208
      %1210 = vmatmul.bf16.gmra.mxu0 %v798
      %v1211 = vpop.f32.mrf.mxu0
      %v1212 = vadd.f32 %v483, %v1211
      %v1213 = vpop.f32.mrf.mxu0
      %v1214 = vadd.f32 %v483, %v1213
      %1215 = vmatmul.bf16.gmra.mxu0 %v799
      %v1216 = vpop.f32.mrf.mxu0
      %v1217 = vadd.f32 %v483, %v1216
      %v1218 = vpop.f32.mrf.mxu0
      %v1219 = vadd.f32 %v483, %v1218
      %1220 = vmatmul.bf16.gmra.mxu0 %v800
      %v1221 = vpop.f32.mrf.mxu0
      %v1222 = vadd.f32 %v483, %v1221
      %v1223 = vpop.f32.mrf.mxu0
      %v1224 = vadd.f32 %v483, %v1223
      %1225 = vmatmul.bf16.gmra.mxu0 %v801
      %v1226 = vpop.f32.mrf.mxu0
      %v1227 = vadd.f32 %v483, %v1226
      %v1228 = vpop.f32.mrf.mxu0
      %v1229 = vadd.f32 %v483, %v1228
      %1230 = vmatmul.bf16.gmra.mxu0 %v802
      %v1231 = vpop.f32.mrf.mxu0
      %v1232 = vadd.f32 %v483, %v1231
      %v1233 = vpop.f32.mrf.mxu0
      %v1234 = vadd.f32 %v483, %v1233
      %1235 = vmatmul.bf16.gmra.mxu0 %v803
      %v1236 = vpop.f32.mrf.mxu0
      %v1237 = vadd.f32 %v483, %v1236
      %v1238 = vpop.f32.mrf.mxu0
      %v1239 = vadd.f32 %v483, %v1238
      %1240 = vmatmul.bf16.gmra.mxu0 %v804
      %v1241 = vpop.f32.mrf.mxu0
      %v1242 = vadd.f32 %v483, %v1241
      %v1243 = vpop.f32.mrf.mxu0
      %v1244 = vadd.f32 %v483, %v1243
      %1245 = vdwg.mxu0
      %vm1246 = vcmp.gt.f32.partialorder %v927, 0.0
      %vm1247 = vcmp.gt.f32.partialorder %v929, 0.0
      %vm1248 = vcmp.gt.f32.partialorder %v932, 0.0
      %vm1249 = vcmp.gt.f32.partialorder %v934, 0.0
      %vm1250 = vcmp.gt.f32.partialorder %v937, 0.0
      %vm1251 = vcmp.gt.f32.partialorder %v939, 0.0
      %vm1252 = vcmp.gt.f32.partialorder %v942, 0.0
      %vm1253 = vcmp.gt.f32.partialorder %v944, 0.0
      %vm1254 = vcmp.gt.f32.partialorder %v947, 0.0
      %vm1255 = vcmp.gt.f32.partialorder %v949, 0.0
      %vm1256 = vcmp.gt.f32.partialorder %v952, 0.0
      %vm1257 = vcmp.gt.f32.partialorder %v954, 0.0
      %vm1258 = vcmp.gt.f32.partialorder %v957, 0.0
      %vm1259 = vcmp.gt.f32.partialorder %v959, 0.0
      %vm1260 = vcmp.gt.f32.partialorder %v962, 0.0
      %vm1261 = vcmp.gt.f32.partialorder %v964, 0.0
      %vm1262 = vcmp.gt.f32.partialorder %v967, 0.0
      %vm1263 = vcmp.gt.f32.partialorder %v969, 0.0
      %vm1264 = vcmp.gt.f32.partialorder %v972, 0.0
      %vm1265 = vcmp.gt.f32.partialorder %v974, 0.0
      %vm1266 = vcmp.gt.f32.partialorder %v977, 0.0
      %vm1267 = vcmp.gt.f32.partialorder %v979, 0.0
      %vm1268 = vcmp.gt.f32.partialorder %v982, 0.0
      %vm1269 = vcmp.gt.f32.partialorder %v984, 0.0
      %vm1270 = vcmp.gt.f32.partialorder %v987, 0.0
      %vm1271 = vcmp.gt.f32.partialorder %v989, 0.0
      %vm1272 = vcmp.gt.f32.partialorder %v992, 0.0
      %vm1273 = vcmp.gt.f32.partialorder %v994, 0.0
      %vm1274 = vcmp.gt.f32.partialorder %v997, 0.0
      %vm1275 = vcmp.gt.f32.partialorder %v999, 0.0
      %vm1276 = vcmp.gt.f32.partialorder %v1002, 0.0
      %vm1277 = vcmp.gt.f32.partialorder %v1004, 0.0
      %vm1278 = vcmp.gt.f32.partialorder %v1007, 0.0
      %vm1279 = vcmp.gt.f32.partialorder %v1009, 0.0
      %vm1280 = vcmp.gt.f32.partialorder %v1012, 0.0
      %vm1281 = vcmp.gt.f32.partialorder %v1014, 0.0
      %vm1282 = vcmp.gt.f32.partialorder %v1017, 0.0
      %vm1283 = vcmp.gt.f32.partialorder %v1019, 0.0
      %vm1284 = vcmp.gt.f32.partialorder %v1022, 0.0
      %vm1285 = vcmp.gt.f32.partialorder %v1024, 0.0
      %vm1286 = vcmp.gt.f32.partialorder %v1027, 0.0
      %vm1287 = vcmp.gt.f32.partialorder %v1029, 0.0
      %vm1288 = vcmp.gt.f32.partialorder %v1032, 0.0
      %vm1289 = vcmp.gt.f32.partialorder %v1034, 0.0
      %vm1290 = vcmp.gt.f32.partialorder %v1037, 0.0
      %vm1291 = vcmp.gt.f32.partialorder %v1039, 0.0
      %vm1292 = vcmp.gt.f32.partialorder %v1042, 0.0
      %vm1293 = vcmp.gt.f32.partialorder %v1044, 0.0
      %vm1294 = vcmp.gt.f32.partialorder %v1047, 0.0
      %vm1295 = vcmp.gt.f32.partialorder %v1049, 0.0
      %vm1296 = vcmp.gt.f32.partialorder %v1052, 0.0
      %vm1297 = vcmp.gt.f32.partialorder %v1054, 0.0
      %vm1298 = vcmp.gt.f32.partialorder %v1057, 0.0
      %vm1299 = vcmp.gt.f32.partialorder %v1059, 0.0
      %vm1300 = vcmp.gt.f32.partialorder %v1062, 0.0
      %vm1301 = vcmp.gt.f32.partialorder %v1064, 0.0
      %vm1302 = vcmp.gt.f32.partialorder %v1067, 0.0
      %vm1303 = vcmp.gt.f32.partialorder %v1069, 0.0
      %vm1304 = vcmp.gt.f32.partialorder %v1072, 0.0
      %vm1305 = vcmp.gt.f32.partialorder %v1074, 0.0
      %vm1306 = vcmp.gt.f32.partialorder %v1077, 0.0
      %vm1307 = vcmp.gt.f32.partialorder %v1079, 0.0
      %vm1308 = vcmp.gt.f32.partialorder %v1082, 0.0
      %vm1309 = vcmp.gt.f32.partialorder %v1084, 0.0
      %vm1310 = vcmp.gt.f32.partialorder %v1087, 0.0
      %vm1311 = vcmp.gt.f32.partialorder %v1089, 0.0
      %vm1312 = vcmp.gt.f32.partialorder %v1092, 0.0
      %vm1313 = vcmp.gt.f32.partialorder %v1094, 0.0
      %vm1314 = vcmp.gt.f32.partialorder %v1097, 0.0
      %vm1315 = vcmp.gt.f32.partialorder %v1099, 0.0
      %vm1316 = vcmp.gt.f32.partialorder %v1102, 0.0
      %vm1317 = vcmp.gt.f32.partialorder %v1104, 0.0
      %vm1318 = vcmp.gt.f32.partialorder %v1107, 0.0
      %vm1319 = vcmp.gt.f32.partialorder %v1109, 0.0
      %vm1320 = vcmp.gt.f32.partialorder %v1112, 0.0
      %vm1321 = vcmp.gt.f32.partialorder %v1114, 0.0
      %vm1322 = vcmp.gt.f32.partialorder %v1117, 0.0
      %vm1323 = vcmp.gt.f32.partialorder %v1119, 0.0
      %vm1324 = vcmp.gt.f32.partialorder %v1122, 0.0
      %vm1325 = vcmp.gt.f32.partialorder %v1124, 0.0
      %vm1326 = vcmp.gt.f32.partialorder %v1127, 0.0
      %vm1327 = vcmp.gt.f32.partialorder %v1129, 0.0
      %vm1328 = vcmp.gt.f32.partialorder %v1132, 0.0
      %vm1329 = vcmp.gt.f32.partialorder %v1134, 0.0
      %vm1330 = vcmp.gt.f32.partialorder %v1137, 0.0
      %vm1331 = vcmp.gt.f32.partialorder %v1139, 0.0
      %vm1332 = vcmp.gt.f32.partialorder %v1142, 0.0
      %vm1333 = vcmp.gt.f32.partialorder %v1144, 0.0
      %vm1334 = vcmp.gt.f32.partialorder %v1147, 0.0
      %vm1335 = vcmp.gt.f32.partialorder %v1149, 0.0
      %vm1336 = vcmp.gt.f32.partialorder %v1152, 0.0
      %vm1337 = vcmp.gt.f32.partialorder %v1154, 0.0
      %vm1338 = vcmp.gt.f32.partialorder %v1157, 0.0
      %vm1339 = vcmp.gt.f32.partialorder %v1159, 0.0
      %vm1340 = vcmp.gt.f32.partialorder %v1162, 0.0
      %vm1341 = vcmp.gt.f32.partialorder %v1164, 0.0
      %vm1342 = vcmp.gt.f32.partialorder %v1167, 0.0
      %vm1343 = vcmp.gt.f32.partialorder %v1169, 0.0
      %vm1344 = vcmp.gt.f32.partialorder %v1172, 0.0
      %vm1345 = vcmp.gt.f32.partialorder %v1174, 0.0
      %vm1346 = vcmp.gt.f32.partialorder %v1177, 0.0
      %vm1347 = vcmp.gt.f32.partialorder %v1179, 0.0
      %vm1348 = vcmp.gt.f32.partialorder %v1182, 0.0
      %vm1349 = vcmp.gt.f32.partialorder %v1184, 0.0
      %vm1350 = vcmp.gt.f32.partialorder %v1187, 0.0
      %vm1351 = vcmp.gt.f32.partialorder %v1189, 0.0
      %vm1352 = vcmp.gt.f32.partialorder %v1192, 0.0
      %vm1353 = vcmp.gt.f32.partialorder %v1194, 0.0
      %vm1354 = vcmp.gt.f32.partialorder %v1197, 0.0
      %vm1355 = vcmp.gt.f32.partialorder %v1199, 0.0
      %vm1356 = vcmp.gt.f32.partialorder %v1202, 0.0
      %vm1357 = vcmp.gt.f32.partialorder %v1204, 0.0
      %vm1358 = vcmp.gt.f32.partialorder %v1207, 0.0
      %vm1359 = vcmp.gt.f32.partialorder %v1209, 0.0
      %vm1360 = vcmp.gt.f32.partialorder %v1212, 0.0
      %vm1361 = vcmp.gt.f32.partialorder %v1214, 0.0
      %vm1362 = vcmp.gt.f32.partialorder %v1217, 0.0
      %vm1363 = vcmp.gt.f32.partialorder %v1219, 0.0
      %vm1364 = vcmp.gt.f32.partialorder %v1222, 0.0
      %vm1365 = vcmp.gt.f32.partialorder %v1224, 0.0
      %vm1366 = vcmp.gt.f32.partialorder %v1227, 0.0
      %vm1367 = vcmp.gt.f32.partialorder %v1229, 0.0
      %vm1368 = vcmp.gt.f32.partialorder %v1232, 0.0
      %vm1369 = vcmp.gt.f32.partialorder %v1234, 0.0
      %vm1370 = vcmp.gt.f32.partialorder %v1237, 0.0
      %vm1371 = vcmp.gt.f32.partialorder %v1239, 0.0
      %vm1372 = vcmp.gt.f32.partialorder %v1242, 0.0
      %vm1373 = vcmp.gt.f32.partialorder %v1244, 0.0
      %v1374 = vmin.f32 %v927, 0.0
      %v1375 = vmin.f32 %v929, 0.0
      %v1376 = vmin.f32 %v932, 0.0
      %v1377 = vmin.f32 %v934, 0.0
      %v1378 = vmin.f32 %v937, 0.0
      %v1379 = vmin.f32 %v939, 0.0
      %v1380 = vmin.f32 %v942, 0.0
      %v1381 = vmin.f32 %v944, 0.0
      %v1382 = vmin.f32 %v947, 0.0
      %v1383 = vmin.f32 %v949, 0.0
      %v1384 = vmin.f32 %v952, 0.0
      %v1385 = vmin.f32 %v954, 0.0
      %v1386 = vmin.f32 %v957, 0.0
      %v1387 = vmin.f32 %v959, 0.0
      %v1388 = vmin.f32 %v962, 0.0
      %v1389 = vmin.f32 %v964, 0.0
      %v1390 = vmin.f32 %v967, 0.0
      %v1391 = vmin.f32 %v969, 0.0
      %v1392 = vmin.f32 %v972, 0.0
      %v1393 = vmin.f32 %v974, 0.0
      %v1394 = vmin.f32 %v977, 0.0
      %v1395 = vmin.f32 %v979, 0.0
      %v1396 = vmin.f32 %v982, 0.0
      %v1397 = vmin.f32 %v984, 0.0
      %v1398 = vmin.f32 %v987, 0.0
      %v1399 = vmin.f32 %v989, 0.0
      %v1400 = vmin.f32 %v992, 0.0
      %v1401 = vmin.f32 %v994, 0.0
      %v1402 = vmin.f32 %v997, 0.0
      %v1403 = vmin.f32 %v999, 0.0
      %v1404 = vmin.f32 %v1002, 0.0
      %v1405 = vmin.f32 %v1004, 0.0
      %v1406 = vmin.f32 %v1007, 0.0
      %v1407 = vmin.f32 %v1009, 0.0
      %v1408 = vmin.f32 %v1012, 0.0
      %v1409 = vmin.f32 %v1014, 0.0
      %v1410 = vmin.f32 %v1017, 0.0
      %v1411 = vmin.f32 %v1019, 0.0
      %v1412 = vmin.f32 %v1022, 0.0
      %v1413 = vmin.f32 %v1024, 0.0
      %v1414 = vmin.f32 %v1027, 0.0
      %v1415 = vmin.f32 %v1029, 0.0
      %v1416 = vmin.f32 %v1032, 0.0
      %v1417 = vmin.f32 %v1034, 0.0
      %v1418 = vmin.f32 %v1037, 0.0
      %v1419 = vmin.f32 %v1039, 0.0
      %v1420 = vmin.f32 %v1042, 0.0
      %v1421 = vmin.f32 %v1044, 0.0
      %v1422 = vmin.f32 %v1047, 0.0
      %v1423 = vmin.f32 %v1049, 0.0
      %v1424 = vmin.f32 %v1052, 0.0
      %v1425 = vmin.f32 %v1054, 0.0
      %v1426 = vmin.f32 %v1057, 0.0
      %v1427 = vmin.f32 %v1059, 0.0
      %v1428 = vmin.f32 %v1062, 0.0
      %v1429 = vmin.f32 %v1064, 0.0
      %v1430 = vmin.f32 %v1067, 0.0
      %v1431 = vmin.f32 %v1069, 0.0
      %v1432 = vmin.f32 %v1072, 0.0
      %v1433 = vmin.f32 %v1074, 0.0
      %v1434 = vmin.f32 %v1077, 0.0
      %v1435 = vmin.f32 %v1079, 0.0
      %v1436 = vmin.f32 %v1082, 0.0
      %v1437 = vmin.f32 %v1084, 0.0
      %v1438 = vmin.f32 %v1087, 0.0
      %v1439 = vmin.f32 %v1089, 0.0
      %v1440 = vmin.f32 %v1092, 0.0
      %v1441 = vmin.f32 %v1094, 0.0
      %v1442 = vmin.f32 %v1097, 0.0
      %v1443 = vmin.f32 %v1099, 0.0
      %v1444 = vmin.f32 %v1102, 0.0
      %v1445 = vmin.f32 %v1104, 0.0
      %v1446 = vmin.f32 %v1107, 0.0
      %v1447 = vmin.f32 %v1109, 0.0
      %v1448 = vmin.f32 %v1112, 0.0
      %v1449 = vmin.f32 %v1114, 0.0
      %v1450 = vmin.f32 %v1117, 0.0
      %v1451 = vmin.f32 %v1119, 0.0
      %v1452 = vmin.f32 %v1122, 0.0
      %v1453 = vmin.f32 %v1124, 0.0
      %v1454 = vmin.f32 %v1127, 0.0
      %v1455 = vmin.f32 %v1129, 0.0
      %v1456 = vmin.f32 %v1132, 0.0
      %v1457 = vmin.f32 %v1134, 0.0
      %v1458 = vmin.f32 %v1137, 0.0
      %v1459 = vmin.f32 %v1139, 0.0
      %v1460 = vmin.f32 %v1142, 0.0
      %v1461 = vmin.f32 %v1144, 0.0
      %v1462 = vmin.f32 %v1147, 0.0
      %v1463 = vmin.f32 %v1149, 0.0
      %v1464 = vmin.f32 %v1152, 0.0
      %v1465 = vmin.f32 %v1154, 0.0
      %v1466 = vmin.f32 %v1157, 0.0
      %v1467 = vmin.f32 %v1159, 0.0
      %v1468 = vmin.f32 %v1162, 0.0
      %v1469 = vmin.f32 %v1164, 0.0
      %v1470 = vmin.f32 %v1167, 0.0
      %v1471 = vmin.f32 %v1169, 0.0
      %v1472 = vmin.f32 %v1172, 0.0
      %v1473 = vmin.f32 %v1174, 0.0
      %v1474 = vmin.f32 %v1177, 0.0
      %v1475 = vmin.f32 %v1179, 0.0
      %v1476 = vmin.f32 %v1182, 0.0
      %v1477 = vmin.f32 %v1184, 0.0
      %v1478 = vmin.f32 %v1187, 0.0
      %v1479 = vmin.f32 %v1189, 0.0
      %v1480 = vmin.f32 %v1192, 0.0
      %v1481 = vmin.f32 %v1194, 0.0
      %v1482 = vmin.f32 %v1197, 0.0
      %v1483 = vmin.f32 %v1199, 0.0
      %v1484 = vmin.f32 %v1202, 0.0
      %v1485 = vmin.f32 %v1204, 0.0
      %v1486 = vmin.f32 %v1207, 0.0
      %v1487 = vmin.f32 %v1209, 0.0
      %v1488 = vmin.f32 %v1212, 0.0
      %v1489 = vmin.f32 %v1214, 0.0
      %v1490 = vmin.f32 %v1217, 0.0
      %v1491 = vmin.f32 %v1219, 0.0
      %v1492 = vmin.f32 %v1222, 0.0
      %v1493 = vmin.f32 %v1224, 0.0
      %v1494 = vmin.f32 %v1227, 0.0
      %v1495 = vmin.f32 %v1229, 0.0
      %v1496 = vmin.f32 %v1232, 0.0
      %v1497 = vmin.f32 %v1234, 0.0
      %v1498 = vmin.f32 %v1237, 0.0
      %v1499 = vmin.f32 %v1239, 0.0
      %v1500 = vmin.f32 %v1242, 0.0
      %v1501 = vmin.f32 %v1244, 0.0
      %v1502 = vmul.f32 %v1374, 1.442695
      %v1503 = vpow.pop %v1502
      %v1504 = vmul.f32 %v1375, 1.442695
      %v1505 = vpow.pop %v1504
      %v1506 = vmul.f32 %v1376, 1.442695
      %v1507 = vpow.pop %v1506
      %v1508 = vmul.f32 %v1377, 1.442695
      %v1509 = vpow.pop %v1508
      %v1510 = vmul.f32 %v1378, 1.442695
      %v1511 = vpow.pop %v1510
      %v1512 = vmul.f32 %v1379, 1.442695
      %v1513 = vpow.pop %v1512
      %v1514 = vmul.f32 %v1380, 1.442695
      %v1515 = vpow.pop %v1514
      %v1516 = vmul.f32 %v1381, 1.442695
      %v1517 = vpow.pop %v1516
      %v1518 = vmul.f32 %v1382, 1.442695
      %v1519 = vpow.pop %v1518
      %v1520 = vmul.f32 %v1383, 1.442695
      %v1521 = vpow.pop %v1520
      %v1522 = vmul.f32 %v1384, 1.442695
      %v1523 = vpow.pop %v1522
      %v1524 = vmul.f32 %v1385, 1.442695
      %v1525 = vpow.pop %v1524
      %v1526 = vmul.f32 %v1386, 1.442695
      %v1527 = vpow.pop %v1526
      %v1528 = vmul.f32 %v1387, 1.442695
      %v1529 = vpow.pop %v1528
      %v1530 = vmul.f32 %v1388, 1.442695
      %v1531 = vpow.pop %v1530
      %v1532 = vmul.f32 %v1389, 1.442695
      %v1533 = vpow.pop %v1532
      %v1534 = vmul.f32 %v1390, 1.442695
      %v1535 = vpow.pop %v1534
      %v1536 = vmul.f32 %v1391, 1.442695
      %v1537 = vpow.pop %v1536
      %v1538 = vmul.f32 %v1392, 1.442695
      %v1539 = vpow.pop %v1538
      %v1540 = vmul.f32 %v1393, 1.442695
      %v1541 = vpow.pop %v1540
      %v1542 = vmul.f32 %v1394, 1.442695
      %v1543 = vpow.pop %v1542
      %v1544 = vmul.f32 %v1395, 1.442695
      %v1545 = vpow.pop %v1544
      %v1546 = vmul.f32 %v1396, 1.442695
      %v1547 = vpow.pop %v1546
      %v1548 = vmul.f32 %v1397, 1.442695
      %v1549 = vpow.pop %v1548
      %v1550 = vmul.f32 %v1398, 1.442695
      %v1551 = vpow.pop %v1550
      %v1552 = vmul.f32 %v1399, 1.442695
      %v1553 = vpow.pop %v1552
      %v1554 = vmul.f32 %v1400, 1.442695
      %v1555 = vpow.pop %v1554
      %v1556 = vmul.f32 %v1401, 1.442695
      %v1557 = vpow.pop %v1556
      %v1558 = vmul.f32 %v1402, 1.442695
      %v1559 = vpow.pop %v1558
      %v1560 = vmul.f32 %v1403, 1.442695
      %v1561 = vpow.pop %v1560
      %v1562 = vmul.f32 %v1404, 1.442695
      %v1563 = vpow.pop %v1562
      %v1564 = vmul.f32 %v1405, 1.442695
      %v1565 = vpow.pop %v1564
      %v1566 = vmul.f32 %v1406, 1.442695
      %v1567 = vpow.pop %v1566
      %v1568 = vmul.f32 %v1407, 1.442695
      %v1569 = vpow.pop %v1568
      %v1570 = vmul.f32 %v1408, 1.442695
      %v1571 = vpow.pop %v1570
      %v1572 = vmul.f32 %v1409, 1.442695
      %v1573 = vpow.pop %v1572
      %v1574 = vmul.f32 %v1410, 1.442695
      %v1575 = vpow.pop %v1574
      %v1576 = vmul.f32 %v1411, 1.442695
      %v1577 = vpow.pop %v1576
      %v1578 = vmul.f32 %v1412, 1.442695
      %v1579 = vpow.pop %v1578
      %v1580 = vmul.f32 %v1413, 1.442695
      %v1581 = vpow.pop %v1580
      %v1582 = vmul.f32 %v1414, 1.442695
      %v1583 = vpow.pop %v1582
      %v1584 = vmul.f32 %v1415, 1.442695
      %v1585 = vpow.pop %v1584
      %v1586 = vmul.f32 %v1416, 1.442695
      %v1587 = vpow.pop %v1586
      %v1588 = vmul.f32 %v1417, 1.442695
      %v1589 = vpow.pop %v1588
      %v1590 = vmul.f32 %v1418, 1.442695
      %v1591 = vpow.pop %v1590
      %v1592 = vmul.f32 %v1419, 1.442695
      %v1593 = vpow.pop %v1592
      %v1594 = vmul.f32 %v1420, 1.442695
      %v1595 = vpow.pop %v1594
      %v1596 = vmul.f32 %v1421, 1.442695
      %v1597 = vpow.pop %v1596
      %v1598 = vmul.f32 %v1422, 1.442695
      %v1599 = vpow.pop %v1598
      %v1600 = vmul.f32 %v1423, 1.442695
      %v1601 = vpow.pop %v1600
      %v1602 = vmul.f32 %v1424, 1.442695
      %v1603 = vpow.pop %v1602
      %v1604 = vmul.f32 %v1425, 1.442695
      %v1605 = vpow.pop %v1604
      %v1606 = vmul.f32 %v1426, 1.442695
      %v1607 = vpow.pop %v1606
      %v1608 = vmul.f32 %v1427, 1.442695
      %v1609 = vpow.pop %v1608
      %v1610 = vmul.f32 %v1428, 1.442695
      %v1611 = vpow.pop %v1610
      %v1612 = vmul.f32 %v1429, 1.442695
      %v1613 = vpow.pop %v1612
      %v1614 = vmul.f32 %v1430, 1.442695
      %v1615 = vpow.pop %v1614
      %v1616 = vmul.f32 %v1431, 1.442695
      %v1617 = vpow.pop %v1616
      %v1618 = vmul.f32 %v1432, 1.442695
      %v1619 = vpow.pop %v1618
      %v1620 = vmul.f32 %v1433, 1.442695
      %v1621 = vpow.pop %v1620
      %v1622 = vmul.f32 %v1434, 1.442695
      %v1623 = vpow.pop %v1622
      %v1624 = vmul.f32 %v1435, 1.442695
      %v1625 = vpow.pop %v1624
      %v1626 = vmul.f32 %v1436, 1.442695
      %v1627 = vpow.pop %v1626
      %v1628 = vmul.f32 %v1437, 1.442695
      %v1629 = vpow.pop %v1628
      %v1630 = vmul.f32 %v1438, 1.442695
      %v1631 = vpow.pop %v1630
      %v1632 = vmul.f32 %v1439, 1.442695
      %v1633 = vpow.pop %v1632
      %v1634 = vmul.f32 %v1440, 1.442695
      %v1635 = vpow.pop %v1634
      %v1636 = vmul.f32 %v1441, 1.442695
      %v1637 = vpow.pop %v1636
      %v1638 = vmul.f32 %v1442, 1.442695
      %v1639 = vpow.pop %v1638
      %v1640 = vmul.f32 %v1443, 1.442695
      %v1641 = vpow.pop %v1640
      %v1642 = vmul.f32 %v1444, 1.442695
      %v1643 = vpow.pop %v1642
      %v1644 = vmul.f32 %v1445, 1.442695
      %v1645 = vpow.pop %v1644
      %v1646 = vmul.f32 %v1446, 1.442695
      %v1647 = vpow.pop %v1646
      %v1648 = vmul.f32 %v1447, 1.442695
      %v1649 = vpow.pop %v1648
      %v1650 = vmul.f32 %v1448, 1.442695
      %v1651 = vpow.pop %v1650
      %v1652 = vmul.f32 %v1449, 1.442695
      %v1653 = vpow.pop %v1652
      %v1654 = vmul.f32 %v1450, 1.442695
      %v1655 = vpow.pop %v1654
      %v1656 = vmul.f32 %v1451, 1.442695
      %v1657 = vpow.pop %v1656
      %v1658 = vmul.f32 %v1452, 1.442695
      %v1659 = vpow.pop %v1658
      %v1660 = vmul.f32 %v1453, 1.442695
      %v1661 = vpow.pop %v1660
      %v1662 = vmul.f32 %v1454, 1.442695
      %v1663 = vpow.pop %v1662
      %v1664 = vmul.f32 %v1455, 1.442695
      %v1665 = vpow.pop %v1664
      %v1666 = vmul.f32 %v1456, 1.442695
      %v1667 = vpow.pop %v1666
      %v1668 = vmul.f32 %v1457, 1.442695
      %v1669 = vpow.pop %v1668
      %v1670 = vmul.f32 %v1458, 1.442695
      %v1671 = vpow.pop %v1670
      %v1672 = vmul.f32 %v1459, 1.442695
      %v1673 = vpow.pop %v1672
      %v1674 = vmul.f32 %v1460, 1.442695
      %v1675 = vpow.pop %v1674
      %v1676 = vmul.f32 %v1461, 1.442695
      %v1677 = vpow.pop %v1676
      %v1678 = vmul.f32 %v1462, 1.442695
      %v1679 = vpow.pop %v1678
      %v1680 = vmul.f32 %v1463, 1.442695
      %v1681 = vpow.pop %v1680
      %v1682 = vmul.f32 %v1464, 1.442695
      %v1683 = vpow.pop %v1682
      %v1684 = vmul.f32 %v1465, 1.442695
      %v1685 = vpow.pop %v1684
      %v1686 = vmul.f32 %v1466, 1.442695
      %v1687 = vpow.pop %v1686
      %v1688 = vmul.f32 %v1467, 1.442695
      %v1689 = vpow.pop %v1688
      %v1690 = vmul.f32 %v1468, 1.442695
      %v1691 = vpow.pop %v1690
      %v1692 = vmul.f32 %v1469, 1.442695
      %v1693 = vpow.pop %v1692
      %v1694 = vmul.f32 %v1470, 1.442695
      %v1695 = vpow.pop %v1694
      %v1696 = vmul.f32 %v1471, 1.442695
      %v1697 = vpow.pop %v1696
      %v1698 = vmul.f32 %v1472, 1.442695
      %v1699 = vpow.pop %v1698
      %v1700 = vmul.f32 %v1473, 1.442695
      %v1701 = vpow.pop %v1700
      %v1702 = vmul.f32 %v1474, 1.442695
      %v1703 = vpow.pop %v1702
      %v1704 = vmul.f32 %v1475, 1.442695
      %v1705 = vpow.pop %v1704
      %v1706 = vmul.f32 %v1476, 1.442695
      %v1707 = vpow.pop %v1706
      %v1708 = vmul.f32 %v1477, 1.442695
      %v1709 = vpow.pop %v1708
      %v1710 = vmul.f32 %v1478, 1.442695
      %v1711 = vpow.pop %v1710
      %v1712 = vmul.f32 %v1479, 1.442695
      %v1713 = vpow.pop %v1712
      %v1714 = vmul.f32 %v1480, 1.442695
      %v1715 = vpow.pop %v1714
      %v1716 = vmul.f32 %v1481, 1.442695
      %v1717 = vpow.pop %v1716
      %v1718 = vmul.f32 %v1482, 1.442695
      %v1719 = vpow.pop %v1718
      %v1720 = vmul.f32 %v1483, 1.442695
      %v1721 = vpow.pop %v1720
      %v1722 = vmul.f32 %v1484, 1.442695
      %v1723 = vpow.pop %v1722
      %v1724 = vmul.f32 %v1485, 1.442695
      %v1725 = vpow.pop %v1724
      %v1726 = vmul.f32 %v1486, 1.442695
      %v1727 = vpow.pop %v1726
      %v1728 = vmul.f32 %v1487, 1.442695
      %v1729 = vpow.pop %v1728
      %v1730 = vmul.f32 %v1488, 1.442695
      %v1731 = vpow.pop %v1730
      %v1732 = vmul.f32 %v1489, 1.442695
      %v1733 = vpow.pop %v1732
      %v1734 = vmul.f32 %v1490, 1.442695
      %v1735 = vpow.pop %v1734
      %v1736 = vmul.f32 %v1491, 1.442695
      %v1737 = vpow.pop %v1736
      %v1738 = vmul.f32 %v1492, 1.442695
      %v1739 = vpow.pop %v1738
      %v1740 = vmul.f32 %v1493, 1.442695
      %v1741 = vpow.pop %v1740
      %v1742 = vmul.f32 %v1494, 1.442695
      %v1743 = vpow.pop %v1742
      %v1744 = vmul.f32 %v1495, 1.442695
      %v1745 = vpow.pop %v1744
      %v1746 = vmul.f32 %v1496, 1.442695
      %v1747 = vpow.pop %v1746
      %v1748 = vmul.f32 %v1497, 1.442695
      %v1749 = vpow.pop %v1748
      %v1750 = vmul.f32 %v1498, 1.442695
      %v1751 = vpow.pop %v1750
      %v1752 = vmul.f32 %v1499, 1.442695
      %v1753 = vpow.pop %v1752
      %v1754 = vmul.f32 %v1500, 1.442695
      %v1755 = vpow.pop %v1754
      %v1756 = vmul.f32 %v1501, 1.442695
      %v1757 = vpow.pop %v1756
      %v1758 = vsub.f32 %v1503, 1.0
      %v1759 = vsub.f32 %v1505, 1.0
      %v1760 = vsub.f32 %v1507, 1.0
      %v1761 = vsub.f32 %v1509, 1.0
      %v1762 = vsub.f32 %v1511, 1.0
      %v1763 = vsub.f32 %v1513, 1.0
      %v1764 = vsub.f32 %v1515, 1.0
      %v1765 = vsub.f32 %v1517, 1.0
      %v1766 = vsub.f32 %v1519, 1.0
      %v1767 = vsub.f32 %v1521, 1.0
      %v1768 = vsub.f32 %v1523, 1.0
      %v1769 = vsub.f32 %v1525, 1.0
      %v1770 = vsub.f32 %v1527, 1.0
      %v1771 = vsub.f32 %v1529, 1.0
      %v1772 = vsub.f32 %v1531, 1.0
      %v1773 = vsub.f32 %v1533, 1.0
      %v1774 = vsub.f32 %v1535, 1.0
      %v1775 = vsub.f32 %v1537, 1.0
      %v1776 = vsub.f32 %v1539, 1.0
      %v1777 = vsub.f32 %v1541, 1.0
      %v1778 = vsub.f32 %v1543, 1.0
      %v1779 = vsub.f32 %v1545, 1.0
      %v1780 = vsub.f32 %v1547, 1.0
      %v1781 = vsub.f32 %v1549, 1.0
      %v1782 = vsub.f32 %v1551, 1.0
      %v1783 = vsub.f32 %v1553, 1.0
      %v1784 = vsub.f32 %v1555, 1.0
      %v1785 = vsub.f32 %v1557, 1.0
      %v1786 = vsub.f32 %v1559, 1.0
      %v1787 = vsub.f32 %v1561, 1.0
      %v1788 = vsub.f32 %v1563, 1.0
      %v1789 = vsub.f32 %v1565, 1.0
      %v1790 = vsub.f32 %v1567, 1.0
      %v1791 = vsub.f32 %v1569, 1.0
      %v1792 = vsub.f32 %v1571, 1.0
      %v1793 = vsub.f32 %v1573, 1.0
      %v1794 = vsub.f32 %v1575, 1.0
      %v1795 = vsub.f32 %v1577, 1.0
      %v1796 = vsub.f32 %v1579, 1.0
      %v1797 = vsub.f32 %v1581, 1.0
      %v1798 = vsub.f32 %v1583, 1.0
      %v1799 = vsub.f32 %v1585, 1.0
      %v1800 = vsub.f32 %v1587, 1.0
      %v1801 = vsub.f32 %v1589, 1.0
      %v1802 = vsub.f32 %v1591, 1.0
      %v1803 = vsub.f32 %v1593, 1.0
      %v1804 = vsub.f32 %v1595, 1.0
      %v1805 = vsub.f32 %v1597, 1.0
      %v1806 = vsub.f32 %v1599, 1.0
      %v1807 = vsub.f32 %v1601, 1.0
      %v1808 = vsub.f32 %v1603, 1.0
      %v1809 = vsub.f32 %v1605, 1.0
      %v1810 = vsub.f32 %v1607, 1.0
      %v1811 = vsub.f32 %v1609, 1.0
      %v1812 = vsub.f32 %v1611, 1.0
      %v1813 = vsub.f32 %v1613, 1.0
      %v1814 = vsub.f32 %v1615, 1.0
      %v1815 = vsub.f32 %v1617, 1.0
      %v1816 = vsub.f32 %v1619, 1.0
      %v1817 = vsub.f32 %v1621, 1.0
      %v1818 = vsub.f32 %v1623, 1.0
      %v1819 = vsub.f32 %v1625, 1.0
      %v1820 = vsub.f32 %v1627, 1.0
      %v1821 = vsub.f32 %v1629, 1.0
      %v1822 = vsub.f32 %v1631, 1.0
      %v1823 = vsub.f32 %v1633, 1.0
      %v1824 = vsub.f32 %v1635, 1.0
      %v1825 = vsub.f32 %v1637, 1.0
      %v1826 = vsub.f32 %v1639, 1.0
      %v1827 = vsub.f32 %v1641, 1.0
      %v1828 = vsub.f32 %v1643, 1.0
      %v1829 = vsub.f32 %v1645, 1.0
      %v1830 = vsub.f32 %v1647, 1.0
      %v1831 = vsub.f32 %v1649, 1.0
      %v1832 = vsub.f32 %v1651, 1.0
      %v1833 = vsub.f32 %v1653, 1.0
      %v1834 = vsub.f32 %v1655, 1.0
      %v1835 = vsub.f32 %v1657, 1.0
      %v1836 = vsub.f32 %v1659, 1.0
      %v1837 = vsub.f32 %v1661, 1.0
      %v1838 = vsub.f32 %v1663, 1.0
      %v1839 = vsub.f32 %v1665, 1.0
      %v1840 = vsub.f32 %v1667, 1.0
      %v1841 = vsub.f32 %v1669, 1.0
      %v1842 = vsub.f32 %v1671, 1.0
      %v1843 = vsub.f32 %v1673, 1.0
      %v1844 = vsub.f32 %v1675, 1.0
      %v1845 = vsub.f32 %v1677, 1.0
      %v1846 = vsub.f32 %v1679, 1.0
      %v1847 = vsub.f32 %v1681, 1.0
      %v1848 = vsub.f32 %v1683, 1.0
      %v1849 = vsub.f32 %v1685, 1.0
      %v1850 = vsub.f32 %v1687, 1.0
      %v1851 = vsub.f32 %v1689, 1.0
      %v1852 = vsub.f32 %v1691, 1.0
      %v1853 = vsub.f32 %v1693, 1.0
      %v1854 = vsub.f32 %v1695, 1.0
      %v1855 = vsub.f32 %v1697, 1.0
      %v1856 = vsub.f32 %v1699, 1.0
      %v1857 = vsub.f32 %v1701, 1.0
      %v1858 = vsub.f32 %v1703, 1.0
      %v1859 = vsub.f32 %v1705, 1.0
      %v1860 = vsub.f32 %v1707, 1.0
      %v1861 = vsub.f32 %v1709, 1.0
      %v1862 = vsub.f32 %v1711, 1.0
      %v1863 = vsub.f32 %v1713, 1.0
      %v1864 = vsub.f32 %v1715, 1.0
      %v1865 = vsub.f32 %v1717, 1.0
      %v1866 = vsub.f32 %v1719, 1.0
      %v1867 = vsub.f32 %v1721, 1.0
      %v1868 = vsub.f32 %v1723, 1.0
      %v1869 = vsub.f32 %v1725, 1.0
      %v1870 = vsub.f32 %v1727, 1.0
      %v1871 = vsub.f32 %v1729, 1.0
      %v1872 = vsub.f32 %v1731, 1.0
      %v1873 = vsub.f32 %v1733, 1.0
      %v1874 = vsub.f32 %v1735, 1.0
      %v1875 = vsub.f32 %v1737, 1.0
      %v1876 = vsub.f32 %v1739, 1.0
      %v1877 = vsub.f32 %v1741, 1.0
      %v1878 = vsub.f32 %v1743, 1.0
      %v1879 = vsub.f32 %v1745, 1.0
      %v1880 = vsub.f32 %v1747, 1.0
      %v1881 = vsub.f32 %v1749, 1.0
      %v1882 = vsub.f32 %v1751, 1.0
      %v1883 = vsub.f32 %v1753, 1.0
      %v1884 = vsub.f32 %v1755, 1.0
      %v1885 = vsub.f32 %v1757, 1.0
      %v1886 = vsel %vm1246, %v927, %v1758
      %v1887 = vsel %vm1247, %v929, %v1759
      %v1888 = vsel %vm1248, %v932, %v1760
      %v1889 = vsel %vm1249, %v934, %v1761
      %v1890 = vsel %vm1250, %v937, %v1762
      %v1891 = vsel %vm1251, %v939, %v1763
      %v1892 = vsel %vm1252, %v942, %v1764
      %v1893 = vsel %vm1253, %v944, %v1765
      %v1894 = vsel %vm1254, %v947, %v1766
      %v1895 = vsel %vm1255, %v949, %v1767
      %v1896 = vsel %vm1256, %v952, %v1768
      %v1897 = vsel %vm1257, %v954, %v1769
      %v1898 = vsel %vm1258, %v957, %v1770
      %v1899 = vsel %vm1259, %v959, %v1771
      %v1900 = vsel %vm1260, %v962, %v1772
      %v1901 = vsel %vm1261, %v964, %v1773
      %v1902 = vsel %vm1262, %v967, %v1774
      %v1903 = vsel %vm1263, %v969, %v1775
      %v1904 = vsel %vm1264, %v972, %v1776
      %v1905 = vsel %vm1265, %v974, %v1777
      %v1906 = vsel %vm1266, %v977, %v1778
      %v1907 = vsel %vm1267, %v979, %v1779
      %v1908 = vsel %vm1268, %v982, %v1780
      %v1909 = vsel %vm1269, %v984, %v1781
      %v1910 = vsel %vm1270, %v987, %v1782
      %v1911 = vsel %vm1271, %v989, %v1783
      %v1912 = vsel %vm1272, %v992, %v1784
      %v1913 = vsel %vm1273, %v994, %v1785
      %v1914 = vsel %vm1274, %v997, %v1786
      %v1915 = vsel %vm1275, %v999, %v1787
      %v1916 = vsel %vm1276, %v1002, %v1788
      %v1917 = vsel %vm1277, %v1004, %v1789
      %v1918 = vsel %vm1278, %v1007, %v1790
      %v1919 = vsel %vm1279, %v1009, %v1791
      %v1920 = vsel %vm1280, %v1012, %v1792
      %v1921 = vsel %vm1281, %v1014, %v1793
      %v1922 = vsel %vm1282, %v1017, %v1794
      %v1923 = vsel %vm1283, %v1019, %v1795
      %v1924 = vsel %vm1284, %v1022, %v1796
      %v1925 = vsel %vm1285, %v1024, %v1797
      %v1926 = vsel %vm1286, %v1027, %v1798
      %v1927 = vsel %vm1287, %v1029, %v1799
      %v1928 = vsel %vm1288, %v1032, %v1800
      %v1929 = vsel %vm1289, %v1034, %v1801
      %v1930 = vsel %vm1290, %v1037, %v1802
      %v1931 = vsel %vm1291, %v1039, %v1803
      %v1932 = vsel %vm1292, %v1042, %v1804
      %v1933 = vsel %vm1293, %v1044, %v1805
      %v1934 = vsel %vm1294, %v1047, %v1806
      %v1935 = vsel %vm1295, %v1049, %v1807
      %v1936 = vsel %vm1296, %v1052, %v1808
      %v1937 = vsel %vm1297, %v1054, %v1809
      %v1938 = vsel %vm1298, %v1057, %v1810
      %v1939 = vsel %vm1299, %v1059, %v1811
      %v1940 = vsel %vm1300, %v1062, %v1812
      %v1941 = vsel %vm1301, %v1064, %v1813
      %v1942 = vsel %vm1302, %v1067, %v1814
      %v1943 = vsel %vm1303, %v1069, %v1815
      %v1944 = vsel %vm1304, %v1072, %v1816
      %v1945 = vsel %vm1305, %v1074, %v1817
      %v1946 = vsel %vm1306, %v1077, %v1818
      %v1947 = vsel %vm1307, %v1079, %v1819
      %v1948 = vsel %vm1308, %v1082, %v1820
      %v1949 = vsel %vm1309, %v1084, %v1821
      %v1950 = vsel %vm1310, %v1087, %v1822
      %v1951 = vsel %vm1311, %v1089, %v1823
      %v1952 = vsel %vm1312, %v1092, %v1824
      %v1953 = vsel %vm1313, %v1094, %v1825
      %v1954 = vsel %vm1314, %v1097, %v1826
      %v1955 = vsel %vm1315, %v1099, %v1827
      %v1956 = vsel %vm1316, %v1102, %v1828
      %v1957 = vsel %vm1317, %v1104, %v1829
      %v1958 = vsel %vm1318, %v1107, %v1830
      %v1959 = vsel %vm1319, %v1109, %v1831
      %v1960 = vsel %vm1320, %v1112, %v1832
      %v1961 = vsel %vm1321, %v1114, %v1833
      %v1962 = vsel %vm1322, %v1117, %v1834
      %v1963 = vsel %vm1323, %v1119, %v1835
      %v1964 = vsel %vm1324, %v1122, %v1836
      %v1965 = vsel %vm1325, %v1124, %v1837
      %v1966 = vsel %vm1326, %v1127, %v1838
      %v1967 = vsel %vm1327, %v1129, %v1839
      %v1968 = vsel %vm1328, %v1132, %v1840
      %v1969 = vsel %vm1329, %v1134, %v1841
      %v1970 = vsel %vm1330, %v1137, %v1842
      %v1971 = vsel %vm1331, %v1139, %v1843
      %v1972 = vsel %vm1332, %v1142, %v1844
      %v1973 = vsel %vm1333, %v1144, %v1845
      %v1974 = vsel %vm1334, %v1147, %v1846
      %v1975 = vsel %vm1335, %v1149, %v1847
      %v1976 = vsel %vm1336, %v1152, %v1848
      %v1977 = vsel %vm1337, %v1154, %v1849
      %v1978 = vsel %vm1338, %v1157, %v1850
      %v1979 = vsel %vm1339, %v1159, %v1851
      %v1980 = vsel %vm1340, %v1162, %v1852
      %v1981 = vsel %vm1341, %v1164, %v1853
      %v1982 = vsel %vm1342, %v1167, %v1854
      %v1983 = vsel %vm1343, %v1169, %v1855
      %v1984 = vsel %vm1344, %v1172, %v1856
      %v1985 = vsel %vm1345, %v1174, %v1857
      %v1986 = vsel %vm1346, %v1177, %v1858
      %v1987 = vsel %vm1347, %v1179, %v1859
      %v1988 = vsel %vm1348, %v1182, %v1860
      %v1989 = vsel %vm1349, %v1184, %v1861
      %v1990 = vsel %vm1350, %v1187, %v1862
      %v1991 = vsel %vm1351, %v1189, %v1863
      %v1992 = vsel %vm1352, %v1192, %v1864
      %v1993 = vsel %vm1353, %v1194, %v1865
      %v1994 = vsel %vm1354, %v1197, %v1866
      %v1995 = vsel %vm1355, %v1199, %v1867
      %v1996 = vsel %vm1356, %v1202, %v1868
      %v1997 = vsel %vm1357, %v1204, %v1869
      %v1998 = vsel %vm1358, %v1207, %v1870
      %v1999 = vsel %vm1359, %v1209, %v1871
      %v2000 = vsel %vm1360, %v1212, %v1872
      %v2001 = vsel %vm1361, %v1214, %v1873
      %v2002 = vsel %vm1362, %v1217, %v1874
      %v2003 = vsel %vm1363, %v1219, %v1875
      %v2004 = vsel %vm1364, %v1222, %v1876
      %v2005 = vsel %vm1365, %v1224, %v1877
      %v2006 = vsel %vm1366, %v1227, %v1878
      %v2007 = vsel %vm1367, %v1229, %v1879
      %v2008 = vsel %vm1368, %v1232, %v1880
      %v2009 = vsel %vm1369, %v1234, %v1881
      %v2010 = vsel %vm1370, %v1237, %v1882
      %v2011 = vsel %vm1371, %v1239, %v1883
      %v2012 = vsel %vm1372, %v1242, %v1884
      %v2013 = vsel %vm1373, %v1244, %v1885
      %v2014 = vpack.c.bf16 %v1886, %v1886
      %v2015 = vpack.c.bf16 %v1887, %v1887
      %v2016 = vpack.c.bf16 %v1888, %v1888
      %v2017 = vpack.c.bf16 %v1889, %v1889
      %v2018 = vpack.c.bf16 %v1890, %v1890
      %v2019 = vpack.c.bf16 %v1891, %v1891
      %v2020 = vpack.c.bf16 %v1892, %v1892
      %v2021 = vpack.c.bf16 %v1893, %v1893
      %v2022 = vpack.c.bf16 %v1894, %v1894
      %v2023 = vpack.c.bf16 %v1895, %v1895
      %v2024 = vpack.c.bf16 %v1896, %v1896
      %v2025 = vpack.c.bf16 %v1897, %v1897
      %v2026 = vpack.c.bf16 %v1898, %v1898
      %v2027 = vpack.c.bf16 %v1899, %v1899
      %v2028 = vpack.c.bf16 %v1900, %v1900
      %v2029 = vpack.c.bf16 %v1901, %v1901
      %v2030 = vpack.c.bf16 %v1902, %v1902
      %v2031 = vpack.c.bf16 %v1903, %v1903
      %v2032 = vpack.c.bf16 %v1904, %v1904
      %v2033 = vpack.c.bf16 %v1905, %v1905
      %v2034 = vpack.c.bf16 %v1906, %v1906
      %v2035 = vpack.c.bf16 %v1907, %v1907
      %v2036 = vpack.c.bf16 %v1908, %v1908
      %v2037 = vpack.c.bf16 %v1909, %v1909
      %v2038 = vpack.c.bf16 %v1910, %v1910
      %v2039 = vpack.c.bf16 %v1911, %v1911
      %v2040 = vpack.c.bf16 %v1912, %v1912
      %v2041 = vpack.c.bf16 %v1913, %v1913
      %v2042 = vpack.c.bf16 %v1914, %v1914
      %v2043 = vpack.c.bf16 %v1915, %v1915
      %v2044 = vpack.c.bf16 %v1916, %v1916
      %v2045 = vpack.c.bf16 %v1917, %v1917
      %v2046 = vpack.c.bf16 %v1918, %v1918
      %v2047 = vpack.c.bf16 %v1919, %v1919
      %v2048 = vpack.c.bf16 %v1920, %v1920
      %v2049 = vpack.c.bf16 %v1921, %v1921
      %v2050 = vpack.c.bf16 %v1922, %v1922
      %v2051 = vpack.c.bf16 %v1923, %v1923
      %v2052 = vpack.c.bf16 %v1924, %v1924
      %v2053 = vpack.c.bf16 %v1925, %v1925
      %v2054 = vpack.c.bf16 %v1926, %v1926
      %v2055 = vpack.c.bf16 %v1927, %v1927
      %v2056 = vpack.c.bf16 %v1928, %v1928
      %v2057 = vpack.c.bf16 %v1929, %v1929
      %v2058 = vpack.c.bf16 %v1930, %v1930
      %v2059 = vpack.c.bf16 %v1931, %v1931
      %v2060 = vpack.c.bf16 %v1932, %v1932
      %v2061 = vpack.c.bf16 %v1933, %v1933
      %v2062 = vpack.c.bf16 %v1934, %v1934
      %v2063 = vpack.c.bf16 %v1935, %v1935
      %v2064 = vpack.c.bf16 %v1936, %v1936
      %v2065 = vpack.c.bf16 %v1937, %v1937
      %v2066 = vpack.c.bf16 %v1938, %v1938
      %v2067 = vpack.c.bf16 %v1939, %v1939
      %v2068 = vpack.c.bf16 %v1940, %v1940
      %v2069 = vpack.c.bf16 %v1941, %v1941
      %v2070 = vpack.c.bf16 %v1942, %v1942
      %v2071 = vpack.c.bf16 %v1943, %v1943
      %v2072 = vpack.c.bf16 %v1944, %v1944
      %v2073 = vpack.c.bf16 %v1945, %v1945
      %v2074 = vpack.c.bf16 %v1946, %v1946
      %v2075 = vpack.c.bf16 %v1947, %v1947
      %v2076 = vpack.c.bf16 %v1948, %v1948
      %v2077 = vpack.c.bf16 %v1949, %v1949
      %v2078 = vpack.c.bf16 %v1950, %v1950
      %v2079 = vpack.c.bf16 %v1951, %v1951
      %v2080 = vpack.c.bf16 %v1952, %v1952
      %v2081 = vpack.c.bf16 %v1953, %v1953
      %v2082 = vpack.c.bf16 %v1954, %v1954
      %v2083 = vpack.c.bf16 %v1955, %v1955
      %v2084 = vpack.c.bf16 %v1956, %v1956
      %v2085 = vpack.c.bf16 %v1957, %v1957
      %v2086 = vpack.c.bf16 %v1958, %v1958
      %v2087 = vpack.c.bf16 %v1959, %v1959
      %v2088 = vpack.c.bf16 %v1960, %v1960
      %v2089 = vpack.c.bf16 %v1961, %v1961
      %v2090 = vpack.c.bf16 %v1962, %v1962
      %v2091 = vpack.c.bf16 %v1963, %v1963
      %v2092 = vpack.c.bf16 %v1964, %v1964
      %v2093 = vpack.c.bf16 %v1965, %v1965
      %v2094 = vpack.c.bf16 %v1966, %v1966
      %v2095 = vpack.c.bf16 %v1967, %v1967
      %v2096 = vpack.c.bf16 %v1968, %v1968
      %v2097 = vpack.c.bf16 %v1969, %v1969
      %v2098 = vpack.c.bf16 %v1970, %v1970
      %v2099 = vpack.c.bf16 %v1971, %v1971
      %v2100 = vpack.c.bf16 %v1972, %v1972
      %v2101 = vpack.c.bf16 %v1973, %v1973
      %v2102 = vpack.c.bf16 %v1974, %v1974
      %v2103 = vpack.c.bf16 %v1975, %v1975
      %v2104 = vpack.c.bf16 %v1976, %v1976
      %v2105 = vpack.c.bf16 %v1977, %v1977
      %v2106 = vpack.c.bf16 %v1978, %v1978
      %v2107 = vpack.c.bf16 %v1979, %v1979
      %v2108 = vpack.c.bf16 %v1980, %v1980
      %v2109 = vpack.c.bf16 %v1981, %v1981
      %v2110 = vpack.c.bf16 %v1982, %v1982
      %v2111 = vpack.c.bf16 %v1983, %v1983
      %v2112 = vpack.c.bf16 %v1984, %v1984
      %v2113 = vpack.c.bf16 %v1985, %v1985
      %v2114 = vpack.c.bf16 %v1986, %v1986
      %v2115 = vpack.c.bf16 %v1987, %v1987
      %v2116 = vpack.c.bf16 %v1988, %v1988
      %v2117 = vpack.c.bf16 %v1989, %v1989
      %v2118 = vpack.c.bf16 %v1990, %v1990
      %v2119 = vpack.c.bf16 %v1991, %v1991
      %v2120 = vpack.c.bf16 %v1992, %v1992
      %v2121 = vpack.c.bf16 %v1993, %v1993
      %v2122 = vpack.c.bf16 %v1994, %v1994
      %v2123 = vpack.c.bf16 %v1995, %v1995
      %v2124 = vpack.c.bf16 %v1996, %v1996
      %v2125 = vpack.c.bf16 %v1997, %v1997
      %v2126 = vpack.c.bf16 %v1998, %v1998
      %v2127 = vpack.c.bf16 %v1999, %v1999
      %v2128 = vpack.c.bf16 %v2000, %v2000
      %v2129 = vpack.c.bf16 %v2001, %v2001
      %v2130 = vpack.c.bf16 %v2002, %v2002
      %v2131 = vpack.c.bf16 %v2003, %v2003
      %v2132 = vpack.c.bf16 %v2004, %v2004
      %v2133 = vpack.c.bf16 %v2005, %v2005
      %v2134 = vpack.c.bf16 %v2006, %v2006
      %v2135 = vpack.c.bf16 %v2007, %v2007
      %v2136 = vpack.c.bf16 %v2008, %v2008
      %v2137 = vpack.c.bf16 %v2009, %v2009
      %v2138 = vpack.c.bf16 %v2010, %v2010
      %v2139 = vpack.c.bf16 %v2011, %v2011
      %v2140 = vpack.c.bf16 %v2012, %v2012
      %v2141 = vpack.c.bf16 %v2013, %v2013
      %v2142 = vld [vmem:[%s3] sm:$0xf]
      %v2143 = vld [vmem:[%s3 + $0x4] sm:$0xf]
      %v2144 = vld [vmem:[%s3 + $0x8] sm:$0xf]
      %v2145 = vld [vmem:[%s3 + $0xc] sm:$0xf]
      %v2146 = vld [vmem:[%s3 + $0x10] sm:$0xf]
      %v2147 = vld [vmem:[%s3 + $0x14] sm:$0xf]
      %v2148 = vld [vmem:[%s3 + $0x18] sm:$0xf]
      %v2149 = vld [vmem:[%s3 + $0x1c] sm:$0xf]
      %v2150 = vld [vmem:[%s3 + $0x20] sm:$0xf]
      %v2151 = vld [vmem:[%s3 + $0x24] sm:$0xf]
      %v2152 = vld [vmem:[%s3 + $0x28] sm:$0xf]
      %v2153 = vld [vmem:[%s3 + $0x2c] sm:$0xf]
      %v2154 = vld [vmem:[%s3 + $0x30] sm:$0xf]
      %v2155 = vld [vmem:[%s3 + $0x34] sm:$0xf]
      %v2156 = vld [vmem:[%s3 + $0x38] sm:$0xf]
      %v2157 = vld [vmem:[%s3 + $0x3c] sm:$0xf]
      %v2158 = vld [vmem:[%s3 + $0x40] sm:$0xf]
      %v2159 = vld [vmem:[%s3 + $0x44] sm:$0xf]
      %v2160 = vld [vmem:[%s3 + $0x48] sm:$0xf]
      %v2161 = vld [vmem:[%s3 + $0x4c] sm:$0xf]
      %v2162 = vld [vmem:[%s3 + $0x50] sm:$0xf]
      %v2163 = vld [vmem:[%s3 + $0x54] sm:$0xf]
      %v2164 = vld [vmem:[%s3 + $0x58] sm:$0xf]
      %v2165 = vld [vmem:[%s3 + $0x5c] sm:$0xf]
      %v2166 = vld [vmem:[%s3 + $0x60] sm:$0xf]
      %v2167 = vld [vmem:[%s3 + $0x64] sm:$0xf]
      %v2168 = vld [vmem:[%s3 + $0x68] sm:$0xf]
      %v2169 = vld [vmem:[%s3 + $0x6c] sm:$0xf]
      %v2170 = vld [vmem:[%s3 + $0x70] sm:$0xf]
      %v2171 = vld [vmem:[%s3 + $0x74] sm:$0xf]
      %v2172 = vld [vmem:[%s3 + $0x78] sm:$0xf]
      %v2173 = vld [vmem:[%s3 + $0x7c] sm:$0xf]
      %v2174 = vld [vmem:[%s3 + $0x80] sm:$0xf]
      %v2175 = vld [vmem:[%s3 + $0x84] sm:$0xf]
      %v2176 = vld [vmem:[%s3 + $0x88] sm:$0xf]
      %v2177 = vld [vmem:[%s3 + $0x8c] sm:$0xf]
      %v2178 = vld [vmem:[%s3 + $0x90] sm:$0xf]
      %v2179 = vld [vmem:[%s3 + $0x94] sm:$0xf]
      %v2180 = vld [vmem:[%s3 + $0x98] sm:$0xf]
      %v2181 = vld [vmem:[%s3 + $0x9c] sm:$0xf]
      %v2182 = vld [vmem:[%s3 + $0xa0] sm:$0xf]
      %v2183 = vld [vmem:[%s3 + $0xa4] sm:$0xf]
      %v2184 = vld [vmem:[%s3 + $0xa8] sm:$0xf]
      %v2185 = vld [vmem:[%s3 + $0xac] sm:$0xf]
      %v2186 = vld [vmem:[%s3 + $0xb0] sm:$0xf]
      %v2187 = vld [vmem:[%s3 + $0xb4] sm:$0xf]
      %v2188 = vld [vmem:[%s3 + $0xb8] sm:$0xf]
      %v2189 = vld [vmem:[%s3 + $0xbc] sm:$0xf]
      %v2190 = vld [vmem:[%s3 + $0xc0] sm:$0xf]
      %v2191 = vld [vmem:[%s3 + $0xc4] sm:$0xf]
      %v2192 = vld [vmem:[%s3 + $0xc8] sm:$0xf]
      %v2193 = vld [vmem:[%s3 + $0xcc] sm:$0xf]
      %v2194 = vld [vmem:[%s3 + $0xd0] sm:$0xf]
      %v2195 = vld [vmem:[%s3 + $0xd4] sm:$0xf]
      %v2196 = vld [vmem:[%s3 + $0xd8] sm:$0xf]
      %v2197 = vld [vmem:[%s3 + $0xdc] sm:$0xf]
      %v2198 = vld [vmem:[%s3 + $0xe0] sm:$0xf]
      %v2199 = vld [vmem:[%s3 + $0xe4] sm:$0xf]
      %v2200 = vld [vmem:[%s3 + $0xe8] sm:$0xf]
      %v2201 = vld [vmem:[%s3 + $0xec] sm:$0xf]
      %v2202 = vld [vmem:[%s3 + $0xf0] sm:$0xf]
      %v2203 = vld [vmem:[%s3 + $0xf4] sm:$0xf]
      %v2204 = vld [vmem:[%s3 + $0xf8] sm:$0xf]
      %v2205 = vld [vmem:[%s3 + $0xfc] sm:$0xf]
      %v2206 = vld [vmem:[%s3 + $0x100] sm:$0xf]
      %v2207 = vld [vmem:[%s3 + $0x104] sm:$0xf]
      %v2208 = vld [vmem:[%s3 + $0x108] sm:$0xf]
      %v2209 = vld [vmem:[%s3 + $0x10c] sm:$0xf]
      %v2210 = vld [vmem:[%s3 + $0x110] sm:$0xf]
      %v2211 = vld [vmem:[%s3 + $0x114] sm:$0xf]
      %v2212 = vld [vmem:[%s3 + $0x118] sm:$0xf]
      %v2213 = vld [vmem:[%s3 + $0x11c] sm:$0xf]
      %v2214 = vld [vmem:[%s3 + $0x120] sm:$0xf]
      %v2215 = vld [vmem:[%s3 + $0x124] sm:$0xf]
      %v2216 = vld [vmem:[%s3 + $0x128] sm:$0xf]
      %v2217 = vld [vmem:[%s3 + $0x12c] sm:$0xf]
      %v2218 = vld [vmem:[%s3 + $0x130] sm:$0xf]
      %v2219 = vld [vmem:[%s3 + $0x134] sm:$0xf]
      %v2220 = vld [vmem:[%s3 + $0x138] sm:$0xf]
      %v2221 = vld [vmem:[%s3 + $0x13c] sm:$0xf]
      %v2222 = vld [vmem:[%s3 + $0x140] sm:$0xf]
      %v2223 = vld [vmem:[%s3 + $0x144] sm:$0xf]
      %v2224 = vld [vmem:[%s3 + $0x148] sm:$0xf]
      %v2225 = vld [vmem:[%s3 + $0x14c] sm:$0xf]
      %v2226 = vld [vmem:[%s3 + $0x150] sm:$0xf]
      %v2227 = vld [vmem:[%s3 + $0x154] sm:$0xf]
      %v2228 = vld [vmem:[%s3 + $0x158] sm:$0xf]
      %v2229 = vld [vmem:[%s3 + $0x15c] sm:$0xf]
      %v2230 = vld [vmem:[%s3 + $0x160] sm:$0xf]
      %v2231 = vld [vmem:[%s3 + $0x164] sm:$0xf]
      %v2232 = vld [vmem:[%s3 + $0x168] sm:$0xf]
      %v2233 = vld [vmem:[%s3 + $0x16c] sm:$0xf]
      %v2234 = vld [vmem:[%s3 + $0x170] sm:$0xf]
      %v2235 = vld [vmem:[%s3 + $0x174] sm:$0xf]
      %v2236 = vld [vmem:[%s3 + $0x178] sm:$0xf]
      %v2237 = vld [vmem:[%s3 + $0x17c] sm:$0xf]
      %v2238 = vld [vmem:[%s3 + $0x180] sm:$0xf]
      %v2239 = vld [vmem:[%s3 + $0x184] sm:$0xf]
      %v2240 = vld [vmem:[%s3 + $0x188] sm:$0xf]
      %v2241 = vld [vmem:[%s3 + $0x18c] sm:$0xf]
      %v2242 = vld [vmem:[%s3 + $0x190] sm:$0xf]
      %v2243 = vld [vmem:[%s3 + $0x194] sm:$0xf]
      %v2244 = vld [vmem:[%s3 + $0x198] sm:$0xf]
      %v2245 = vld [vmem:[%s3 + $0x19c] sm:$0xf]
      %v2246 = vld [vmem:[%s3 + $0x1a0] sm:$0xf]
      %v2247 = vld [vmem:[%s3 + $0x1a4] sm:$0xf]
      %v2248 = vld [vmem:[%s3 + $0x1a8] sm:$0xf]
      %v2249 = vld [vmem:[%s3 + $0x1ac] sm:$0xf]
      %v2250 = vld [vmem:[%s3 + $0x1b0] sm:$0xf]
      %v2251 = vld [vmem:[%s3 + $0x1b4] sm:$0xf]
      %v2252 = vld [vmem:[%s3 + $0x1b8] sm:$0xf]
      %v2253 = vld [vmem:[%s3 + $0x1bc] sm:$0xf]
      %v2254 = vld [vmem:[%s3 + $0x1c0] sm:$0xf]
      %v2255 = vld [vmem:[%s3 + $0x1c4] sm:$0xf]
      %v2256 = vld [vmem:[%s3 + $0x1c8] sm:$0xf]
      %v2257 = vld [vmem:[%s3 + $0x1cc] sm:$0xf]
      %v2258 = vld [vmem:[%s3 + $0x1d0] sm:$0xf]
      %v2259 = vld [vmem:[%s3 + $0x1d4] sm:$0xf]
      %v2260 = vld [vmem:[%s3 + $0x1d8] sm:$0xf]
      %v2261 = vld [vmem:[%s3 + $0x1dc] sm:$0xf]
      %v2262 = vld [vmem:[%s3 + $0x1e0] sm:$0xf]
      %v2263 = vld [vmem:[%s3 + $0x1e4] sm:$0xf]
      %v2264 = vld [vmem:[%s3 + $0x1e8] sm:$0xf]
      %v2265 = vld [vmem:[%s3 + $0x1ec] sm:$0xf]
      %v2266 = vld [vmem:[%s3 + $0x1f0] sm:$0xf]
      %v2267 = vld [vmem:[%s3 + $0x1f4] sm:$0xf]
      %v2268 = vld [vmem:[%s3 + $0x1f8] sm:$0xf]
      %v2269 = vld [vmem:[%s3 + $0x1fc] sm:$0xf]
      %v2274 = vunpack.c.l.b16 %v2014
      %v2275 = vunpack.c.l.b16 %v2015
      %v2276 = vunpack.c.l.b16 %v2016
      %v2277 = vunpack.c.l.b16 %v2017
      %v2278 = vpack.c.b16 %v2275, %v2274
      %v2279 = vpack.c.b16 %v2277, %v2276
      %v2284 = vunpack.c.l.b16 %v2142
      %v2285 = vunpack.c.l.b16 %v2143
      %v2286 = vunpack.c.l.b16 %v2144
      %v2287 = vunpack.c.l.b16 %v2145
      %v2288 = vpack.c.b16 %v2285, %v2284
      %v2289 = vpack.c.b16 %v2287, %v2286
      %vm2292 = vcmask 261120
      %v2294 = vsel %vm2292, %v2278, 0
      %v2297 = vsel %vm2292, %v2279, 0
      %2299 = vmatpush.bf16.msra.mxu0 0
      %2300 = vmatpush.bf16.msra.mxu0 0
      %2301 = vmatpush.bf16.msra.mxu0 0
      %2302 = vmatpush.bf16.msra.mxu0 0
      %2303 = vmatpush.bf16.msra.mxu0 0
      %2304 = vmatpush.bf16.msra.mxu0 0
      %2305 = vmatpush.bf16.msra.mxu0 %v2289
      %2306 = vmatpush.bf16.msra.mxu0 %v2288
      %2307 = vmatmul.bf16.gmra.mxu0 %v2294
      %v2308 = vpop.f32.mrf.mxu0
      %v2309 = vadd.f32 0.0, %v2308
      %v2310 = vpop.f32.mrf.mxu0
      %v2311 = vadd.f32 0.0, %v2310
      %2312 = vmatmul.bf16.gmra.mxu0 %v2297
      %v2313 = vpop.f32.mrf.mxu0
      %v2314 = vadd.f32 0.0, %v2313
      %v2315 = vpop.f32.mrf.mxu0
      %v2316 = vadd.f32 0.0, %v2315
      %2317 = vdwg.mxu0
      %v2322 = vunpack.c.l.b16 %v2018
      %v2323 = vunpack.c.l.b16 %v2019
      %v2324 = vunpack.c.l.b16 %v2020
      %v2325 = vunpack.c.l.b16 %v2021
      %v2326 = vpack.c.b16 %v2323, %v2322
      %v2327 = vpack.c.b16 %v2325, %v2324
      %v2332 = vunpack.c.l.b16 %v2146
      %v2333 = vunpack.c.l.b16 %v2147
      %v2334 = vunpack.c.l.b16 %v2148
      %v2335 = vunpack.c.l.b16 %v2149
      %v2336 = vpack.c.b16 %v2333, %v2332
      %v2337 = vpack.c.b16 %v2335, %v2334
      %v2341 = vsel %vm2292, %v2326, 0
      %v2344 = vsel %vm2292, %v2327, 0
      %2346 = vmatpush.bf16.msra.mxu0 0
      %2347 = vmatpush.bf16.msra.mxu0 0
      %2348 = vmatpush.bf16.msra.mxu0 0
      %2349 = vmatpush.bf16.msra.mxu0 0
      %2350 = vmatpush.bf16.msra.mxu0 0
      %2351 = vmatpush.bf16.msra.mxu0 0
      %2352 = vmatpush.bf16.msra.mxu0 %v2337
      %2353 = vmatpush.bf16.msra.mxu0 %v2336
      %2354 = vmatmul.bf16.gmra.mxu0 %v2341
      %v2355 = vpop.f32.mrf.mxu0
      %v2356 = vadd.f32 0.0, %v2355
      %v2357 = vpop.f32.mrf.mxu0
      %v2358 = vadd.f32 0.0, %v2357
      %2359 = vmatmul.bf16.gmra.mxu0 %v2344
      %v2360 = vpop.f32.mrf.mxu0
      %v2361 = vadd.f32 0.0, %v2360
      %v2362 = vpop.f32.mrf.mxu0
      %v2363 = vadd.f32 0.0, %v2362
      %2364 = vdwg.mxu0
      %v2369 = vunpack.c.l.b16 %v2022
      %v2370 = vunpack.c.l.b16 %v2023
      %v2371 = vunpack.c.l.b16 %v2024
      %v2372 = vunpack.c.l.b16 %v2025
      %v2373 = vpack.c.b16 %v2370, %v2369
      %v2374 = vpack.c.b16 %v2372, %v2371
      %v2379 = vunpack.c.l.b16 %v2150
      %v2380 = vunpack.c.l.b16 %v2151
      %v2381 = vunpack.c.l.b16 %v2152
      %v2382 = vunpack.c.l.b16 %v2153
      %v2383 = vpack.c.b16 %v2380, %v2379
      %v2384 = vpack.c.b16 %v2382, %v2381
      %v2388 = vsel %vm2292, %v2373, 0
      %v2391 = vsel %vm2292, %v2374, 0
      %2393 = vmatpush.bf16.msra.mxu0 0
      %2394 = vmatpush.bf16.msra.mxu0 0
      %2395 = vmatpush.bf16.msra.mxu0 0
      %2396 = vmatpush.bf16.msra.mxu0 0
      %2397 = vmatpush.bf16.msra.mxu0 0
      %2398 = vmatpush.bf16.msra.mxu0 0
      %2399 = vmatpush.bf16.msra.mxu0 %v2384
      %2400 = vmatpush.bf16.msra.mxu0 %v2383
      %2401 = vmatmul.bf16.gmra.mxu0 %v2388
      %v2402 = vpop.f32.mrf.mxu0
      %v2403 = vadd.f32 0.0, %v2402
      %v2404 = vpop.f32.mrf.mxu0
      %v2405 = vadd.f32 0.0, %v2404
      %2406 = vmatmul.bf16.gmra.mxu0 %v2391
      %v2407 = vpop.f32.mrf.mxu0
      %v2408 = vadd.f32 0.0, %v2407
      %v2409 = vpop.f32.mrf.mxu0
      %v2410 = vadd.f32 0.0, %v2409
      %2411 = vdwg.mxu0
      %v2416 = vunpack.c.l.b16 %v2026
      %v2417 = vunpack.c.l.b16 %v2027
      %v2418 = vunpack.c.l.b16 %v2028
      %v2419 = vunpack.c.l.b16 %v2029
      %v2420 = vpack.c.b16 %v2417, %v2416
      %v2421 = vpack.c.b16 %v2419, %v2418
      %v2426 = vunpack.c.l.b16 %v2154
      %v2427 = vunpack.c.l.b16 %v2155
      %v2428 = vunpack.c.l.b16 %v2156
      %v2429 = vunpack.c.l.b16 %v2157
      %v2430 = vpack.c.b16 %v2427, %v2426
      %v2431 = vpack.c.b16 %v2429, %v2428
      %v2435 = vsel %vm2292, %v2420, 0
      %v2438 = vsel %vm2292, %v2421, 0
      %2440 = vmatpush.bf16.msra.mxu0 0
      %2441 = vmatpush.bf16.msra.mxu0 0
      %2442 = vmatpush.bf16.msra.mxu0 0
      %2443 = vmatpush.bf16.msra.mxu0 0
      %2444 = vmatpush.bf16.msra.mxu0 0
      %2445 = vmatpush.bf16.msra.mxu0 0
      %2446 = vmatpush.bf16.msra.mxu0 %v2431
      %2447 = vmatpush.bf16.msra.mxu0 %v2430
      %2448 = vmatmul.bf16.gmra.mxu0 %v2435
      %v2449 = vpop.f32.mrf.mxu0
      %v2450 = vadd.f32 0.0, %v2449
      %v2451 = vpop.f32.mrf.mxu0
      %v2452 = vadd.f32 0.0, %v2451
      %2453 = vmatmul.bf16.gmra.mxu0 %v2438
      %v2454 = vpop.f32.mrf.mxu0
      %v2455 = vadd.f32 0.0, %v2454
      %v2456 = vpop.f32.mrf.mxu0
      %v2457 = vadd.f32 0.0, %v2456
      %2458 = vdwg.mxu0
      %v2463 = vunpack.c.l.b16 %v2030
      %v2464 = vunpack.c.l.b16 %v2031
      %v2465 = vunpack.c.l.b16 %v2032
      %v2466 = vunpack.c.l.b16 %v2033
      %v2467 = vpack.c.b16 %v2464, %v2463
      %v2468 = vpack.c.b16 %v2466, %v2465
      %v2473 = vunpack.c.l.b16 %v2158
      %v2474 = vunpack.c.l.b16 %v2159
      %v2475 = vunpack.c.l.b16 %v2160
      %v2476 = vunpack.c.l.b16 %v2161
      %v2477 = vpack.c.b16 %v2474, %v2473
      %v2478 = vpack.c.b16 %v2476, %v2475
      %v2482 = vsel %vm2292, %v2467, 0
      %v2485 = vsel %vm2292, %v2468, 0
      %2487 = vmatpush.bf16.msra.mxu0 0
      %2488 = vmatpush.bf16.msra.mxu0 0
      %2489 = vmatpush.bf16.msra.mxu0 0
      %2490 = vmatpush.bf16.msra.mxu0 0
      %2491 = vmatpush.bf16.msra.mxu0 0
      %2492 = vmatpush.bf16.msra.mxu0 0
      %2493 = vmatpush.bf16.msra.mxu0 %v2478
      %2494 = vmatpush.bf16.msra.mxu0 %v2477
      %2495 = vmatmul.bf16.gmra.mxu0 %v2482
      %v2496 = vpop.f32.mrf.mxu0
      %v2497 = vadd.f32 0.0, %v2496
      %v2498 = vpop.f32.mrf.mxu0
      %v2499 = vadd.f32 0.0, %v2498
      %2500 = vmatmul.bf16.gmra.mxu0 %v2485
      %v2501 = vpop.f32.mrf.mxu0
      %v2502 = vadd.f32 0.0, %v2501
      %v2503 = vpop.f32.mrf.mxu0
      %v2504 = vadd.f32 0.0, %v2503
      %2505 = vdwg.mxu0
      %v2510 = vunpack.c.l.b16 %v2034
      %v2511 = vunpack.c.l.b16 %v2035
      %v2512 = vunpack.c.l.b16 %v2036
      %v2513 = vunpack.c.l.b16 %v2037
      %v2514 = vpack.c.b16 %v2511, %v2510
      %v2515 = vpack.c.b16 %v2513, %v2512
      %v2520 = vunpack.c.l.b16 %v2162
      %v2521 = vunpack.c.l.b16 %v2163
      %v2522 = vunpack.c.l.b16 %v2164
      %v2523 = vunpack.c.l.b16 %v2165
      %v2524 = vpack.c.b16 %v2521, %v2520
      %v2525 = vpack.c.b16 %v2523, %v2522
      %v2529 = vsel %vm2292, %v2514, 0
      %v2532 = vsel %vm2292, %v2515, 0
      %2534 = vmatpush.bf16.msra.mxu0 0
      %2535 = vmatpush.bf16.msra.mxu0 0
      %2536 = vmatpush.bf16.msra.mxu0 0
      %2537 = vmatpush.bf16.msra.mxu0 0
      %2538 = vmatpush.bf16.msra.mxu0 0
      %2539 = vmatpush.bf16.msra.mxu0 0
      %2540 = vmatpush.bf16.msra.mxu0 %v2525
      %2541 = vmatpush.bf16.msra.mxu0 %v2524
      %2542 = vmatmul.bf16.gmra.mxu0 %v2529
      %v2543 = vpop.f32.mrf.mxu0
      %v2544 = vadd.f32 0.0, %v2543
      %v2545 = vpop.f32.mrf.mxu0
      %v2546 = vadd.f32 0.0, %v2545
      %2547 = vmatmul.bf16.gmra.mxu0 %v2532
      %v2548 = vpop.f32.mrf.mxu0
      %v2549 = vadd.f32 0.0, %v2548
      %v2550 = vpop.f32.mrf.mxu0
      %v2551 = vadd.f32 0.0, %v2550
      %2552 = vdwg.mxu0
      %v2557 = vunpack.c.l.b16 %v2038
      %v2558 = vunpack.c.l.b16 %v2039
      %v2559 = vunpack.c.l.b16 %v2040
      %v2560 = vunpack.c.l.b16 %v2041
      %v2561 = vpack.c.b16 %v2558, %v2557
      %v2562 = vpack.c.b16 %v2560, %v2559
      %v2567 = vunpack.c.l.b16 %v2166
      %v2568 = vunpack.c.l.b16 %v2167
      %v2569 = vunpack.c.l.b16 %v2168
      %v2570 = vunpack.c.l.b16 %v2169
      %v2571 = vpack.c.b16 %v2568, %v2567
      %v2572 = vpack.c.b16 %v2570, %v2569
      %v2576 = vsel %vm2292, %v2561, 0
      %v2579 = vsel %vm2292, %v2562, 0
      %2581 = vmatpush.bf16.msra.mxu0 0
      %2582 = vmatpush.bf16.msra.mxu0 0
      %2583 = vmatpush.bf16.msra.mxu0 0
      %2584 = vmatpush.bf16.msra.mxu0 0
      %2585 = vmatpush.bf16.msra.mxu0 0
      %2586 = vmatpush.bf16.msra.mxu0 0
      %2587 = vmatpush.bf16.msra.mxu0 %v2572
      %2588 = vmatpush.bf16.msra.mxu0 %v2571
      %2589 = vmatmul.bf16.gmra.mxu0 %v2576
      %v2590 = vpop.f32.mrf.mxu0
      %v2591 = vadd.f32 0.0, %v2590
      %v2592 = vpop.f32.mrf.mxu0
      %v2593 = vadd.f32 0.0, %v2592
      %2594 = vmatmul.bf16.gmra.mxu0 %v2579
      %v2595 = vpop.f32.mrf.mxu0
      %v2596 = vadd.f32 0.0, %v2595
      %v2597 = vpop.f32.mrf.mxu0
      %v2598 = vadd.f32 0.0, %v2597
      %2599 = vdwg.mxu0
      %v2604 = vunpack.c.l.b16 %v2042
      %v2605 = vunpack.c.l.b16 %v2043
      %v2606 = vunpack.c.l.b16 %v2044
      %v2607 = vunpack.c.l.b16 %v2045
      %v2608 = vpack.c.b16 %v2605, %v2604
      %v2609 = vpack.c.b16 %v2607, %v2606
      %v2614 = vunpack.c.l.b16 %v2170
      %v2615 = vunpack.c.l.b16 %v2171
      %v2616 = vunpack.c.l.b16 %v2172
      %v2617 = vunpack.c.l.b16 %v2173
      %v2618 = vpack.c.b16 %v2615, %v2614
      %v2619 = vpack.c.b16 %v2617, %v2616
      %v2623 = vsel %vm2292, %v2608, 0
      %v2626 = vsel %vm2292, %v2609, 0
      %2628 = vmatpush.bf16.msra.mxu0 0
      %2629 = vmatpush.bf16.msra.mxu0 0
      %2630 = vmatpush.bf16.msra.mxu0 0
      %2631 = vmatpush.bf16.msra.mxu0 0
      %2632 = vmatpush.bf16.msra.mxu0 0
      %2633 = vmatpush.bf16.msra.mxu0 0
      %2634 = vmatpush.bf16.msra.mxu0 %v2619
      %2635 = vmatpush.bf16.msra.mxu0 %v2618
      %2636 = vmatmul.bf16.gmra.mxu0 %v2623
      %v2637 = vpop.f32.mrf.mxu0
      %v2638 = vadd.f32 0.0, %v2637
      %v2639 = vpop.f32.mrf.mxu0
      %v2640 = vadd.f32 0.0, %v2639
      %2641 = vmatmul.bf16.gmra.mxu0 %v2626
      %v2642 = vpop.f32.mrf.mxu0
      %v2643 = vadd.f32 0.0, %v2642
      %v2644 = vpop.f32.mrf.mxu0
      %v2645 = vadd.f32 0.0, %v2644
      %2646 = vdwg.mxu0
      %v2651 = vunpack.c.l.b16 %v2046
      %v2652 = vunpack.c.l.b16 %v2047
      %v2653 = vunpack.c.l.b16 %v2048
      %v2654 = vunpack.c.l.b16 %v2049
      %v2655 = vpack.c.b16 %v2652, %v2651
      %v2656 = vpack.c.b16 %v2654, %v2653
      %v2661 = vunpack.c.l.b16 %v2174
      %v2662 = vunpack.c.l.b16 %v2175
      %v2663 = vunpack.c.l.b16 %v2176
      %v2664 = vunpack.c.l.b16 %v2177
      %v2665 = vpack.c.b16 %v2662, %v2661
      %v2666 = vpack.c.b16 %v2664, %v2663
      %v2670 = vsel %vm2292, %v2655, 0
      %v2673 = vsel %vm2292, %v2656, 0
      %2675 = vmatpush.bf16.msra.mxu0 0
      %2676 = vmatpush.bf16.msra.mxu0 0
      %2677 = vmatpush.bf16.msra.mxu0 0
      %2678 = vmatpush.bf16.msra.mxu0 0
      %2679 = vmatpush.bf16.msra.mxu0 0
      %2680 = vmatpush.bf16.msra.mxu0 0
      %2681 = vmatpush.bf16.msra.mxu0 %v2666
      %2682 = vmatpush.bf16.msra.mxu0 %v2665
      %2683 = vmatmul.bf16.gmra.mxu0 %v2670
      %v2684 = vpop.f32.mrf.mxu0
      %v2685 = vadd.f32 0.0, %v2684
      %v2686 = vpop.f32.mrf.mxu0
      %v2687 = vadd.f32 0.0, %v2686
      %2688 = vmatmul.bf16.gmra.mxu0 %v2673
      %v2689 = vpop.f32.mrf.mxu0
      %v2690 = vadd.f32 0.0, %v2689
      %v2691 = vpop.f32.mrf.mxu0
      %v2692 = vadd.f32 0.0, %v2691
      %2693 = vdwg.mxu0
      %v2698 = vunpack.c.l.b16 %v2050
      %v2699 = vunpack.c.l.b16 %v2051
      %v2700 = vunpack.c.l.b16 %v2052
      %v2701 = vunpack.c.l.b16 %v2053
      %v2702 = vpack.c.b16 %v2699, %v2698
      %v2703 = vpack.c.b16 %v2701, %v2700
      %v2708 = vunpack.c.l.b16 %v2178
      %v2709 = vunpack.c.l.b16 %v2179
      %v2710 = vunpack.c.l.b16 %v2180
      %v2711 = vunpack.c.l.b16 %v2181
      %v2712 = vpack.c.b16 %v2709, %v2708
      %v2713 = vpack.c.b16 %v2711, %v2710
      %v2717 = vsel %vm2292, %v2702, 0
      %v2720 = vsel %vm2292, %v2703, 0
      %2722 = vmatpush.bf16.msra.mxu0 0
      %2723 = vmatpush.bf16.msra.mxu0 0
      %2724 = vmatpush.bf16.msra.mxu0 0
      %2725 = vmatpush.bf16.msra.mxu0 0
      %2726 = vmatpush.bf16.msra.mxu0 0
      %2727 = vmatpush.bf16.msra.mxu0 0
      %2728 = vmatpush.bf16.msra.mxu0 %v2713
      %2729 = vmatpush.bf16.msra.mxu0 %v2712
      %2730 = vmatmul.bf16.gmra.mxu0 %v2717
      %v2731 = vpop.f32.mrf.mxu0
      %v2732 = vadd.f32 0.0, %v2731
      %v2733 = vpop.f32.mrf.mxu0
      %v2734 = vadd.f32 0.0, %v2733
      %2735 = vmatmul.bf16.gmra.mxu0 %v2720
      %v2736 = vpop.f32.mrf.mxu0
      %v2737 = vadd.f32 0.0, %v2736
      %v2738 = vpop.f32.mrf.mxu0
      %v2739 = vadd.f32 0.0, %v2738
      %2740 = vdwg.mxu0
      %v2745 = vunpack.c.l.b16 %v2054
      %v2746 = vunpack.c.l.b16 %v2055
      %v2747 = vunpack.c.l.b16 %v2056
      %v2748 = vunpack.c.l.b16 %v2057
      %v2749 = vpack.c.b16 %v2746, %v2745
      %v2750 = vpack.c.b16 %v2748, %v2747
      %v2755 = vunpack.c.l.b16 %v2182
      %v2756 = vunpack.c.l.b16 %v2183
      %v2757 = vunpack.c.l.b16 %v2184
      %v2758 = vunpack.c.l.b16 %v2185
      %v2759 = vpack.c.b16 %v2756, %v2755
      %v2760 = vpack.c.b16 %v2758, %v2757
      %v2764 = vsel %vm2292, %v2749, 0
      %v2767 = vsel %vm2292, %v2750, 0
      %2769 = vmatpush.bf16.msra.mxu0 0
      %2770 = vmatpush.bf16.msra.mxu0 0
      %2771 = vmatpush.bf16.msra.mxu0 0
      %2772 = vmatpush.bf16.msra.mxu0 0
      %2773 = vmatpush.bf16.msra.mxu0 0
      %2774 = vmatpush.bf16.msra.mxu0 0
      %2775 = vmatpush.bf16.msra.mxu0 %v2760
      %2776 = vmatpush.bf16.msra.mxu0 %v2759
      %2777 = vmatmul.bf16.gmra.mxu0 %v2764
      %v2778 = vpop.f32.mrf.mxu0
      %v2779 = vadd.f32 0.0, %v2778
      %v2780 = vpop.f32.mrf.mxu0
      %v2781 = vadd.f32 0.0, %v2780
      %2782 = vmatmul.bf16.gmra.mxu0 %v2767
      %v2783 = vpop.f32.mrf.mxu0
      %v2784 = vadd.f32 0.0, %v2783
      %v2785 = vpop.f32.mrf.mxu0
      %v2786 = vadd.f32 0.0, %v2785
      %2787 = vdwg.mxu0
      %v2792 = vunpack.c.l.b16 %v2058
      %v2793 = vunpack.c.l.b16 %v2059
      %v2794 = vunpack.c.l.b16 %v2060
      %v2795 = vunpack.c.l.b16 %v2061
      %v2796 = vpack.c.b16 %v2793, %v2792
      %v2797 = vpack.c.b16 %v2795, %v2794
      %v2802 = vunpack.c.l.b16 %v2186
      %v2803 = vunpack.c.l.b16 %v2187
      %v2804 = vunpack.c.l.b16 %v2188
      %v2805 = vunpack.c.l.b16 %v2189
      %v2806 = vpack.c.b16 %v2803, %v2802
      %v2807 = vpack.c.b16 %v2805, %v2804
      %v2811 = vsel %vm2292, %v2796, 0
      %v2814 = vsel %vm2292, %v2797, 0
      %2816 = vmatpush.bf16.msra.mxu0 0
      %2817 = vmatpush.bf16.msra.mxu0 0
      %2818 = vmatpush.bf16.msra.mxu0 0
      %2819 = vmatpush.bf16.msra.mxu0 0
      %2820 = vmatpush.bf16.msra.mxu0 0
      %2821 = vmatpush.bf16.msra.mxu0 0
      %2822 = vmatpush.bf16.msra.mxu0 %v2807
      %2823 = vmatpush.bf16.msra.mxu0 %v2806
      %2824 = vmatmul.bf16.gmra.mxu0 %v2811
      %v2825 = vpop.f32.mrf.mxu0
      %v2826 = vadd.f32 0.0, %v2825
      %v2827 = vpop.f32.mrf.mxu0
      %v2828 = vadd.f32 0.0, %v2827
      %2829 = vmatmul.bf16.gmra.mxu0 %v2814
      %v2830 = vpop.f32.mrf.mxu0
      %v2831 = vadd.f32 0.0, %v2830
      %v2832 = vpop.f32.mrf.mxu0
      %v2833 = vadd.f32 0.0, %v2832
      %2834 = vdwg.mxu0
      %v2839 = vunpack.c.l.b16 %v2062
      %v2840 = vunpack.c.l.b16 %v2063
      %v2841 = vunpack.c.l.b16 %v2064
      %v2842 = vunpack.c.l.b16 %v2065
      %v2843 = vpack.c.b16 %v2840, %v2839
      %v2844 = vpack.c.b16 %v2842, %v2841
      %v2849 = vunpack.c.l.b16 %v2190
      %v2850 = vunpack.c.l.b16 %v2191
      %v2851 = vunpack.c.l.b16 %v2192
      %v2852 = vunpack.c.l.b16 %v2193
      %v2853 = vpack.c.b16 %v2850, %v2849
      %v2854 = vpack.c.b16 %v2852, %v2851
      %v2858 = vsel %vm2292, %v2843, 0
      %v2861 = vsel %vm2292, %v2844, 0
      %2863 = vmatpush.bf16.msra.mxu0 0
      %2864 = vmatpush.bf16.msra.mxu0 0
      %2865 = vmatpush.bf16.msra.mxu0 0
      %2866 = vmatpush.bf16.msra.mxu0 0
      %2867 = vmatpush.bf16.msra.mxu0 0
      %2868 = vmatpush.bf16.msra.mxu0 0
      %2869 = vmatpush.bf16.msra.mxu0 %v2854
      %2870 = vmatpush.bf16.msra.mxu0 %v2853
      %2871 = vmatmul.bf16.gmra.mxu0 %v2858
      %v2872 = vpop.f32.mrf.mxu0
      %v2873 = vadd.f32 0.0, %v2872
      %v2874 = vpop.f32.mrf.mxu0
      %v2875 = vadd.f32 0.0, %v2874
      %2876 = vmatmul.bf16.gmra.mxu0 %v2861
      %v2877 = vpop.f32.mrf.mxu0
      %v2878 = vadd.f32 0.0, %v2877
      %v2879 = vpop.f32.mrf.mxu0
      %v2880 = vadd.f32 0.0, %v2879
      %2881 = vdwg.mxu0
      %v2886 = vunpack.c.l.b16 %v2066
      %v2887 = vunpack.c.l.b16 %v2067
      %v2888 = vunpack.c.l.b16 %v2068
      %v2889 = vunpack.c.l.b16 %v2069
      %v2890 = vpack.c.b16 %v2887, %v2886
      %v2891 = vpack.c.b16 %v2889, %v2888
      %v2896 = vunpack.c.l.b16 %v2194
      %v2897 = vunpack.c.l.b16 %v2195
      %v2898 = vunpack.c.l.b16 %v2196
      %v2899 = vunpack.c.l.b16 %v2197
      %v2900 = vpack.c.b16 %v2897, %v2896
      %v2901 = vpack.c.b16 %v2899, %v2898
      %v2905 = vsel %vm2292, %v2890, 0
      %v2908 = vsel %vm2292, %v2891, 0
      %2910 = vmatpush.bf16.msra.mxu0 0
      %2911 = vmatpush.bf16.msra.mxu0 0
      %2912 = vmatpush.bf16.msra.mxu0 0
      %2913 = vmatpush.bf16.msra.mxu0 0
      %2914 = vmatpush.bf16.msra.mxu0 0
      %2915 = vmatpush.bf16.msra.mxu0 0
      %2916 = vmatpush.bf16.msra.mxu0 %v2901
      %2917 = vmatpush.bf16.msra.mxu0 %v2900
      %2918 = vmatmul.bf16.gmra.mxu0 %v2905
      %v2919 = vpop.f32.mrf.mxu0
      %v2920 = vadd.f32 0.0, %v2919
      %v2921 = vpop.f32.mrf.mxu0
      %v2922 = vadd.f32 0.0, %v2921
      %2923 = vmatmul.bf16.gmra.mxu0 %v2908
      %v2924 = vpop.f32.mrf.mxu0
      %v2925 = vadd.f32 0.0, %v2924
      %v2926 = vpop.f32.mrf.mxu0
      %v2927 = vadd.f32 0.0, %v2926
      %2928 = vdwg.mxu0
      %v2933 = vunpack.c.l.b16 %v2070
      %v2934 = vunpack.c.l.b16 %v2071
      %v2935 = vunpack.c.l.b16 %v2072
      %v2936 = vunpack.c.l.b16 %v2073
      %v2937 = vpack.c.b16 %v2934, %v2933
      %v2938 = vpack.c.b16 %v2936, %v2935
      %v2943 = vunpack.c.l.b16 %v2198
      %v2944 = vunpack.c.l.b16 %v2199
      %v2945 = vunpack.c.l.b16 %v2200
      %v2946 = vunpack.c.l.b16 %v2201
      %v2947 = vpack.c.b16 %v2944, %v2943
      %v2948 = vpack.c.b16 %v2946, %v2945
      %v2952 = vsel %vm2292, %v2937, 0
      %v2955 = vsel %vm2292, %v2938, 0
      %2957 = vmatpush.bf16.msra.mxu0 0
      %2958 = vmatpush.bf16.msra.mxu0 0
      %2959 = vmatpush.bf16.msra.mxu0 0
      %2960 = vmatpush.bf16.msra.mxu0 0
      %2961 = vmatpush.bf16.msra.mxu0 0
      %2962 = vmatpush.bf16.msra.mxu0 0
      %2963 = vmatpush.bf16.msra.mxu0 %v2948
      %2964 = vmatpush.bf16.msra.mxu0 %v2947
      %2965 = vmatmul.bf16.gmra.mxu0 %v2952
      %v2966 = vpop.f32.mrf.mxu0
      %v2967 = vadd.f32 0.0, %v2966
      %v2968 = vpop.f32.mrf.mxu0
      %v2969 = vadd.f32 0.0, %v2968
      %2970 = vmatmul.bf16.gmra.mxu0 %v2955
      %v2971 = vpop.f32.mrf.mxu0
      %v2972 = vadd.f32 0.0, %v2971
      %v2973 = vpop.f32.mrf.mxu0
      %v2974 = vadd.f32 0.0, %v2973
      %2975 = vdwg.mxu0
      %v2980 = vunpack.c.l.b16 %v2074
      %v2981 = vunpack.c.l.b16 %v2075
      %v2982 = vunpack.c.l.b16 %v2076
      %v2983 = vunpack.c.l.b16 %v2077
      %v2984 = vpack.c.b16 %v2981, %v2980
      %v2985 = vpack.c.b16 %v2983, %v2982
      %v2990 = vunpack.c.l.b16 %v2202
      %v2991 = vunpack.c.l.b16 %v2203
      %v2992 = vunpack.c.l.b16 %v2204
      %v2993 = vunpack.c.l.b16 %v2205
      %v2994 = vpack.c.b16 %v2991, %v2990
      %v2995 = vpack.c.b16 %v2993, %v2992
      %v2999 = vsel %vm2292, %v2984, 0
      %v3002 = vsel %vm2292, %v2985, 0
      %3004 = vmatpush.bf16.msra.mxu0 0
      %3005 = vmatpush.bf16.msra.mxu0 0
      %3006 = vmatpush.bf16.msra.mxu0 0
      %3007 = vmatpush.bf16.msra.mxu0 0
      %3008 = vmatpush.bf16.msra.mxu0 0
      %3009 = vmatpush.bf16.msra.mxu0 0
      %3010 = vmatpush.bf16.msra.mxu0 %v2995
      %3011 = vmatpush.bf16.msra.mxu0 %v2994
      %3012 = vmatmul.bf16.gmra.mxu0 %v2999
      %v3013 = vpop.f32.mrf.mxu0
      %v3014 = vadd.f32 0.0, %v3013
      %v3015 = vpop.f32.mrf.mxu0
      %v3016 = vadd.f32 0.0, %v3015
      %3017 = vmatmul.bf16.gmra.mxu0 %v3002
      %v3018 = vpop.f32.mrf.mxu0
      %v3019 = vadd.f32 0.0, %v3018
      %v3020 = vpop.f32.mrf.mxu0
      %v3021 = vadd.f32 0.0, %v3020
      %3022 = vdwg.mxu0
      %v3027 = vunpack.c.l.b16 %v2078
      %v3028 = vunpack.c.l.b16 %v2079
      %v3029 = vunpack.c.l.b16 %v2080
      %v3030 = vunpack.c.l.b16 %v2081
      %v3031 = vpack.c.b16 %v3028, %v3027
      %v3032 = vpack.c.b16 %v3030, %v3029
      %v3037 = vunpack.c.l.b16 %v2206
      %v3038 = vunpack.c.l.b16 %v2207
      %v3039 = vunpack.c.l.b16 %v2208
      %v3040 = vunpack.c.l.b16 %v2209
      %v3041 = vpack.c.b16 %v3038, %v3037
      %v3042 = vpack.c.b16 %v3040, %v3039
      %v3046 = vsel %vm2292, %v3031, 0
      %v3049 = vsel %vm2292, %v3032, 0
      %3051 = vmatpush.bf16.msra.mxu0 0
      %3052 = vmatpush.bf16.msra.mxu0 0
      %3053 = vmatpush.bf16.msra.mxu0 0
      %3054 = vmatpush.bf16.msra.mxu0 0
      %3055 = vmatpush.bf16.msra.mxu0 0
      %3056 = vmatpush.bf16.msra.mxu0 0
      %3057 = vmatpush.bf16.msra.mxu0 %v3042
      %3058 = vmatpush.bf16.msra.mxu0 %v3041
      %3059 = vmatmul.bf16.gmra.mxu0 %v3046
      %v3060 = vpop.f32.mrf.mxu0
      %v3061 = vadd.f32 0.0, %v3060
      %v3062 = vpop.f32.mrf.mxu0
      %v3063 = vadd.f32 0.0, %v3062
      %3064 = vmatmul.bf16.gmra.mxu0 %v3049
      %v3065 = vpop.f32.mrf.mxu0
      %v3066 = vadd.f32 0.0, %v3065
      %v3067 = vpop.f32.mrf.mxu0
      %v3068 = vadd.f32 0.0, %v3067
      %3069 = vdwg.mxu0
      %v3074 = vunpack.c.l.b16 %v2082
      %v3075 = vunpack.c.l.b16 %v2083
      %v3076 = vunpack.c.l.b16 %v2084
      %v3077 = vunpack.c.l.b16 %v2085
      %v3078 = vpack.c.b16 %v3075, %v3074
      %v3079 = vpack.c.b16 %v3077, %v3076
      %v3084 = vunpack.c.l.b16 %v2210
      %v3085 = vunpack.c.l.b16 %v2211
      %v3086 = vunpack.c.l.b16 %v2212
      %v3087 = vunpack.c.l.b16 %v2213
      %v3088 = vpack.c.b16 %v3085, %v3084
      %v3089 = vpack.c.b16 %v3087, %v3086
      %v3093 = vsel %vm2292, %v3078, 0
      %v3096 = vsel %vm2292, %v3079, 0
      %3098 = vmatpush.bf16.msra.mxu0 0
      %3099 = vmatpush.bf16.msra.mxu0 0
      %3100 = vmatpush.bf16.msra.mxu0 0
      %3101 = vmatpush.bf16.msra.mxu0 0
      %3102 = vmatpush.bf16.msra.mxu0 0
      %3103 = vmatpush.bf16.msra.mxu0 0
      %3104 = vmatpush.bf16.msra.mxu0 %v3089
      %3105 = vmatpush.bf16.msra.mxu0 %v3088
      %3106 = vmatmul.bf16.gmra.mxu0 %v3093
      %v3107 = vpop.f32.mrf.mxu0
      %v3108 = vadd.f32 0.0, %v3107
      %v3109 = vpop.f32.mrf.mxu0
      %v3110 = vadd.f32 0.0, %v3109
      %3111 = vmatmul.bf16.gmra.mxu0 %v3096
      %v3112 = vpop.f32.mrf.mxu0
      %v3113 = vadd.f32 0.0, %v3112
      %v3114 = vpop.f32.mrf.mxu0
      %v3115 = vadd.f32 0.0, %v3114
      %3116 = vdwg.mxu0
      %v3121 = vunpack.c.l.b16 %v2086
      %v3122 = vunpack.c.l.b16 %v2087
      %v3123 = vunpack.c.l.b16 %v2088
      %v3124 = vunpack.c.l.b16 %v2089
      %v3125 = vpack.c.b16 %v3122, %v3121
      %v3126 = vpack.c.b16 %v3124, %v3123
      %v3131 = vunpack.c.l.b16 %v2214
      %v3132 = vunpack.c.l.b16 %v2215
      %v3133 = vunpack.c.l.b16 %v2216
      %v3134 = vunpack.c.l.b16 %v2217
      %v3135 = vpack.c.b16 %v3132, %v3131
      %v3136 = vpack.c.b16 %v3134, %v3133
      %v3140 = vsel %vm2292, %v3125, 0
      %v3143 = vsel %vm2292, %v3126, 0
      %3145 = vmatpush.bf16.msra.mxu0 0
      %3146 = vmatpush.bf16.msra.mxu0 0
      %3147 = vmatpush.bf16.msra.mxu0 0
      %3148 = vmatpush.bf16.msra.mxu0 0
      %3149 = vmatpush.bf16.msra.mxu0 0
      %3150 = vmatpush.bf16.msra.mxu0 0
      %3151 = vmatpush.bf16.msra.mxu0 %v3136
      %3152 = vmatpush.bf16.msra.mxu0 %v3135
      %3153 = vmatmul.bf16.gmra.mxu0 %v3140
      %v3154 = vpop.f32.mrf.mxu0
      %v3155 = vadd.f32 0.0, %v3154
      %v3156 = vpop.f32.mrf.mxu0
      %v3157 = vadd.f32 0.0, %v3156
      %3158 = vmatmul.bf16.gmra.mxu0 %v3143
      %v3159 = vpop.f32.mrf.mxu0
      %v3160 = vadd.f32 0.0, %v3159
      %v3161 = vpop.f32.mrf.mxu0
      %v3162 = vadd.f32 0.0, %v3161
      %3163 = vdwg.mxu0
      %v3168 = vunpack.c.l.b16 %v2090
      %v3169 = vunpack.c.l.b16 %v2091
      %v3170 = vunpack.c.l.b16 %v2092
      %v3171 = vunpack.c.l.b16 %v2093
      %v3172 = vpack.c.b16 %v3169, %v3168
      %v3173 = vpack.c.b16 %v3171, %v3170
      %v3178 = vunpack.c.l.b16 %v2218
      %v3179 = vunpack.c.l.b16 %v2219
      %v3180 = vunpack.c.l.b16 %v2220
      %v3181 = vunpack.c.l.b16 %v2221
      %v3182 = vpack.c.b16 %v3179, %v3178
      %v3183 = vpack.c.b16 %v3181, %v3180
      %v3187 = vsel %vm2292, %v3172, 0
      %v3190 = vsel %vm2292, %v3173, 0
      %3192 = vmatpush.bf16.msra.mxu0 0
      %3193 = vmatpush.bf16.msra.mxu0 0
      %3194 = vmatpush.bf16.msra.mxu0 0
      %3195 = vmatpush.bf16.msra.mxu0 0
      %3196 = vmatpush.bf16.msra.mxu0 0
      %3197 = vmatpush.bf16.msra.mxu0 0
      %3198 = vmatpush.bf16.msra.mxu0 %v3183
      %3199 = vmatpush.bf16.msra.mxu0 %v3182
      %3200 = vmatmul.bf16.gmra.mxu0 %v3187
      %v3201 = vpop.f32.mrf.mxu0
      %v3202 = vadd.f32 0.0, %v3201
      %v3203 = vpop.f32.mrf.mxu0
      %v3204 = vadd.f32 0.0, %v3203
      %3205 = vmatmul.bf16.gmra.mxu0 %v3190
      %v3206 = vpop.f32.mrf.mxu0
      %v3207 = vadd.f32 0.0, %v3206
      %v3208 = vpop.f32.mrf.mxu0
      %v3209 = vadd.f32 0.0, %v3208
      %3210 = vdwg.mxu0
      %v3215 = vunpack.c.l.b16 %v2094
      %v3216 = vunpack.c.l.b16 %v2095
      %v3217 = vunpack.c.l.b16 %v2096
      %v3218 = vunpack.c.l.b16 %v2097
      %v3219 = vpack.c.b16 %v3216, %v3215
      %v3220 = vpack.c.b16 %v3218, %v3217
      %v3225 = vunpack.c.l.b16 %v2222
      %v3226 = vunpack.c.l.b16 %v2223
      %v3227 = vunpack.c.l.b16 %v2224
      %v3228 = vunpack.c.l.b16 %v2225
      %v3229 = vpack.c.b16 %v3226, %v3225
      %v3230 = vpack.c.b16 %v3228, %v3227
      %v3234 = vsel %vm2292, %v3219, 0
      %v3237 = vsel %vm2292, %v3220, 0
      %3239 = vmatpush.bf16.msra.mxu0 0
      %3240 = vmatpush.bf16.msra.mxu0 0
      %3241 = vmatpush.bf16.msra.mxu0 0
      %3242 = vmatpush.bf16.msra.mxu0 0
      %3243 = vmatpush.bf16.msra.mxu0 0
      %3244 = vmatpush.bf16.msra.mxu0 0
      %3245 = vmatpush.bf16.msra.mxu0 %v3230
      %3246 = vmatpush.bf16.msra.mxu0 %v3229
      %3247 = vmatmul.bf16.gmra.mxu0 %v3234
      %v3248 = vpop.f32.mrf.mxu0
      %v3249 = vadd.f32 0.0, %v3248
      %v3250 = vpop.f32.mrf.mxu0
      %v3251 = vadd.f32 0.0, %v3250
      %3252 = vmatmul.bf16.gmra.mxu0 %v3237
      %v3253 = vpop.f32.mrf.mxu0
      %v3254 = vadd.f32 0.0, %v3253
      %v3255 = vpop.f32.mrf.mxu0
      %v3256 = vadd.f32 0.0, %v3255
      %3257 = vdwg.mxu0
      %v3262 = vunpack.c.l.b16 %v2098
      %v3263 = vunpack.c.l.b16 %v2099
      %v3264 = vunpack.c.l.b16 %v2100
      %v3265 = vunpack.c.l.b16 %v2101
      %v3266 = vpack.c.b16 %v3263, %v3262
      %v3267 = vpack.c.b16 %v3265, %v3264
      %v3272 = vunpack.c.l.b16 %v2226
      %v3273 = vunpack.c.l.b16 %v2227
      %v3274 = vunpack.c.l.b16 %v2228
      %v3275 = vunpack.c.l.b16 %v2229
      %v3276 = vpack.c.b16 %v3273, %v3272
      %v3277 = vpack.c.b16 %v3275, %v3274
      %v3281 = vsel %vm2292, %v3266, 0
      %v3284 = vsel %vm2292, %v3267, 0
      %3286 = vmatpush.bf16.msra.mxu0 0
      %3287 = vmatpush.bf16.msra.mxu0 0
      %3288 = vmatpush.bf16.msra.mxu0 0
      %3289 = vmatpush.bf16.msra.mxu0 0
      %3290 = vmatpush.bf16.msra.mxu0 0
      %3291 = vmatpush.bf16.msra.mxu0 0
      %3292 = vmatpush.bf16.msra.mxu0 %v3277
      %3293 = vmatpush.bf16.msra.mxu0 %v3276
      %3294 = vmatmul.bf16.gmra.mxu0 %v3281
      %v3295 = vpop.f32.mrf.mxu0
      %v3296 = vadd.f32 0.0, %v3295
      %v3297 = vpop.f32.mrf.mxu0
      %v3298 = vadd.f32 0.0, %v3297
      %3299 = vmatmul.bf16.gmra.mxu0 %v3284
      %v3300 = vpop.f32.mrf.mxu0
      %v3301 = vadd.f32 0.0, %v3300
      %v3302 = vpop.f32.mrf.mxu0
      %v3303 = vadd.f32 0.0, %v3302
      %3304 = vdwg.mxu0
      %v3309 = vunpack.c.l.b16 %v2102
      %v3310 = vunpack.c.l.b16 %v2103
      %v3311 = vunpack.c.l.b16 %v2104
      %v3312 = vunpack.c.l.b16 %v2105
      %v3313 = vpack.c.b16 %v3310, %v3309
      %v3314 = vpack.c.b16 %v3312, %v3311
      %v3319 = vunpack.c.l.b16 %v2230
      %v3320 = vunpack.c.l.b16 %v2231
      %v3321 = vunpack.c.l.b16 %v2232
      %v3322 = vunpack.c.l.b16 %v2233
      %v3323 = vpack.c.b16 %v3320, %v3319
      %v3324 = vpack.c.b16 %v3322, %v3321
      %v3328 = vsel %vm2292, %v3313, 0
      %v3331 = vsel %vm2292, %v3314, 0
      %3333 = vmatpush.bf16.msra.mxu0 0
      %3334 = vmatpush.bf16.msra.mxu0 0
      %3335 = vmatpush.bf16.msra.mxu0 0
      %3336 = vmatpush.bf16.msra.mxu0 0
      %3337 = vmatpush.bf16.msra.mxu0 0
      %3338 = vmatpush.bf16.msra.mxu0 0
      %3339 = vmatpush.bf16.msra.mxu0 %v3324
      %3340 = vmatpush.bf16.msra.mxu0 %v3323
      %3341 = vmatmul.bf16.gmra.mxu0 %v3328
      %v3342 = vpop.f32.mrf.mxu0
      %v3343 = vadd.f32 0.0, %v3342
      %v3344 = vpop.f32.mrf.mxu0
      %v3345 = vadd.f32 0.0, %v3344
      %3346 = vmatmul.bf16.gmra.mxu0 %v3331
      %v3347 = vpop.f32.mrf.mxu0
      %v3348 = vadd.f32 0.0, %v3347
      %v3349 = vpop.f32.mrf.mxu0
      %v3350 = vadd.f32 0.0, %v3349
      %3351 = vdwg.mxu0
      %v3356 = vunpack.c.l.b16 %v2106
      %v3357 = vunpack.c.l.b16 %v2107
      %v3358 = vunpack.c.l.b16 %v2108
      %v3359 = vunpack.c.l.b16 %v2109
      %v3360 = vpack.c.b16 %v3357, %v3356
      %v3361 = vpack.c.b16 %v3359, %v3358
      %v3366 = vunpack.c.l.b16 %v2234
      %v3367 = vunpack.c.l.b16 %v2235
      %v3368 = vunpack.c.l.b16 %v2236
      %v3369 = vunpack.c.l.b16 %v2237
      %v3370 = vpack.c.b16 %v3367, %v3366
      %v3371 = vpack.c.b16 %v3369, %v3368
      %v3375 = vsel %vm2292, %v3360, 0
      %v3378 = vsel %vm2292, %v3361, 0
      %3380 = vmatpush.bf16.msra.mxu0 0
      %3381 = vmatpush.bf16.msra.mxu0 0
      %3382 = vmatpush.bf16.msra.mxu0 0
      %3383 = vmatpush.bf16.msra.mxu0 0
      %3384 = vmatpush.bf16.msra.mxu0 0
      %3385 = vmatpush.bf16.msra.mxu0 0
      %3386 = vmatpush.bf16.msra.mxu0 %v3371
      %3387 = vmatpush.bf16.msra.mxu0 %v3370
      %3388 = vmatmul.bf16.gmra.mxu0 %v3375
      %v3389 = vpop.f32.mrf.mxu0
      %v3390 = vadd.f32 0.0, %v3389
      %v3391 = vpop.f32.mrf.mxu0
      %v3392 = vadd.f32 0.0, %v3391
      %3393 = vmatmul.bf16.gmra.mxu0 %v3378
      %v3394 = vpop.f32.mrf.mxu0
      %v3395 = vadd.f32 0.0, %v3394
      %v3396 = vpop.f32.mrf.mxu0
      %v3397 = vadd.f32 0.0, %v3396
      %3398 = vdwg.mxu0
      %v3403 = vunpack.c.l.b16 %v2110
      %v3404 = vunpack.c.l.b16 %v2111
      %v3405 = vunpack.c.l.b16 %v2112
      %v3406 = vunpack.c.l.b16 %v2113
      %v3407 = vpack.c.b16 %v3404, %v3403
      %v3408 = vpack.c.b16 %v3406, %v3405
      %v3413 = vunpack.c.l.b16 %v2238
      %v3414 = vunpack.c.l.b16 %v2239
      %v3415 = vunpack.c.l.b16 %v2240
      %v3416 = vunpack.c.l.b16 %v2241
      %v3417 = vpack.c.b16 %v3414, %v3413
      %v3418 = vpack.c.b16 %v3416, %v3415
      %v3422 = vsel %vm2292, %v3407, 0
      %v3425 = vsel %vm2292, %v3408, 0
      %3427 = vmatpush.bf16.msra.mxu0 0
      %3428 = vmatpush.bf16.msra.mxu0 0
      %3429 = vmatpush.bf16.msra.mxu0 0
      %3430 = vmatpush.bf16.msra.mxu0 0
      %3431 = vmatpush.bf16.msra.mxu0 0
      %3432 = vmatpush.bf16.msra.mxu0 0
      %3433 = vmatpush.bf16.msra.mxu0 %v3418
      %3434 = vmatpush.bf16.msra.mxu0 %v3417
      %3435 = vmatmul.bf16.gmra.mxu0 %v3422
      %v3436 = vpop.f32.mrf.mxu0
      %v3437 = vadd.f32 0.0, %v3436
      %v3438 = vpop.f32.mrf.mxu0
      %v3439 = vadd.f32 0.0, %v3438
      %3440 = vmatmul.bf16.gmra.mxu0 %v3425
      %v3441 = vpop.f32.mrf.mxu0
      %v3442 = vadd.f32 0.0, %v3441
      %v3443 = vpop.f32.mrf.mxu0
      %v3444 = vadd.f32 0.0, %v3443
      %3445 = vdwg.mxu0
      %v3450 = vunpack.c.l.b16 %v2114
      %v3451 = vunpack.c.l.b16 %v2115
      %v3452 = vunpack.c.l.b16 %v2116
      %v3453 = vunpack.c.l.b16 %v2117
      %v3454 = vpack.c.b16 %v3451, %v3450
      %v3455 = vpack.c.b16 %v3453, %v3452
      %v3460 = vunpack.c.l.b16 %v2242
      %v3461 = vunpack.c.l.b16 %v2243
      %v3462 = vunpack.c.l.b16 %v2244
      %v3463 = vunpack.c.l.b16 %v2245
      %v3464 = vpack.c.b16 %v3461, %v3460
      %v3465 = vpack.c.b16 %v3463, %v3462
      %v3469 = vsel %vm2292, %v3454, 0
      %v3472 = vsel %vm2292, %v3455, 0
      %3474 = vmatpush.bf16.msra.mxu0 0
      %3475 = vmatpush.bf16.msra.mxu0 0
      %3476 = vmatpush.bf16.msra.mxu0 0
      %3477 = vmatpush.bf16.msra.mxu0 0
      %3478 = vmatpush.bf16.msra.mxu0 0
      %3479 = vmatpush.bf16.msra.mxu0 0
      %3480 = vmatpush.bf16.msra.mxu0 %v3465
      %3481 = vmatpush.bf16.msra.mxu0 %v3464
      %3482 = vmatmul.bf16.gmra.mxu0 %v3469
      %v3483 = vpop.f32.mrf.mxu0
      %v3484 = vadd.f32 0.0, %v3483
      %v3485 = vpop.f32.mrf.mxu0
      %v3486 = vadd.f32 0.0, %v3485
      %3487 = vmatmul.bf16.gmra.mxu0 %v3472
      %v3488 = vpop.f32.mrf.mxu0
      %v3489 = vadd.f32 0.0, %v3488
      %v3490 = vpop.f32.mrf.mxu0
      %v3491 = vadd.f32 0.0, %v3490
      %3492 = vdwg.mxu0
      %v3497 = vunpack.c.l.b16 %v2118
      %v3498 = vunpack.c.l.b16 %v2119
      %v3499 = vunpack.c.l.b16 %v2120
      %v3500 = vunpack.c.l.b16 %v2121
      %v3501 = vpack.c.b16 %v3498, %v3497
      %v3502 = vpack.c.b16 %v3500, %v3499
      %v3507 = vunpack.c.l.b16 %v2246
      %v3508 = vunpack.c.l.b16 %v2247
      %v3509 = vunpack.c.l.b16 %v2248
      %v3510 = vunpack.c.l.b16 %v2249
      %v3511 = vpack.c.b16 %v3508, %v3507
      %v3512 = vpack.c.b16 %v3510, %v3509
      %v3516 = vsel %vm2292, %v3501, 0
      %v3519 = vsel %vm2292, %v3502, 0
      %3521 = vmatpush.bf16.msra.mxu0 0
      %3522 = vmatpush.bf16.msra.mxu0 0
      %3523 = vmatpush.bf16.msra.mxu0 0
      %3524 = vmatpush.bf16.msra.mxu0 0
      %3525 = vmatpush.bf16.msra.mxu0 0
      %3526 = vmatpush.bf16.msra.mxu0 0
      %3527 = vmatpush.bf16.msra.mxu0 %v3512
      %3528 = vmatpush.bf16.msra.mxu0 %v3511
      %3529 = vmatmul.bf16.gmra.mxu0 %v3516
      %v3530 = vpop.f32.mrf.mxu0
      %v3531 = vadd.f32 0.0, %v3530
      %v3532 = vpop.f32.mrf.mxu0
      %v3533 = vadd.f32 0.0, %v3532
      %3534 = vmatmul.bf16.gmra.mxu0 %v3519
      %v3535 = vpop.f32.mrf.mxu0
      %v3536 = vadd.f32 0.0, %v3535
      %v3537 = vpop.f32.mrf.mxu0
      %v3538 = vadd.f32 0.0, %v3537
      %3539 = vdwg.mxu0
      %v3544 = vunpack.c.l.b16 %v2122
      %v3545 = vunpack.c.l.b16 %v2123
      %v3546 = vunpack.c.l.b16 %v2124
      %v3547 = vunpack.c.l.b16 %v2125
      %v3548 = vpack.c.b16 %v3545, %v3544
      %v3549 = vpack.c.b16 %v3547, %v3546
      %v3554 = vunpack.c.l.b16 %v2250
      %v3555 = vunpack.c.l.b16 %v2251
      %v3556 = vunpack.c.l.b16 %v2252
      %v3557 = vunpack.c.l.b16 %v2253
      %v3558 = vpack.c.b16 %v3555, %v3554
      %v3559 = vpack.c.b16 %v3557, %v3556
      %v3563 = vsel %vm2292, %v3548, 0
      %v3566 = vsel %vm2292, %v3549, 0
      %3568 = vmatpush.bf16.msra.mxu0 0
      %3569 = vmatpush.bf16.msra.mxu0 0
      %3570 = vmatpush.bf16.msra.mxu0 0
      %3571 = vmatpush.bf16.msra.mxu0 0
      %3572 = vmatpush.bf16.msra.mxu0 0
      %3573 = vmatpush.bf16.msra.mxu0 0
      %3574 = vmatpush.bf16.msra.mxu0 %v3559
      %3575 = vmatpush.bf16.msra.mxu0 %v3558
      %3576 = vmatmul.bf16.gmra.mxu0 %v3563
      %v3577 = vpop.f32.mrf.mxu0
      %v3578 = vadd.f32 0.0, %v3577
      %v3579 = vpop.f32.mrf.mxu0
      %v3580 = vadd.f32 0.0, %v3579
      %3581 = vmatmul.bf16.gmra.mxu0 %v3566
      %v3582 = vpop.f32.mrf.mxu0
      %v3583 = vadd.f32 0.0, %v3582
      %v3584 = vpop.f32.mrf.mxu0
      %v3585 = vadd.f32 0.0, %v3584
      %3586 = vdwg.mxu0
      %v3591 = vunpack.c.l.b16 %v2126
      %v3592 = vunpack.c.l.b16 %v2127
      %v3593 = vunpack.c.l.b16 %v2128
      %v3594 = vunpack.c.l.b16 %v2129
      %v3595 = vpack.c.b16 %v3592, %v3591
      %v3596 = vpack.c.b16 %v3594, %v3593
      %v3601 = vunpack.c.l.b16 %v2254
      %v3602 = vunpack.c.l.b16 %v2255
      %v3603 = vunpack.c.l.b16 %v2256
      %v3604 = vunpack.c.l.b16 %v2257
      %v3605 = vpack.c.b16 %v3602, %v3601
      %v3606 = vpack.c.b16 %v3604, %v3603
      %v3610 = vsel %vm2292, %v3595, 0
      %v3613 = vsel %vm2292, %v3596, 0
      %3615 = vmatpush.bf16.msra.mxu0 0
      %3616 = vmatpush.bf16.msra.mxu0 0
      %3617 = vmatpush.bf16.msra.mxu0 0
      %3618 = vmatpush.bf16.msra.mxu0 0
      %3619 = vmatpush.bf16.msra.mxu0 0
      %3620 = vmatpush.bf16.msra.mxu0 0
      %3621 = vmatpush.bf16.msra.mxu0 %v3606
      %3622 = vmatpush.bf16.msra.mxu0 %v3605
      %3623 = vmatmul.bf16.gmra.mxu0 %v3610
      %v3624 = vpop.f32.mrf.mxu0
      %v3625 = vadd.f32 0.0, %v3624
      %v3626 = vpop.f32.mrf.mxu0
      %v3627 = vadd.f32 0.0, %v3626
      %3628 = vmatmul.bf16.gmra.mxu0 %v3613
      %v3629 = vpop.f32.mrf.mxu0
      %v3630 = vadd.f32 0.0, %v3629
      %v3631 = vpop.f32.mrf.mxu0
      %v3632 = vadd.f32 0.0, %v3631
      %3633 = vdwg.mxu0
      %v3638 = vunpack.c.l.b16 %v2130
      %v3639 = vunpack.c.l.b16 %v2131
      %v3640 = vunpack.c.l.b16 %v2132
      %v3641 = vunpack.c.l.b16 %v2133
      %v3642 = vpack.c.b16 %v3639, %v3638
      %v3643 = vpack.c.b16 %v3641, %v3640
      %v3648 = vunpack.c.l.b16 %v2258
      %v3649 = vunpack.c.l.b16 %v2259
      %v3650 = vunpack.c.l.b16 %v2260
      %v3651 = vunpack.c.l.b16 %v2261
      %v3652 = vpack.c.b16 %v3649, %v3648
      %v3653 = vpack.c.b16 %v3651, %v3650
      %v3657 = vsel %vm2292, %v3642, 0
      %v3660 = vsel %vm2292, %v3643, 0
      %3662 = vmatpush.bf16.msra.mxu0 0
      %3663 = vmatpush.bf16.msra.mxu0 0
      %3664 = vmatpush.bf16.msra.mxu0 0
      %3665 = vmatpush.bf16.msra.mxu0 0
      %3666 = vmatpush.bf16.msra.mxu0 0
      %3667 = vmatpush.bf16.msra.mxu0 0
      %3668 = vmatpush.bf16.msra.mxu0 %v3653
      %3669 = vmatpush.bf16.msra.mxu0 %v3652
      %3670 = vmatmul.bf16.gmra.mxu0 %v3657
      %v3671 = vpop.f32.mrf.mxu0
      %v3672 = vadd.f32 0.0, %v3671
      %v3673 = vpop.f32.mrf.mxu0
      %v3674 = vadd.f32 0.0, %v3673
      %3675 = vmatmul.bf16.gmra.mxu0 %v3660
      %v3676 = vpop.f32.mrf.mxu0
      %v3677 = vadd.f32 0.0, %v3676
      %v3678 = vpop.f32.mrf.mxu0
      %v3679 = vadd.f32 0.0, %v3678
      %3680 = vdwg.mxu0
      %v3685 = vunpack.c.l.b16 %v2134
      %v3686 = vunpack.c.l.b16 %v2135
      %v3687 = vunpack.c.l.b16 %v2136
      %v3688 = vunpack.c.l.b16 %v2137
      %v3689 = vpack.c.b16 %v3686, %v3685
      %v3690 = vpack.c.b16 %v3688, %v3687
      %v3695 = vunpack.c.l.b16 %v2262
      %v3696 = vunpack.c.l.b16 %v2263
      %v3697 = vunpack.c.l.b16 %v2264
      %v3698 = vunpack.c.l.b16 %v2265
      %v3699 = vpack.c.b16 %v3696, %v3695
      %v3700 = vpack.c.b16 %v3698, %v3697
      %v3704 = vsel %vm2292, %v3689, 0
      %v3707 = vsel %vm2292, %v3690, 0
      %3709 = vmatpush.bf16.msra.mxu0 0
      %3710 = vmatpush.bf16.msra.mxu0 0
      %3711 = vmatpush.bf16.msra.mxu0 0
      %3712 = vmatpush.bf16.msra.mxu0 0
      %3713 = vmatpush.bf16.msra.mxu0 0
      %3714 = vmatpush.bf16.msra.mxu0 0
      %3715 = vmatpush.bf16.msra.mxu0 %v3700
      %3716 = vmatpush.bf16.msra.mxu0 %v3699
      %3717 = vmatmul.bf16.gmra.mxu0 %v3704
      %v3718 = vpop.f32.mrf.mxu0
      %v3719 = vadd.f32 0.0, %v3718
      %v3720 = vpop.f32.mrf.mxu0
      %v3721 = vadd.f32 0.0, %v3720
      %3722 = vmatmul.bf16.gmra.mxu0 %v3707
      %v3723 = vpop.f32.mrf.mxu0
      %v3724 = vadd.f32 0.0, %v3723
      %v3725 = vpop.f32.mrf.mxu0
      %v3726 = vadd.f32 0.0, %v3725
      %3727 = vdwg.mxu0
      %v3732 = vunpack.c.l.b16 %v2138
      %v3733 = vunpack.c.l.b16 %v2139
      %v3734 = vunpack.c.l.b16 %v2140
      %v3735 = vunpack.c.l.b16 %v2141
      %v3736 = vpack.c.b16 %v3733, %v3732
      %v3737 = vpack.c.b16 %v3735, %v3734
      %v3742 = vunpack.c.l.b16 %v2266
      %v3743 = vunpack.c.l.b16 %v2267
      %v3744 = vunpack.c.l.b16 %v2268
      %v3745 = vunpack.c.l.b16 %v2269
      %v3746 = vpack.c.b16 %v3743, %v3742
      %v3747 = vpack.c.b16 %v3745, %v3744
      %v3751 = vsel %vm2292, %v3736, 0
      %v3754 = vsel %vm2292, %v3737, 0
      %3756 = vmatpush.bf16.msra.mxu0 0
      %3757 = vmatpush.bf16.msra.mxu0 0
      %3758 = vmatpush.bf16.msra.mxu0 0
      %3759 = vmatpush.bf16.msra.mxu0 0
      %3760 = vmatpush.bf16.msra.mxu0 0
      %3761 = vmatpush.bf16.msra.mxu0 0
      %3762 = vmatpush.bf16.msra.mxu0 %v3747
      %3763 = vmatpush.bf16.msra.mxu0 %v3746
      %3764 = vmatmul.bf16.gmra.mxu0 %v3751
      %v3765 = vpop.f32.mrf.mxu0
      %v3766 = vadd.f32 0.0, %v3765
      %v3767 = vpop.f32.mrf.mxu0
      %v3768 = vadd.f32 0.0, %v3767
      %3769 = vmatmul.bf16.gmra.mxu0 %v3754
      %v3770 = vpop.f32.mrf.mxu0
      %v3771 = vadd.f32 0.0, %v3770
      %v3772 = vpop.f32.mrf.mxu0
      %v3773 = vadd.f32 0.0, %v3772
      %3774 = vdwg.mxu0
      %v3775 = vsel %vm2292, %v2309, 0.0
      %v3776 = vsel %vm2292, %v2356, 0.0
      %v3777 = vadd.f32 %v3775, %v3776
      %v3778 = vsel %vm2292, %v2403, 0.0
      %v3779 = vadd.f32 %v3777, %v3778
      %v3780 = vsel %vm2292, %v2450, 0.0
      %v3781 = vadd.f32 %v3779, %v3780
      %v3782 = vsel %vm2292, %v2497, 0.0
      %v3783 = vadd.f32 %v3781, %v3782
      %v3784 = vsel %vm2292, %v2544, 0.0
      %v3785 = vadd.f32 %v3783, %v3784
      %v3786 = vsel %vm2292, %v2591, 0.0
      %v3787 = vadd.f32 %v3785, %v3786
      %v3788 = vsel %vm2292, %v2638, 0.0
      %v3789 = vadd.f32 %v3787, %v3788
      %v3790 = vsel %vm2292, %v2685, 0.0
      %v3791 = vadd.f32 %v3789, %v3790
      %v3792 = vsel %vm2292, %v2732, 0.0
      %v3793 = vadd.f32 %v3791, %v3792
      %v3794 = vsel %vm2292, %v2779, 0.0
      %v3795 = vadd.f32 %v3793, %v3794
      %v3796 = vsel %vm2292, %v2826, 0.0
      %v3797 = vadd.f32 %v3795, %v3796
      %v3798 = vsel %vm2292, %v2873, 0.0
      %v3799 = vadd.f32 %v3797, %v3798
      %v3800 = vsel %vm2292, %v2920, 0.0
      %v3801 = vadd.f32 %v3799, %v3800
      %v3802 = vsel %vm2292, %v2967, 0.0
      %v3803 = vadd.f32 %v3801, %v3802
      %v3804 = vsel %vm2292, %v3014, 0.0
      %v3805 = vadd.f32 %v3803, %v3804
      %v3806 = vsel %vm2292, %v3061, 0.0
      %v3807 = vadd.f32 %v3805, %v3806
      %v3808 = vsel %vm2292, %v3108, 0.0
      %v3809 = vadd.f32 %v3807, %v3808
      %v3810 = vsel %vm2292, %v3155, 0.0
      %v3811 = vadd.f32 %v3809, %v3810
      %v3812 = vsel %vm2292, %v3202, 0.0
      %v3813 = vadd.f32 %v3811, %v3812
      %v3814 = vsel %vm2292, %v3249, 0.0
      %v3815 = vadd.f32 %v3813, %v3814
      %v3816 = vsel %vm2292, %v3296, 0.0
      %v3817 = vadd.f32 %v3815, %v3816
      %v3818 = vsel %vm2292, %v3343, 0.0
      %v3819 = vadd.f32 %v3817, %v3818
      %v3820 = vsel %vm2292, %v3390, 0.0
      %v3821 = vadd.f32 %v3819, %v3820
      %v3822 = vsel %vm2292, %v3437, 0.0
      %v3823 = vadd.f32 %v3821, %v3822
      %v3824 = vsel %vm2292, %v3484, 0.0
      %v3825 = vadd.f32 %v3823, %v3824
      %v3826 = vsel %vm2292, %v3531, 0.0
      %v3827 = vadd.f32 %v3825, %v3826
      %v3828 = vsel %vm2292, %v3578, 0.0
      %v3829 = vadd.f32 %v3827, %v3828
      %v3830 = vsel %vm2292, %v3625, 0.0
      %v3831 = vadd.f32 %v3829, %v3830
      %v3832 = vsel %vm2292, %v3672, 0.0
      %v3833 = vadd.f32 %v3831, %v3832
      %v3834 = vsel %vm2292, %v3719, 0.0
      %v3835 = vadd.f32 %v3833, %v3834
      %v3836 = vsel %vm2292, %v3766, 0.0
      %v3837 = vadd.f32 %v3835, %v3836
      %v3838 = vsel %vm2292, %v2311, 0.0
      %v3839 = vsel %vm2292, %v2358, 0.0
      %v3840 = vadd.f32 %v3838, %v3839
      %v3841 = vsel %vm2292, %v2405, 0.0
      %v3842 = vadd.f32 %v3840, %v3841
      %v3843 = vsel %vm2292, %v2452, 0.0
      %v3844 = vadd.f32 %v3842, %v3843
      %v3845 = vsel %vm2292, %v2499, 0.0
      %v3846 = vadd.f32 %v3844, %v3845
      %v3847 = vsel %vm2292, %v2546, 0.0
      %v3848 = vadd.f32 %v3846, %v3847
      %v3849 = vsel %vm2292, %v2593, 0.0
      %v3850 = vadd.f32 %v3848, %v3849
      %v3851 = vsel %vm2292, %v2640, 0.0
      %v3852 = vadd.f32 %v3850, %v3851
      %v3853 = vsel %vm2292, %v2687, 0.0
      %v3854 = vadd.f32 %v3852, %v3853
      %v3855 = vsel %vm2292, %v2734, 0.0
      %v3856 = vadd.f32 %v3854, %v3855
      %v3857 = vsel %vm2292, %v2781, 0.0
      %v3858 = vadd.f32 %v3856, %v3857
      %v3859 = vsel %vm2292, %v2828, 0.0
      %v3860 = vadd.f32 %v3858, %v3859
      %v3861 = vsel %vm2292, %v2875, 0.0
      %v3862 = vadd.f32 %v3860, %v3861
      %v3863 = vsel %vm2292, %v2922, 0.0
      %v3864 = vadd.f32 %v3862, %v3863
      %v3865 = vsel %vm2292, %v2969, 0.0
      %v3866 = vadd.f32 %v3864, %v3865
      %v3867 = vsel %vm2292, %v3016, 0.0
      %v3868 = vadd.f32 %v3866, %v3867
      %v3869 = vsel %vm2292, %v3063, 0.0
      %v3870 = vadd.f32 %v3868, %v3869
      %v3871 = vsel %vm2292, %v3110, 0.0
      %v3872 = vadd.f32 %v3870, %v3871
      %v3873 = vsel %vm2292, %v3157, 0.0
      %v3874 = vadd.f32 %v3872, %v3873
      %v3875 = vsel %vm2292, %v3204, 0.0
      %v3876 = vadd.f32 %v3874, %v3875
      %v3877 = vsel %vm2292, %v3251, 0.0
      %v3878 = vadd.f32 %v3876, %v3877
      %v3879 = vsel %vm2292, %v3298, 0.0
      %v3880 = vadd.f32 %v3878, %v3879
      %v3881 = vsel %vm2292, %v3345, 0.0
      %v3882 = vadd.f32 %v3880, %v3881
      %v3883 = vsel %vm2292, %v3392, 0.0
      %v3884 = vadd.f32 %v3882, %v3883
      %v3885 = vsel %vm2292, %v3439, 0.0
      %v3886 = vadd.f32 %v3884, %v3885
      %v3887 = vsel %vm2292, %v3486, 0.0
      %v3888 = vadd.f32 %v3886, %v3887
      %v3889 = vsel %vm2292, %v3533, 0.0
      %v3890 = vadd.f32 %v3888, %v3889
      %v3891 = vsel %vm2292, %v3580, 0.0
      %v3892 = vadd.f32 %v3890, %v3891
      %v3893 = vsel %vm2292, %v3627, 0.0
      %v3894 = vadd.f32 %v3892, %v3893
      %v3895 = vsel %vm2292, %v3674, 0.0
      %v3896 = vadd.f32 %v3894, %v3895
      %v3897 = vsel %vm2292, %v3721, 0.0
      %v3898 = vadd.f32 %v3896, %v3897
      %v3899 = vsel %vm2292, %v3768, 0.0
      %v3900 = vadd.f32 %v3898, %v3899
      %v3901 = vsel %vm2292, %v2314, 0.0
      %v3902 = vsel %vm2292, %v2361, 0.0
      %v3903 = vadd.f32 %v3901, %v3902
      %v3904 = vsel %vm2292, %v2408, 0.0
      %v3905 = vadd.f32 %v3903, %v3904
      %v3906 = vsel %vm2292, %v2455, 0.0
      %v3907 = vadd.f32 %v3905, %v3906
      %v3908 = vsel %vm2292, %v2502, 0.0
      %v3909 = vadd.f32 %v3907, %v3908
      %v3910 = vsel %vm2292, %v2549, 0.0
      %v3911 = vadd.f32 %v3909, %v3910
      %v3912 = vsel %vm2292, %v2596, 0.0
      %v3913 = vadd.f32 %v3911, %v3912
      %v3914 = vsel %vm2292, %v2643, 0.0
      %v3915 = vadd.f32 %v3913, %v3914
      %v3916 = vsel %vm2292, %v2690, 0.0
      %v3917 = vadd.f32 %v3915, %v3916
      %v3918 = vsel %vm2292, %v2737, 0.0
      %v3919 = vadd.f32 %v3917, %v3918
      %v3920 = vsel %vm2292, %v2784, 0.0
      %v3921 = vadd.f32 %v3919, %v3920
      %v3922 = vsel %vm2292, %v2831, 0.0
      %v3923 = vadd.f32 %v3921, %v3922
      %v3924 = vsel %vm2292, %v2878, 0.0
      %v3925 = vadd.f32 %v3923, %v3924
      %v3926 = vsel %vm2292, %v2925, 0.0
      %v3927 = vadd.f32 %v3925, %v3926
      %v3928 = vsel %vm2292, %v2972, 0.0
      %v3929 = vadd.f32 %v3927, %v3928
      %v3930 = vsel %vm2292, %v3019, 0.0
      %v3931 = vadd.f32 %v3929, %v3930
      %v3932 = vsel %vm2292, %v3066, 0.0
      %v3933 = vadd.f32 %v3931, %v3932
      %v3934 = vsel %vm2292, %v3113, 0.0
      %v3935 = vadd.f32 %v3933, %v3934
      %v3936 = vsel %vm2292, %v3160, 0.0
      %v3937 = vadd.f32 %v3935, %v3936
      %v3938 = vsel %vm2292, %v3207, 0.0
      %v3939 = vadd.f32 %v3937, %v3938
      %v3940 = vsel %vm2292, %v3254, 0.0
      %v3941 = vadd.f32 %v3939, %v3940
      %v3942 = vsel %vm2292, %v3301, 0.0
      %v3943 = vadd.f32 %v3941, %v3942
      %v3944 = vsel %vm2292, %v3348, 0.0
      %v3945 = vadd.f32 %v3943, %v3944
      %v3946 = vsel %vm2292, %v3395, 0.0
      %v3947 = vadd.f32 %v3945, %v3946
      %v3948 = vsel %vm2292, %v3442, 0.0
      %v3949 = vadd.f32 %v3947, %v3948
      %v3950 = vsel %vm2292, %v3489, 0.0
      %v3951 = vadd.f32 %v3949, %v3950
      %v3952 = vsel %vm2292, %v3536, 0.0
      %v3953 = vadd.f32 %v3951, %v3952
      %v3954 = vsel %vm2292, %v3583, 0.0
      %v3955 = vadd.f32 %v3953, %v3954
      %v3956 = vsel %vm2292, %v3630, 0.0
      %v3957 = vadd.f32 %v3955, %v3956
      %v3958 = vsel %vm2292, %v3677, 0.0
      %v3959 = vadd.f32 %v3957, %v3958
      %v3960 = vsel %vm2292, %v3724, 0.0
      %v3961 = vadd.f32 %v3959, %v3960
      %v3962 = vsel %vm2292, %v3771, 0.0
      %v3963 = vadd.f32 %v3961, %v3962
      %v3964 = vsel %vm2292, %v2316, 0.0
      %v3965 = vsel %vm2292, %v2363, 0.0
      %v3966 = vadd.f32 %v3964, %v3965
      %v3967 = vsel %vm2292, %v2410, 0.0
      %v3968 = vadd.f32 %v3966, %v3967
      %v3969 = vsel %vm2292, %v2457, 0.0
      %v3970 = vadd.f32 %v3968, %v3969
      %v3971 = vsel %vm2292, %v2504, 0.0
      %v3972 = vadd.f32 %v3970, %v3971
      %v3973 = vsel %vm2292, %v2551, 0.0
      %v3974 = vadd.f32 %v3972, %v3973
      %v3975 = vsel %vm2292, %v2598, 0.0
      %v3976 = vadd.f32 %v3974, %v3975
      %v3977 = vsel %vm2292, %v2645, 0.0
      %v3978 = vadd.f32 %v3976, %v3977
      %v3979 = vsel %vm2292, %v2692, 0.0
      %v3980 = vadd.f32 %v3978, %v3979
      %v3981 = vsel %vm2292, %v2739, 0.0
      %v3982 = vadd.f32 %v3980, %v3981
      %v3983 = vsel %vm2292, %v2786, 0.0
      %v3984 = vadd.f32 %v3982, %v3983
      %v3985 = vsel %vm2292, %v2833, 0.0
      %v3986 = vadd.f32 %v3984, %v3985
      %v3987 = vsel %vm2292, %v2880, 0.0
      %v3988 = vadd.f32 %v3986, %v3987
      %v3989 = vsel %vm2292, %v2927, 0.0
      %v3990 = vadd.f32 %v3988, %v3989
      %v3991 = vsel %vm2292, %v2974, 0.0
      %v3992 = vadd.f32 %v3990, %v3991
      %v3993 = vsel %vm2292, %v3021, 0.0
      %v3994 = vadd.f32 %v3992, %v3993
      %v3995 = vsel %vm2292, %v3068, 0.0
      %v3996 = vadd.f32 %v3994, %v3995
      %v3997 = vsel %vm2292, %v3115, 0.0
      %v3998 = vadd.f32 %v3996, %v3997
      %v3999 = vsel %vm2292, %v3162, 0.0
      %v4000 = vadd.f32 %v3998, %v3999
      %v4001 = vsel %vm2292, %v3209, 0.0
      %v4002 = vadd.f32 %v4000, %v4001
      %v4003 = vsel %vm2292, %v3256, 0.0
      %v4004 = vadd.f32 %v4002, %v4003
      %v4005 = vsel %vm2292, %v3303, 0.0
      %v4006 = vadd.f32 %v4004, %v4005
      %v4007 = vsel %vm2292, %v3350, 0.0
      %v4008 = vadd.f32 %v4006, %v4007
      %v4009 = vsel %vm2292, %v3397, 0.0
      %v4010 = vadd.f32 %v4008, %v4009
      %v4011 = vsel %vm2292, %v3444, 0.0
      %v4012 = vadd.f32 %v4010, %v4011
      %v4013 = vsel %vm2292, %v3491, 0.0
      %v4014 = vadd.f32 %v4012, %v4013
      %v4015 = vsel %vm2292, %v3538, 0.0
      %v4016 = vadd.f32 %v4014, %v4015
      %v4017 = vsel %vm2292, %v3585, 0.0
      %v4018 = vadd.f32 %v4016, %v4017
      %v4019 = vsel %vm2292, %v3632, 0.0
      %v4020 = vadd.f32 %v4018, %v4019
      %v4021 = vsel %vm2292, %v3679, 0.0
      %v4022 = vadd.f32 %v4020, %v4021
      %v4023 = vsel %vm2292, %v3726, 0.0
      %v4024 = vadd.f32 %v4022, %v4023
      %v4025 = vsel %vm2292, %v3773, 0.0
      %v4026 = vadd.f32 %v4024, %v4025
      %v4027 = vld [vmem:[%s4] sm:$0x1]
      %v4029 = vperm.slane %v4027, 0
      %v4031 = vadd.f32 %v3837, %v4029
      %v4032 = vadd.f32 %v3900, %v4029
      %v4033 = vadd.f32 %v3963, %v4029
      %v4034 = vadd.f32 %v4026, %v4029
      %vm4035 = vcmp.gt.f32.partialorder %v4031, 0.0
      %vm4036 = vcmp.gt.f32.partialorder %v4032, 0.0
      %vm4037 = vcmp.gt.f32.partialorder %v4033, 0.0
      %vm4038 = vcmp.gt.f32.partialorder %v4034, 0.0
      %v4039 = vmin.f32 %v4031, 0.0
      %v4040 = vmin.f32 %v4032, 0.0
      %v4041 = vmin.f32 %v4033, 0.0
      %v4042 = vmin.f32 %v4034, 0.0
      %v4043 = vmul.f32 %v4039, 1.442695
      %v4044 = vpow.pop %v4043
      %v4045 = vmul.f32 %v4040, 1.442695
      %v4046 = vpow.pop %v4045
      %v4047 = vmul.f32 %v4041, 1.442695
      %v4048 = vpow.pop %v4047
      %v4049 = vmul.f32 %v4042, 1.442695
      %v4050 = vpow.pop %v4049
      %v4051 = vsub.f32 %v4044, 1.0
      %v4052 = vsub.f32 %v4046, 1.0
      %v4053 = vsub.f32 %v4048, 1.0
      %v4054 = vsub.f32 %v4050, 1.0
      %v4055 = vsel %vm4035, %v4031, %v4051
      %v4056 = vsel %vm4036, %v4032, %v4052
      %v4057 = vsel %vm4037, %v4033, %v4053
      %v4058 = vsel %vm4038, %v4034, %v4054
      %v4059 = vpack.c.bf16 %v4055, %v4055
      %v4060 = vpack.c.bf16 %v4056, %v4056
      %v4061 = vpack.c.bf16 %v4057, %v4057
      %v4062 = vpack.c.bf16 %v4058, %v4058
      %v4063 = vld [vmem:[%s5] sm:$0xf]
      %v4064 = vld [vmem:[%s5 + $0x4] sm:$0xf]
      %v4065 = vld [vmem:[%s5 + $0x8] sm:$0xf]
      %v4066 = vld [vmem:[%s5 + $0xc] sm:$0xf]
      %v4067 = vld [vmem:[%s5 + $0x10] sm:$0xf]
      %v4068 = vld [vmem:[%s5 + $0x14] sm:$0xf]
      %v4069 = vld [vmem:[%s5 + $0x18] sm:$0xf]
      %v4070 = vld [vmem:[%s5 + $0x1c] sm:$0xf]
      %v4073 = vunpack.c.l.b16 %v4059
      %v4074 = vunpack.c.l.b16 %v4060
      %v4075 = vpack.c.b16 %v4074, %v4073
      %v4080 = vunpack.c.l.b16 %v4063
      %v4081 = vunpack.c.l.b16 %v4064
      %v4082 = vunpack.c.l.b16 %v4065
      %v4083 = vunpack.c.l.b16 %v4066
      %v4084 = vpack.c.b16 %v4081, %v4080
      %v4085 = vpack.c.b16 %v4083, %v4082
      %v4089 = vsel %vm2292, %v4075, 0
      %4091 = vmatpush.bf16.msra.mxu0 0
      %4092 = vmatpush.bf16.msra.mxu0 0
      %4093 = vmatpush.bf16.msra.mxu0 0
      %4094 = vmatpush.bf16.msra.mxu0 0
      %4095 = vmatpush.bf16.msra.mxu0 0
      %4096 = vmatpush.bf16.msra.mxu0 0
      %4097 = vmatpush.bf16.msra.mxu0 %v4085
      %4098 = vmatpush.bf16.msra.mxu0 %v4084
      %4099 = vmatmul.bf16.gmra.mxu0 %v4089
      %v4100 = vpop.f32.mrf.mxu0
      %v4101 = vadd.f32 0.0, %v4100
      %v4102 = vpop.f32.mrf.mxu0
      %v4103 = vadd.f32 0.0, %v4102
      %4104 = vdwg.mxu0
      %v4107 = vunpack.c.l.b16 %v4061
      %v4108 = vunpack.c.l.b16 %v4062
      %v4109 = vpack.c.b16 %v4108, %v4107
      %v4114 = vunpack.c.l.b16 %v4067
      %v4115 = vunpack.c.l.b16 %v4068
      %v4116 = vunpack.c.l.b16 %v4069
      %v4117 = vunpack.c.l.b16 %v4070
      %v4118 = vpack.c.b16 %v4115, %v4114
      %v4119 = vpack.c.b16 %v4117, %v4116
      %v4123 = vsel %vm2292, %v4109, 0
      %4125 = vmatpush.bf16.msra.mxu0 0
      %4126 = vmatpush.bf16.msra.mxu0 0
      %4127 = vmatpush.bf16.msra.mxu0 0
      %4128 = vmatpush.bf16.msra.mxu0 0
      %4129 = vmatpush.bf16.msra.mxu0 0
      %4130 = vmatpush.bf16.msra.mxu0 0
      %4131 = vmatpush.bf16.msra.mxu0 %v4119
      %4132 = vmatpush.bf16.msra.mxu0 %v4118
      %4133 = vmatmul.bf16.gmra.mxu0 %v4123
      %v4134 = vpop.f32.mrf.mxu0
      %v4135 = vadd.f32 0.0, %v4134
      %v4136 = vpop.f32.mrf.mxu0
      %v4137 = vadd.f32 0.0, %v4136
      %4138 = vdwg.mxu0
      %vm4139 = vcmask 523264
      %v4140 = vsel %vm4139, %v4101, 0.0
      %v4141 = vsel %vm4139, %v4135, 0.0
      %v4142 = vadd.f32 %v4140, %v4141
      %v4143 = vsel %vm4139, %v4103, 0.0
      %v4144 = vsel %vm4139, %v4137, 0.0
      %v4145 = vadd.f32 %v4143, %v4144
      %v4146 = vld [vmem:[%s6] sm:$0x1]
      %v4148 = vperm.slane %v4146, 0
      %v4150 = vadd.f32 %v4142, %v4148
      %v4151 = vadd.f32 %v4145, %v4148
      %vm4152 = vcmp.gt.f32.partialorder %v4150, 0.0
      %vm4153 = vcmp.gt.f32.partialorder %v4151, 0.0
      %v4154 = vmin.f32 %v4150, 0.0
      %v4155 = vmin.f32 %v4151, 0.0
      %v4156 = vmul.f32 %v4154, 1.442695
      %v4157 = vpow.pop %v4156
      %v4158 = vmul.f32 %v4155, 1.442695
      %v4159 = vpow.pop %v4158
      %v4160 = vsub.f32 %v4157, 1.0
      %v4161 = vsub.f32 %v4159, 1.0
      %v4162 = vsel %vm4152, %v4150, %v4160
      %v4163 = vsel %vm4153, %v4151, %v4161
      %v4164 = vpack.c.bf16 %v4163, %v4162
      %v4165 = vld [vmem:[%s7] sm:$0xf]
      %v4166 = vld [vmem:[%s7 + $0x4] sm:$0xf]
      %v4167 = vld [vmem:[%s7 + $0x8] sm:$0xf]
      %v4168 = vld [vmem:[%s7 + $0xc] sm:$0xf]
      %v4169 = vld [vmem:[%s7 + $0x10] sm:$0xf]
      %v4170 = vld [vmem:[%s7 + $0x14] sm:$0xf]
      %v4171 = vld [vmem:[%s7 + $0x18] sm:$0xf]
      %v4172 = vld [vmem:[%s7 + $0x1c] sm:$0xf]
      %v4173 = vld [vmem:[%s8] sm:$0x1]
      %v4175 = vperm.slane %v4173, 0
      %v4185 = vunpack.c.l.b16 %v4165
      %v4186 = vunpack.c.l.b16 %v4166
      %v4187 = vunpack.c.l.b16 %v4167
      %v4188 = vunpack.c.l.b16 %v4168
      %v4189 = vunpack.c.l.b16 %v4169
      %v4190 = vunpack.c.l.b16 %v4170
      %v4191 = vunpack.c.l.b16 %v4171
      %v4192 = vunpack.c.l.b16 %v4172
      %v4193 = vpack.c.b16 %v4186, %v4185
      %v4194 = vpack.c.b16 %v4188, %v4187
      %v4195 = vpack.c.b16 %v4190, %v4189
      %v4196 = vpack.c.b16 %v4192, %v4191
      %v4202 = vsel %vm4139, %v4164, 0
      %4204 = vmatpush.bf16.msra.mxu0 0
      %4205 = vmatpush.bf16.msra.mxu0 0
      %4206 = vmatpush.bf16.msra.mxu0 0
      %4207 = vmatpush.bf16.msra.mxu0 0
      %4208 = vmatpush.bf16.msra.mxu0 %v4196
      %4209 = vmatpush.bf16.msra.mxu0 %v4195
      %4210 = vmatpush.bf16.msra.mxu0 %v4194
      %4211 = vmatpush.bf16.msra.mxu0 %v4193
      %4212 = vmatmul.bf16.gmra.mxu0 %v4202
      %v4213 = vpop.f32.mrf.mxu0
      %v4214 = vadd.f32 %v4175, %v4213
      %v4215 = vpop.f32.mrf.mxu0
      %v4216 = vadd.f32 %v4175, %v4215
      %4217 = vdwg.mxu0
      %4218 = vst [vmem:[%s334] sm:$0xff] %v4214
      %4219 = vst [vmem:[%s334 + $0x8] sm:$0xff] %v4216
      %s4220 = smul.u32 2, %s20
      %p4221 = scmp.lt.s32.totalorder %s4220, 3
      %s4222 = scalar_select %p4221, %s4220, 3
      %s4223 = smul.addr %s4222, 8
      %s4224 = scalar_lea.vmem %s9, %s4223
      // Predicated region
      $region57: #{forward.1} parent=55 // pred_check
        %p4225 = pneg %p232
      $region58: #{forward.1} parent=55 // pred_check_branch
        %4227 = sbr.rel (%p4225) target = $region60
      $region59: #{forward.1} parent=55 // pred_region
        %s4228 = smul.u32 2, %s20
      $region60: #{forward.1} parent=55 // pred_fallthru
        _
    $region56: #{forward.1} parent=5 // pred_fallthru
      _
    %p4229 = scmp.le.s32.totalorder 2, %s15
    // Predicated region
    $region61: #{forward.1} parent=5 // pred_check
      %p4230 = pneg %p4229
    $region62: #{forward.1} parent=5 // pred_check_branch
      %4232 = sbr.rel (%p4230) target = $region64
    $region63: #{forward.1} parent=5 // pred_region
      %s4233 = ssub.s32 %s15, 2
      // Predicated region
      $region65: #{forward.1} parent=63 // pred_check
        %p4234 = pneg %p238
      $region66: #{forward.1} parent=63 // pred_check_branch
        %4236 = sbr.rel (%p4234) target = $region68
      $region67: #{forward.1} parent=63 // pred_region
        %s4237 = smul.u32 2, %s21
        %p4238 = scmp.lt.s32.totalorder %s4237, 3
        %s4239 = scalar_select %p4238, %s4237, 3
        %s4240 = smul.addr %s4239, 8
        %s4241 = scalar_lea.vmem %s9, %s4240
      $region68: #{forward.1} parent=63 // pred_fallthru
        _
    $region64: #{forward.1} parent=5 // pred_fallthru
      _
  $region6: #{forward.1} parent=0 // loop_footer
    %s19 = sadd.s32 1, %s15
  $region7: #{forward.1} parent=0 // loop_footer_branch
    %14 = sbr.rel target = $region3
  $region8: #{forward.1} parent=0 // loop_exit
    _

</llo_original>
